<compile_context>
chip_gen: v6e
topology: v6e:2x2x1
jax: 0.10.0
libtpu: 0.0.40
codegen_flags: <defaults>
</compile_context>

<pallas_src>
import functools

import jax
import jax.numpy as jnp
from jax.experimental import pallas as pl
from jax.experimental.pallas import tpu as pltpu


# ---------------------------------------------------------------------------
# Fused kernel: 1x1 conv (+folded BN) + ReLU -> depthwise 3x3 -> group LN
# ---------------------------------------------------------------------------
def _lkpe_fused_kernel(x_top_ref, x_body_ref, x_bot_ref,
                       w1_ref, shift_ref, wdw_ref, bdw_ref,
                       gsum_ref, gexp_ref, gamma_ref, beta_ref,
                       o_ref, y_sc, *, TH, W, C2, eps, inv_cq):
    i = pl.program_id(1)
    nh = pl.num_programs(1)

    w1 = w1_ref[...]                 # (Cin, C2) bf16, BN scale folded in
    shift = shift_ref[...]           # (1, C2)   f32, BN shift folded in

    def conv1x1(x2d):                # (M, Cin) bf16 -> (M, C2) f32, + ReLU
        y = jnp.dot(x2d, w1, preferred_element_type=jnp.float32)
        return jnp.maximum(y + shift, 0.0)

    # ---- W zero-padding columns of the haloed y scratch (depthwise zero-pad
    # along W; rows written below cover the rest of the scratch). ----
    y_sc[:, 0:1, :] = jnp.zeros((TH + 2, 1, C2), jnp.float32)
    y_sc[:, W + 1:W + 2, :] = jnp.zeros((TH + 2, 1, C2), jnp.float32)

    # ---- 1x1 conv (+folded BN) + ReLU written straight into the haloed
    # scratch: body rows -> rows 1..TH, halo rows -> rows 0 / TH+1.  No
    # in-kernel concat of the three input refs, no whole-tile edge mask. ----
    yb = conv1x1(x_body_ref[0].reshape(TH * W, -1))
    y_sc[1:TH + 1, 1:W + 1, :] = yb.reshape(TH, W, C2)

    @pl.when(i == 0)                 # top halo row lies outside the image
    def _():
        y_sc[0:1, 1:W + 1, :] = jnp.zeros((1, W, C2), jnp.float32)

    @pl.when(i > 0)
    def _():
        yt = conv1x1(x_top_ref[0].reshape(W, -1))
        y_sc[0:1, 1:W + 1, :] = yt.reshape(1, W, C2)

    @pl.when(i == nh - 1)            # bottom halo row lies outside the image
    def _():
        y_sc[TH + 1:TH + 2, 1:W + 1, :] = jnp.zeros((1, W, C2), jnp.float32)

    @pl.when(i < nh - 1)
    def _():
        yB = conv1x1(x_bot_ref[0].reshape(W, -1))
        y_sc[TH + 1:TH + 2, 1:W + 1, :] = yB.reshape(1, W, C2)

    # ---- depthwise 3x3: the 9 taps read directly from the zero-padded
    # scratch (static slices); no yl / yr shifted copies are materialized. ----
    wk = wdw_ref[...]                # (9, C2) f32
    acc = jnp.zeros((TH, W, C2), jnp.float32)
    for dh in range(3):
        for dw in range(3):
            k = 3 * dh + dw
            acc = acc + y_sc[dh:dh + TH, dw:dw + W, :] * wk[k:k + 1, :]
    acc = acc + bdw_ref[...]

    # ---- LayerNorm over the 4 contiguous channel groups of size C2 // 4,
    # done lane-dense with skinny (C2, 8) group-sum matmuls and (8, C2)
    # one-hot broadcast-back matmuls (bf16 operands, f32 accumulation). ----
    z = acc.reshape(TH * W, C2)
    gsum = gsum_ref[...]             # (C2, 8) bf16, 0/1 group membership
    gexp = gexp_ref[...]             # (8, C2) bf16, 0/1 group expansion
    gm = jnp.dot(z.astype(jnp.bfloat16), gsum,
                 preferred_element_type=jnp.float32) * inv_cq          # (M, 8)
    mu = jnp.dot(gm.astype(jnp.bfloat16), gexp,
                 preferred_element_type=jnp.float32)                   # (M, C2)
    zc = z - mu
    gv = jnp.dot((zc * zc).astype(jnp.bfloat16), gsum,
                 preferred_element_type=jnp.float32) * inv_cq          # (M, 8)
    inv = jnp.dot(jax.lax.rsqrt(gv + eps).astype(jnp.bfloat16), gexp,
                  preferred_element_type=jnp.float32)                  # (M, C2)
    out = zc * inv * gamma_ref[...] + beta_ref[...]
    o_ref[0] = out.reshape(TH, W, C2).astype(o_ref.dtype)


# ---------------------------------------------------------------------------
# VMEM capacity query + tile-size heuristic
# ---------------------------------------------------------------------------
def _vmem_capacity_bytes():
    try:
        info = pltpu.get_tpu_info()
        for attr in ("vmem_capacity_bytes", "vmem_size_bytes", "vmem_bytes"):
            cap = getattr(info, attr, None)
            if cap:
                return int(cap)
    except Exception:
        pass
    return 64 << 20          # conservative fallback (v7x per-core VMEM)


def _choose_tile_h(B, H, W, Cin, C2, *, vmem_budget, min_steps=2):
    divs = [d for d in range(1, H + 1) if H % d == 0]

    def tile_bytes(th):
        rows = th + 2
        in_blocks = 2 * (th * W * Cin * 2) + 2 * 2 * (W * Cin * 2)   # bf16, dbl-buf
        out_blocks = 2 * (th * W * C2 * 4)                            # f32, dbl-buf
        scratch = rows * (W + 2) * C2 * 4                             # haloed y
        temps = 6 * th * W * C2 * 4                                   # acc/z/zc/mu/inv/out
        weights = 2 * (Cin * C2 * 2 + 9 * C2 * 4 + 6 * C2 * 4 + 32 * C2)
        return in_blocks + out_blocks + scratch + temps + weights

    fit = [d for d in divs if tile_bytes(d) <= vmem_budget] or [1]
    th = max(fit)
    # keep >= min_steps total grid steps (2 is enough for v7x megacore; on
    # single-TC chips extra steps are pure overhead, so don't force more).
    while B * (H // th) < min_steps:
        smaller = [d for d in fit if d < th]
        if not smaller:
            break
        th = max(smaller)
    return th


# ---------------------------------------------------------------------------
# Full LKPE forward
# ---------------------------------------------------------------------------
def lkpe_forward(x_nchw, params, *, tile_h=None):
    B, Cin, H, W = x_nchw.shape
    w1 = params["w1"]
    C2 = w1.shape[1]                       # = 2 * dim
    Cq = C2 // 4                           # = dim // 2
    assert C2 == 2 * Cin and W >= 2

    x = jnp.transpose(x_nchw, (0, 2, 3, 1)).astype(jnp.bfloat16)   # NHWC, bf16

    # fold eval-mode BatchNorm completely into the 1x1 conv: scale goes into
    # the (bf16) weight columns, shift stays as a single f32 add in-kernel.
    inv_std = 1.0 / jnp.sqrt(params["bn_var"] + params["bn_eps"])
    scale = params["bn_gamma"] * inv_std
    w1f = (w1 * scale[None, :]).astype(jnp.bfloat16)
    shift = ((params["b1"] - params["bn_mean"]) * scale
             + params["bn_beta"]).reshape(1, C2).astype(jnp.float32)

    # skinny group-reduction / group-expansion matrices for the fused LN
    gidx = jnp.arange(C2) // Cq
    g8 = jnp.arange(8)
    gsum = (gidx[:, None] == g8[None, :]).astype(jnp.bfloat16)   # (C2, 8)
    gexp = (g8[:, None] == gidx[None, :]).astype(jnp.bfloat16)   # (8, C2)
    gamma_rep = jnp.tile(params["ln_gamma"], 4).reshape(1, C2).astype(jnp.float32)
    beta_rep = jnp.tile(params["ln_beta"], 4).reshape(1, C2).astype(jnp.float32)
    wdw9 = params["w_dw"].reshape(9, C2).astype(jnp.float32)
    bdw = params["b_dw"].reshape(1, C2).astype(jnp.float32)

    cap = _vmem_capacity_bytes()
    TH = tile_h or _choose_tile_h(B, H, W, Cin, C2,
                                  vmem_budget=min(int(cap * 0.6), 48 << 20))
    assert H % TH == 0
    nh = H // TH

    kern = functools.partial(_lkpe_fused_kernel, TH=TH, W=W, C2=C2,
                             eps=float(params["ln_eps"]), inv_cq=1.0 / Cq)
    full2 = lambda b, i: (0, 0)
    y = pl.pallas_call(
        kern,
        out_shape=jax.ShapeDtypeStruct((B, H, W, C2), jnp.float32),
        grid_spec=pltpu.PrefetchScalarGridSpec(
            num_scalar_prefetch=0,
            grid=(B, nh),
            in_specs=[
                # 1-row top halo (clamped; zeroed in-kernel at the image edge)
                pl.BlockSpec((1, 1, W, Cin),
                             lambda b, i: (b, jnp.maximum(i * TH - 1, 0), 0, 0)),
                # body rows of the tile
                pl.BlockSpec((1, TH, W, Cin), lambda b, i: (b, i, 0, 0)),
                # 1-row bottom halo (clamped; zeroed in-kernel at the edge)
                pl.BlockSpec((1, 1, W, Cin),
                             lambda b, i: (b, jnp.minimum((i + 1) * TH, H - 1),
                                           0, 0)),
                pl.BlockSpec((Cin, C2), full2),           # w1 (BN-folded, bf16)
                pl.BlockSpec((1, C2), full2),             # BN shift
                pl.BlockSpec((9, C2), full2),             # dw weights
                pl.BlockSpec((1, C2), full2),             # dw bias
                pl.BlockSpec((C2, 8), full2),             # LN group-sum (bf16)
                pl.BlockSpec((8, C2), full2),             # LN group-expand (bf16)
                pl.BlockSpec((1, C2), full2),             # LN gamma (tiled x4)
                pl.BlockSpec((1, C2), full2),             # LN beta  (tiled x4)
            ],
            out_specs=pl.BlockSpec((1, TH, W, C2), lambda b, i: (b, i, 0, 0)),
            scratch_shapes=[pltpu.VMEM((TH + 2, W + 2, C2), jnp.float32)],
        ),
        compiler_params=pltpu.CompilerParams(
            dimension_semantics=("parallel", "parallel"),
            vmem_limit_bytes=min(int(cap * 3 // 4), 96 << 20)),
    )(x, x, x, w1f, shift, wdw9, bdw, gsum, gexp, gamma_rep, beta_rep)

    # pixel shuffle 'b h w (p1 p2 c) -> b (h p1) (w p2) c' folded into the one
    # XLA transpose that is needed anyway to return NCHW.
    out = y.reshape(B, H, W, 2, 2, Cq)
    out = jnp.transpose(out, (0, 5, 1, 3, 2, 4))
    return out.reshape(B, Cq, 2 * H, 2 * W)


# ---------------------------------------------------------------------------
# Pure-JAX reference (identical eval-mode semantics) for a correctness check
# ---------------------------------------------------------------------------
def _lkpe_reference(x_nchw, p):
    B, Cin, H, W = x_nchw.shape
    C2 = p["w1"].shape[1]
    Cq = C2 // 4
    x = jnp.transpose(x_nchw, (0, 2, 3, 1))
    y = jnp.einsum("bhwc,cd->bhwd", x, p["w1"]) + p["b1"]
    y = (y - p["bn_mean"]) / jnp.sqrt(p["bn_var"] + p["bn_eps"])
    y = y * p["bn_gamma"] + p["bn_beta"]
    y = jnp.maximum(y, 0.0)
    yp = jnp.pad(y, ((0, 0), (1, 1), (1, 1), (0, 0)))
    z = sum(yp[:, dh:dh + H, dw:dw + W, :] * p["w_dw"][dh, dw]
            for dh in range(3) for dw in range(3)) + p["b_dw"]
    z = z.reshape(B, H, W, 2, 2, Cq)
    mu = jnp.mean(z, axis=-1, keepdims=True)
    var = jnp.mean((z - mu) ** 2, axis=-1, keepdims=True)
    z = (z - mu) * jax.lax.rsqrt(var + p["ln_eps"]) * p["ln_gamma"] + p["ln_beta"]
    return jnp.transpose(z, (0, 5, 1, 3, 2, 4)).reshape(B, Cq, 2 * H, 2 * W)


if __name__ == "__main__":
    dim = 64
    B, H, W = 2, 16, 16
    C2 = 2 * dim
    Cq = dim // 2

    key = jax.random.PRNGKey(0)
    ks = jax.random.split(key, 11)
    params = dict(
        # PyTorch Conv2d(dim, 2*dim, 1) weight is (2*dim, dim, 1, 1); import as
        # w1 = torch_w[:, :, 0, 0].T  -> (dim, 2*dim).
        w1=0.1 * jax.random.normal(ks[0], (dim, C2), jnp.float32),
        b1=0.1 * jax.random.normal(ks[1], (C2,), jnp.float32),
        bn_gamma=1.0 + 0.1 * jax.random.normal(ks[2], (C2,), jnp.float32),
        bn_beta=0.1 * jax.random.normal(ks[3], (C2,), jnp.float32),
        bn_mean=0.1 * jax.random.normal(ks[4], (C2,), jnp.float32),
        bn_var=jnp.abs(jax.random.normal(ks[5], (C2,), jnp.float32)) + 0.5,
        bn_eps=1e-5,
        # PyTorch depthwise Conv2d weight is (2*dim, 1, 3, 3); import as
        # w_dw = torch_w.squeeze(1).permute(1, 2, 0)  -> (3, 3, 2*dim).
        w_dw=0.1 * jax.random.normal(ks[6], (3, 3, C2), jnp.float32),
        b_dw=0.1 * jax.random.normal(ks[7], (C2,), jnp.float32),
        ln_gamma=1.0 + 0.1 * jax.random.normal(ks[8], (Cq,), jnp.float32),
        ln_beta=0.1 * jax.random.normal(ks[9], (Cq,), jnp.float32),
        ln_eps=1e-5,
    )
    x = jax.random.normal(ks[10], (B, dim, H, W), jnp.float32)

    out = jax.jit(lambda v: lkpe_forward(v, params))(x)
    jax.block_until_ready(out)
    assert out.shape == (B, Cq, 2 * H, 2 * W), out.shape
    assert bool(jnp.all(jnp.isfinite(out)))

    ref = _lkpe_reference(x, params)
    abs_err = jnp.abs(out - ref)
    # bf16 MXU operands (adopted per the perf review) put the expected error on
    # the LN-normalized outputs at the ~1e-2 level; check both max and mean.
    assert float(jnp.max(abs_err)) < 1.0e-1, float(jnp.max(abs_err))
    assert float(jnp.mean(abs_err)) < 1.5e-2, float(jnp.mean(abs_err))

    print("KERNEL_OK")
</pallas_src>

<mosaic_0001>
module attributes {stable_mosaic.version = 11 : i64} {
  func.func @_lkpe_fused_kernel(%arg0: i32, %arg1: i32, %arg2: memref<1x1x16x64xbf16, #tpu.memory_space<vmem>>, %arg3: memref<1x16x16x64xbf16, #tpu.memory_space<vmem>>, %arg4: memref<1x1x16x64xbf16, #tpu.memory_space<vmem>>, %arg5: memref<64x128xbf16, #tpu.memory_space<vmem>>, %arg6: memref<1x128xf32, #tpu.memory_space<vmem>>, %arg7: memref<9x128xf32, #tpu.memory_space<vmem>>, %arg8: memref<1x128xf32, #tpu.memory_space<vmem>>, %arg9: memref<128x8xbf16, #tpu.memory_space<vmem>>, %arg10: memref<8x128xbf16, #tpu.memory_space<vmem>>, %arg11: memref<1x128xf32, #tpu.memory_space<vmem>>, %arg12: memref<1x128xf32, #tpu.memory_space<vmem>>, %arg13: memref<1x16x16x128xf32, #tpu.memory_space<vmem>>, %arg14: memref<18x18x128xf32, #tpu.memory_space<vmem>>) attributes {dimension_semantics = [#tpu.dimension_semantics<parallel>, #tpu.dimension_semantics<parallel>], iteration_bounds = array<i64: 2, 1>, scalar_prefetch = 0 : i64, scratch_operands = 1 : i64, tpu.core_type = #tpu.core_type<tc>, window_params = [{transform_indices = @transform_0, window_bounds = array<i64: 1, 1, 16, 64>}, {transform_indices = @transform_1, window_bounds = array<i64: 1, 16, 16, 64>}, {transform_indices = @transform_2, window_bounds = array<i64: 1, 1, 16, 64>}, {pipeline_mode = #tpu.pipeline_mode<synchronous>, transform_indices = @transform_3, window_bounds = array<i64: 64, 128>}, {pipeline_mode = #tpu.pipeline_mode<synchronous>, transform_indices = @transform_4, window_bounds = array<i64: 1, 128>}, {pipeline_mode = #tpu.pipeline_mode<synchronous>, transform_indices = @transform_5, window_bounds = array<i64: 9, 128>}, {pipeline_mode = #tpu.pipeline_mode<synchronous>, transform_indices = @transform_6, window_bounds = array<i64: 1, 128>}, {pipeline_mode = #tpu.pipeline_mode<synchronous>, transform_indices = @transform_7, window_bounds = array<i64: 128, 8>}, {pipeline_mode = #tpu.pipeline_mode<synchronous>, transform_indices = @transform_8, window_bounds = array<i64: 8, 128>}, {pipeline_mode = #tpu.pipeline_mode<synchronous>, transform_indices = @transform_9, window_bounds = array<i64: 1, 128>}, {pipeline_mode = #tpu.pipeline_mode<synchronous>, transform_indices = @transform_10, window_bounds = array<i64: 1, 128>}, {transform_indices = @transform_11, window_bounds = array<i64: 1, 16, 16, 128>}]} {
    %c0 = arith.constant 0 : index
    %c0_0 = arith.constant 0 : index
    %0 = vector.load %arg5[%c0, %c0_0] : memref<64x128xbf16, #tpu.memory_space<vmem>>, vector<64x128xbf16>
    %c0_1 = arith.constant 0 : index
    %c0_2 = arith.constant 0 : index
    %1 = vector.load %arg6[%c0_1, %c0_2] : memref<1x128xf32, #tpu.memory_space<vmem>>, vector<1x128xf32>
    %cst = arith.constant 0.000000e+00 : f32
    %2 = vector.broadcast %cst : f32 to vector<18x1x128xf32>
    %c0_3 = arith.constant 0 : index
    %c0_4 = arith.constant 0 : index
    %c0_5 = arith.constant 0 : index
    %3 = vector.load %arg14[%c0_3, %c0_4, %c0_5] : memref<18x18x128xf32, #tpu.memory_space<vmem>>, vector<18x1x128xf32>
    tpu.vector_store %arg14[%c0_3, %c0_4, %c0_5], %2 {strides = array<i32>} : memref<18x18x128xf32, #tpu.memory_space<vmem>>, vector<18x1x128xf32>,
    %cst_6 = arith.constant 0.000000e+00 : f32
    %4 = vector.broadcast %cst_6 : f32 to vector<18x1x128xf32>
    %c0_7 = arith.constant 0 : index
    %c17 = arith.constant 17 : index
    %c0_8 = arith.constant 0 : index
    %5 = vector.load %arg14[%c0_7, %c17, %c0_8] : memref<18x18x128xf32, #tpu.memory_space<vmem>>, vector<18x1x128xf32>
    tpu.vector_store %arg14[%c0_7, %c17, %c0_8], %4 {strides = array<i32>} : memref<18x18x128xf32, #tpu.memory_space<vmem>>, vector<18x1x128xf32>,
    %c0_9 = arith.constant 0 : index
    %c0_10 = arith.constant 0 : index
    %c0_11 = arith.constant 0 : index
    %c0_12 = arith.constant 0 : index
    %6 = vector.load %arg3[%c0_9, %c0_10, %c0_11, %c0_12] : memref<1x16x16x64xbf16, #tpu.memory_space<vmem>>, vector<1x16x16x64xbf16>
    %7 = vector.shape_cast %6 : vector<1x16x16x64xbf16> to vector<16x16x64xbf16>
    %8 = vector.shape_cast %7 : vector<16x16x64xbf16> to vector<256x64xbf16>
    %cst_13 = arith.constant dense<0.000000e+00> : vector<256x128xf32>
    %9 = tpu.matmul %8, %0, %cst_13 {dimension_numbers = #tpu.dot_dimension_numbers<[1], [0], [0], [1], [0, 0, 1, 1], [], []>} : vector<256x64xbf16>, vector<64x128xbf16>, vector<256x128xf32> -> vector<256x128xf32>
    %10 = vector.broadcast %1 : vector<1x128xf32> to vector<256x128xf32>
    %11 = arith.addf %9, %10 : vector<256x128xf32>
    %cst_14 = arith.constant 0.000000e+00 : f32
    %12 = vector.broadcast %cst_14 : f32 to vector<256x128xf32>
    %13 = arith.maximumf %11, %12 : vector<256x128xf32>
    %14 = vector.shape_cast %13 : vector<256x128xf32> to vector<16x16x128xf32>
    %c1 = arith.constant 1 : index
    %c1_15 = arith.constant 1 : index
    %c0_16 = arith.constant 0 : index
    %15 = vector.load %arg14[%c1, %c1_15, %c0_16] : memref<18x18x128xf32, #tpu.memory_space<vmem>>, vector<16x16x128xf32>
    tpu.vector_store %arg14[%c1, %c1_15, %c0_16], %14 {strides = array<i32>} : memref<18x18x128xf32, #tpu.memory_space<vmem>>, vector<16x16x128xf32>,
    %c0_i32 = arith.constant 0 : i32
    %16 = arith.cmpi eq, %arg1, %c0_i32 : i32
    %17 = arith.extui %16 : i1 to i32
    %c0_i32_17 = arith.constant 0 : i32
    %18 = arith.cmpi ne, %17, %c0_i32_17 : i32
    scf.if %18 {
      %cst_74 = arith.constant 0.000000e+00 : f32
      %119 = vector.broadcast %cst_74 : f32 to vector<1x16x128xf32>
      %c0_75 = arith.constant 0 : index
      %c1_76 = arith.constant 1 : index
      %c0_77 = arith.constant 0 : index
      %120 = vector.load %arg14[%c0_75, %c1_76, %c0_77] : memref<18x18x128xf32, #tpu.memory_space<vmem>>, vector<1x16x128xf32>
      tpu.vector_store %arg14[%c0_75, %c1_76, %c0_77], %119 {strides = array<i32>} : memref<18x18x128xf32, #tpu.memory_space<vmem>>, vector<1x16x128xf32>,
    } else {
    }
    %c0_i32_18 = arith.constant 0 : i32
    %19 = arith.cmpi sgt, %arg1, %c0_i32_18 : i32
    %20 = arith.extui %19 : i1 to i32
    %c0_i32_19 = arith.constant 0 : i32
    %21 = arith.cmpi ne, %20, %c0_i32_19 : i32
    scf.if %21 {
      %c0_74 = arith.constant 0 : index
      %c0_75 = arith.constant 0 : index
      %c0_76 = arith.constant 0 : index
      %c0_77 = arith.constant 0 : index
      %119 = vector.load %arg2[%c0_74, %c0_75, %c0_76, %c0_77] : memref<1x1x16x64xbf16, #tpu.memory_space<vmem>>, vector<1x1x16x64xbf16>
      %120 = vector.shape_cast %119 : vector<1x1x16x64xbf16> to vector<1x16x64xbf16>
      %121 = vector.shape_cast %120 : vector<1x16x64xbf16> to vector<16x64xbf16>
      %cst_78 = arith.constant dense<0.000000e+00> : vector<16x128xf32>
      %122 = tpu.matmul %121, %0, %cst_78 {dimension_numbers = #tpu.dot_dimension_numbers<[1], [0], [0], [1], [0, 0, 1, 1], [], []>} : vector<16x64xbf16>, vector<64x128xbf16>, vector<16x128xf32> -> vector<16x128xf32>
      %123 = vector.broadcast %1 : vector<1x128xf32> to vector<16x128xf32>
      %124 = arith.addf %122, %123 : vector<16x128xf32>
      %cst_79 = arith.constant 0.000000e+00 : f32
      %125 = vector.broadcast %cst_79 : f32 to vector<16x128xf32>
      %126 = arith.maximumf %124, %125 : vector<16x128xf32>
      %127 = vector.shape_cast %126 : vector<16x128xf32> to vector<1x16x128xf32>
      %c0_80 = arith.constant 0 : index
      %c1_81 = arith.constant 1 : index
      %c0_82 = arith.constant 0 : index
      %128 = vector.load %arg14[%c0_80, %c1_81, %c0_82] : memref<18x18x128xf32, #tpu.memory_space<vmem>>, vector<1x16x128xf32>
      tpu.vector_store %arg14[%c0_80, %c1_81, %c0_82], %127 {strides = array<i32>} : memref<18x18x128xf32, #tpu.memory_space<vmem>>, vector<1x16x128xf32>,
    } else {
    }
    %c0_i32_20 = arith.constant 0 : i32
    %22 = arith.cmpi eq, %arg1, %c0_i32_20 : i32
    %23 = arith.extui %22 : i1 to i32
    %c0_i32_21 = arith.constant 0 : i32
    %24 = arith.cmpi ne, %23, %c0_i32_21 : i32
    scf.if %24 {
      %cst_74 = arith.constant 0.000000e+00 : f32
      %119 = vector.broadcast %cst_74 : f32 to vector<1x16x128xf32>
      %c17_75 = arith.constant 17 : index
      %c1_76 = arith.constant 1 : index
      %c0_77 = arith.constant 0 : index
      %120 = vector.load %arg14[%c17_75, %c1_76, %c0_77] : memref<18x18x128xf32, #tpu.memory_space<vmem>>, vector<1x16x128xf32>
      tpu.vector_store %arg14[%c17_75, %c1_76, %c0_77], %119 {strides = array<i32>} : memref<18x18x128xf32, #tpu.memory_space<vmem>>, vector<1x16x128xf32>,
    } else {
    }
    %c0_i32_22 = arith.constant 0 : i32
    %25 = arith.cmpi slt, %arg1, %c0_i32_22 : i32
    %26 = arith.extui %25 : i1 to i32
    %c0_i32_23 = arith.constant 0 : i32
    %27 = arith.cmpi ne, %26, %c0_i32_23 : i32
    scf.if %27 {
      %c0_74 = arith.constant 0 : index
      %c0_75 = arith.constant 0 : index
      %c0_76 = arith.constant 0 : index
      %c0_77 = arith.constant 0 : index
      %119 = vector.load %arg4[%c0_74, %c0_75, %c0_76, %c0_77] : memref<1x1x16x64xbf16, #tpu.memory_space<vmem>>, vector<1x1x16x64xbf16>
      %120 = vector.shape_cast %119 : vector<1x1x16x64xbf16> to vector<1x16x64xbf16>
      %121 = vector.shape_cast %120 : vector<1x16x64xbf16> to vector<16x64xbf16>
      %cst_78 = arith.constant dense<0.000000e+00> : vector<16x128xf32>
      %122 = tpu.matmul %121, %0, %cst_78 {dimension_numbers = #tpu.dot_dimension_numbers<[1], [0], [0], [1], [0, 0, 1, 1], [], []>} : vector<16x64xbf16>, vector<64x128xbf16>, vector<16x128xf32> -> vector<16x128xf32>
      %123 = vector.broadcast %1 : vector<1x128xf32> to vector<16x128xf32>
      %124 = arith.addf %122, %123 : vector<16x128xf32>
      %cst_79 = arith.constant 0.000000e+00 : f32
      %125 = vector.broadcast %cst_79 : f32 to vector<16x128xf32>
      %126 = arith.maximumf %124, %125 : vector<16x128xf32>
      %127 = vector.shape_cast %126 : vector<16x128xf32> to vector<1x16x128xf32>
      %c17_80 = arith.constant 17 : index
      %c1_81 = arith.constant 1 : index
      %c0_82 = arith.constant 0 : index
      %128 = vector.load %arg14[%c17_80, %c1_81, %c0_82] : memref<18x18x128xf32, #tpu.memory_space<vmem>>, vector<1x16x128xf32>
      tpu.vector_store %arg14[%c17_80, %c1_81, %c0_82], %127 {strides = array<i32>} : memref<18x18x128xf32, #tpu.memory_space<vmem>>, vector<1x16x128xf32>,
    } else {
    }
    %c0_24 = arith.constant 0 : index
    %c0_25 = arith.constant 0 : index
    %28 = vector.load %arg7[%c0_24, %c0_25] : memref<9x128xf32, #tpu.memory_space<vmem>>, vector<9x128xf32>
    %cst_26 = arith.constant 0.000000e+00 : f32
    %29 = vector.broadcast %cst_26 : f32 to vector<16x16x128xf32>
    %c0_27 = arith.constant 0 : index
    %c0_28 = arith.constant 0 : index
    %c0_29 = arith.constant 0 : index
    %30 = vector.load %arg14[%c0_27, %c0_28, %c0_29] : memref<18x18x128xf32, #tpu.memory_space<vmem>>, vector<16x16x128xf32>
    %31 = vector.extract_strided_slice %28 {offsets = [0, 0], sizes = [1, 128], strides = [1, 1]} : vector<9x128xf32> to vector<1x128xf32>
    %32 = vector.shape_cast %31 : vector<1x128xf32> to vector<1x1x128xf32>
    %33 = vector.broadcast %32 : vector<1x1x128xf32> to vector<16x16x128xf32>
    %34 = arith.mulf %30, %33 : vector<16x16x128xf32>
    %35 = arith.addf %29, %34 : vector<16x16x128xf32>
    %c0_30 = arith.constant 0 : index
    %c1_31 = arith.constant 1 : index
    %c0_32 = arith.constant 0 : index
    %36 = vector.load %arg14[%c0_30, %c1_31, %c0_32] : memref<18x18x128xf32, #tpu.memory_space<vmem>>, vector<16x16x128xf32>
    %37 = vector.extract_strided_slice %28 {offsets = [1, 0], sizes = [1, 128], strides = [1, 1]} : vector<9x128xf32> to vector<1x128xf32>
    %38 = vector.shape_cast %37 : vector<1x128xf32> to vector<1x1x128xf32>
    %39 = vector.broadcast %38 : vector<1x1x128xf32> to vector<16x16x128xf32>
    %40 = arith.mulf %36, %39 : vector<16x16x128xf32>
    %41 = arith.addf %35, %40 : vector<16x16x128xf32>
    %c0_33 = arith.constant 0 : index
    %c2 = arith.constant 2 : index
    %c0_34 = arith.constant 0 : index
    %42 = vector.load %arg14[%c0_33, %c2, %c0_34] : memref<18x18x128xf32, #tpu.memory_space<vmem>>, vector<16x16x128xf32>
    %43 = vector.extract_strided_slice %28 {offsets = [2, 0], sizes = [1, 128], strides = [1, 1]} : vector<9x128xf32> to vector<1x128xf32>
    %44 = vector.shape_cast %43 : vector<1x128xf32> to vector<1x1x128xf32>
    %45 = vector.broadcast %44 : vector<1x1x128xf32> to vector<16x16x128xf32>
    %46 = arith.mulf %42, %45 : vector<16x16x128xf32>
    %47 = arith.addf %41, %46 : vector<16x16x128xf32>
    %c1_35 = arith.constant 1 : index
    %c0_36 = arith.constant 0 : index
    %c0_37 = arith.constant 0 : index
    %48 = vector.load %arg14[%c1_35, %c0_36, %c0_37] : memref<18x18x128xf32, #tpu.memory_space<vmem>>, vector<16x16x128xf32>
    %49 = vector.extract_strided_slice %28 {offsets = [3, 0], sizes = [1, 128], strides = [1, 1]} : vector<9x128xf32> to vector<1x128xf32>
    %50 = vector.shape_cast %49 : vector<1x128xf32> to vector<1x1x128xf32>
    %51 = vector.broadcast %50 : vector<1x1x128xf32> to vector<16x16x128xf32>
    %52 = arith.mulf %48, %51 : vector<16x16x128xf32>
    %53 = arith.addf %47, %52 : vector<16x16x128xf32>
    %c1_38 = arith.constant 1 : index
    %c1_39 = arith.constant 1 : index
    %c0_40 = arith.constant 0 : index
    %54 = vector.load %arg14[%c1_38, %c1_39, %c0_40] : memref<18x18x128xf32, #tpu.memory_space<vmem>>, vector<16x16x128xf32>
    %55 = vector.extract_strided_slice %28 {offsets = [4, 0], sizes = [1, 128], strides = [1, 1]} : vector<9x128xf32> to vector<1x128xf32>
    %56 = vector.shape_cast %55 : vector<1x128xf32> to vector<1x1x128xf32>
    %57 = vector.broadcast %56 : vector<1x1x128xf32> to vector<16x16x128xf32>
    %58 = arith.mulf %54, %57 : vector<16x16x128xf32>
    %59 = arith.addf %53, %58 : vector<16x16x128xf32>
    %c1_41 = arith.constant 1 : index
    %c2_42 = arith.constant 2 : index
    %c0_43 = arith.constant 0 : index
    %60 = vector.load %arg14[%c1_41, %c2_42, %c0_43] : memref<18x18x128xf32, #tpu.memory_space<vmem>>, vector<16x16x128xf32>
    %61 = vector.extract_strided_slice %28 {offsets = [5, 0], sizes = [1, 128], strides = [1, 1]} : vector<9x128xf32> to vector<1x128xf32>
    %62 = vector.shape_cast %61 : vector<1x128xf32> to vector<1x1x128xf32>
    %63 = vector.broadcast %62 : vector<1x1x128xf32> to vector<16x16x128xf32>
    %64 = arith.mulf %60, %63 : vector<16x16x128xf32>
    %65 = arith.addf %59, %64 : vector<16x16x128xf32>
    %c2_44 = arith.constant 2 : index
    %c0_45 = arith.constant 0 : index
    %c0_46 = arith.constant 0 : index
    %66 = vector.load %arg14[%c2_44, %c0_45, %c0_46] : memref<18x18x128xf32, #tpu.memory_space<vmem>>, vector<16x16x128xf32>
    %67 = vector.extract_strided_slice %28 {offsets = [6, 0], sizes = [1, 128], strides = [1, 1]} : vector<9x128xf32> to vector<1x128xf32>
    %68 = vector.shape_cast %67 : vector<1x128xf32> to vector<1x1x128xf32>
    %69 = vector.broadcast %68 : vector<1x1x128xf32> to vector<16x16x128xf32>
    %70 = arith.mulf %66, %69 : vector<16x16x128xf32>
    %71 = arith.addf %65, %70 : vector<16x16x128xf32>
    %c2_47 = arith.constant 2 : index
    %c1_48 = arith.constant 1 : index
    %c0_49 = arith.constant 0 : index
    %72 = vector.load %arg14[%c2_47, %c1_48, %c0_49] : memref<18x18x128xf32, #tpu.memory_space<vmem>>, vector<16x16x128xf32>
    %73 = vector.extract_strided_slice %28 {offsets = [7, 0], sizes = [1, 128], strides = [1, 1]} : vector<9x128xf32> to vector<1x128xf32>
    %74 = vector.shape_cast %73 : vector<1x128xf32> to vector<1x1x128xf32>
    %75 = vector.broadcast %74 : vector<1x1x128xf32> to vector<16x16x128xf32>
    %76 = arith.mulf %72, %75 : vector<16x16x128xf32>
    %77 = arith.addf %71, %76 : vector<16x16x128xf32>
    %c2_50 = arith.constant 2 : index
    %c2_51 = arith.constant 2 : index
    %c0_52 = arith.constant 0 : index
    %78 = vector.load %arg14[%c2_50, %c2_51, %c0_52] : memref<18x18x128xf32, #tpu.memory_space<vmem>>, vector<16x16x128xf32>
    %79 = vector.extract_strided_slice %28 {offsets = [8, 0], sizes = [1, 128], strides = [1, 1]} : vector<9x128xf32> to vector<1x128xf32>
    %80 = vector.shape_cast %79 : vector<1x128xf32> to vector<1x1x128xf32>
    %81 = vector.broadcast %80 : vector<1x1x128xf32> to vector<16x16x128xf32>
    %82 = arith.mulf %78, %81 : vector<16x16x128xf32>
    %83 = arith.addf %77, %82 : vector<16x16x128xf32>
    %c0_53 = arith.constant 0 : index
    %c0_54 = arith.constant 0 : index
    %84 = vector.load %arg8[%c0_53, %c0_54] : memref<1x128xf32, #tpu.memory_space<vmem>>, vector<1x128xf32>
    %85 = vector.shape_cast %84 : vector<1x128xf32> to vector<1x1x128xf32>
    %86 = vector.broadcast %85 : vector<1x1x128xf32> to vector<16x16x128xf32>
    %87 = arith.addf %83, %86 : vector<16x16x128xf32>
    %88 = vector.shape_cast %87 : vector<16x16x128xf32> to vector<256x128xf32>
    %c0_55 = arith.constant 0 : index
    %c0_56 = arith.constant 0 : index
    %89 = vector.load %arg9[%c0_55, %c0_56] : memref<128x8xbf16, #tpu.memory_space<vmem>>, vector<128x8xbf16>
    %c0_57 = arith.constant 0 : index
    %c0_58 = arith.constant 0 : index
    %90 = vector.load %arg10[%c0_57, %c0_58] : memref<8x128xbf16, #tpu.memory_space<vmem>>, vector<8x128xbf16>
    %91 = arith.truncf %88 : vector<256x128xf32> to vector<256x128xbf16>
    %cst_59 = arith.constant dense<0.000000e+00> : vector<256x8xf32>
    %92 = tpu.matmul %91, %89, %cst_59 {dimension_numbers = #tpu.dot_dimension_numbers<[1], [0], [0], [1], [0, 0, 1, 1], [], []>} : vector<256x128xbf16>, vector<128x8xbf16>, vector<256x8xf32> -> vector<256x8xf32>
    %cst_60 = arith.constant 3.125000e-02 : f32
    %93 = vector.broadcast %cst_60 : f32 to vector<256x8xf32>
    %94 = arith.mulf %92, %93 : vector<256x8xf32>
    %95 = arith.truncf %94 : vector<256x8xf32> to vector<256x8xbf16>
    %cst_61 = arith.constant dense<0.000000e+00> : vector<256x128xf32>
    %96 = tpu.matmul %95, %90, %cst_61 {dimension_numbers = #tpu.dot_dimension_numbers<[1], [0], [0], [1], [0, 0, 1, 1], [], []>} : vector<256x8xbf16>, vector<8x128xbf16>, vector<256x128xf32> -> vector<256x128xf32>
    %97 = arith.subf %88, %96 : vector<256x128xf32>
    %98 = arith.mulf %97, %97 : vector<256x128xf32>
    %99 = arith.truncf %98 : vector<256x128xf32> to vector<256x128xbf16>
    %cst_62 = arith.constant dense<0.000000e+00> : vector<256x8xf32>
    %100 = tpu.matmul %99, %89, %cst_62 {dimension_numbers = #tpu.dot_dimension_numbers<[1], [0], [0], [1], [0, 0, 1, 1], [], []>} : vector<256x128xbf16>, vector<128x8xbf16>, vector<256x8xf32> -> vector<256x8xf32>
    %cst_63 = arith.constant 3.125000e-02 : f32
    %101 = vector.broadcast %cst_63 : f32 to vector<256x8xf32>
    %102 = arith.mulf %100, %101 : vector<256x8xf32>
    %cst_64 = arith.constant 9.99999974E-6 : f32
    %103 = vector.broadcast %cst_64 : f32 to vector<256x8xf32>
    %104 = arith.addf %102, %103 : vector<256x8xf32>
    %105 = math.rsqrt %104 : vector<256x8xf32>
    %106 = arith.truncf %105 : vector<256x8xf32> to vector<256x8xbf16>
    %cst_65 = arith.constant dense<0.000000e+00> : vector<256x128xf32>
    %107 = tpu.matmul %106, %90, %cst_65 {dimension_numbers = #tpu.dot_dimension_numbers<[1], [0], [0], [1], [0, 0, 1, 1], [], []>} : vector<256x8xbf16>, vector<8x128xbf16>, vector<256x128xf32> -> vector<256x128xf32>
    %108 = arith.mulf %97, %107 : vector<256x128xf32>
    %c0_66 = arith.constant 0 : index
    %c0_67 = arith.constant 0 : index
    %109 = vector.load %arg11[%c0_66, %c0_67] : memref<1x128xf32, #tpu.memory_space<vmem>>, vector<1x128xf32>
    %110 = vector.broadcast %109 : vector<1x128xf32> to vector<256x128xf32>
    %111 = arith.mulf %108, %110 : vector<256x128xf32>
    %c0_68 = arith.constant 0 : index
    %c0_69 = arith.constant 0 : index
    %112 = vector.load %arg12[%c0_68, %c0_69] : memref<1x128xf32, #tpu.memory_space<vmem>>, vector<1x128xf32>
    %113 = vector.broadcast %112 : vector<1x128xf32> to vector<256x128xf32>
    %114 = arith.addf %111, %113 : vector<256x128xf32>
    %115 = vector.shape_cast %114 : vector<256x128xf32> to vector<16x16x128xf32>
    %c0_70 = arith.constant 0 : index
    %c0_71 = arith.constant 0 : index
    %c0_72 = arith.constant 0 : index
    %c0_73 = arith.constant 0 : index
    %116 = vector.load %arg13[%c0_70, %c0_71, %c0_72, %c0_73] : memref<1x16x16x128xf32, #tpu.memory_space<vmem>>, vector<1x16x16x128xf32>
    %117 = vector.shape_cast %116 : vector<1x16x16x128xf32> to vector<16x16x128xf32>
    %118 = vector.shape_cast %115 : vector<16x16x128xf32> to vector<1x16x16x128xf32>
    tpu.vector_store %arg13[%c0_70, %c0_71, %c0_72, %c0_73], %118 {strides = array<i32>} : memref<1x16x16x128xf32, #tpu.memory_space<vmem>>, vector<1x16x16x128xf32>,
    return
  }
  func.func @transform_0(%arg0: i32, %arg1: i32) -> (i32, i32, i32, i32) {
    %c16_i32 = arith.constant 16 : i32
    %0 = arith.muli %arg1, %c16_i32 : i32
    %c1_i32 = arith.constant 1 : i32
    %1 = arith.subi %0, %c1_i32 : i32
    %c0_i32 = arith.constant 0 : i32
    %2 = arith.maxsi %1, %c0_i32 : i32
    %c0_i32_0 = arith.constant 0 : i32
    %c0_i32_1 = arith.constant 0 : i32
    %c0_i32_2 = arith.constant 0 : i32
    return %arg0, %2, %c0_i32_0, %c0_i32_1 : i32, i32, i32, i32
  }
  func.func @transform_1(%arg0: i32, %arg1: i32) -> (i32, i32, i32, i32) {
    %c0_i32 = arith.constant 0 : i32
    %c0_i32_0 = arith.constant 0 : i32
    %c0_i32_1 = arith.constant 0 : i32
    return %arg0, %arg1, %c0_i32, %c0_i32_0 : i32, i32, i32, i32
  }
  func.func @transform_2(%arg0: i32, %arg1: i32) -> (i32, i32, i32, i32) {
    %c1_i32 = arith.constant 1 : i32
    %0 = arith.addi %arg1, %c1_i32 : i32
    %c16_i32 = arith.constant 16 : i32
    %1 = arith.muli %0, %c16_i32 : i32
    %c15_i32 = arith.constant 15 : i32
    %2 = arith.minsi %1, %c15_i32 : i32
    %c0_i32 = arith.constant 0 : i32
    %c0_i32_0 = arith.constant 0 : i32
    %c0_i32_1 = arith.constant 0 : i32
    return %arg0, %2, %c0_i32, %c0_i32_0 : i32, i32, i32, i32
  }
  func.func @transform_3(%arg0: i32, %arg1: i32) -> (i32, i32) {
    %c0_i32 = arith.constant 0 : i32
    %c0_i32_0 = arith.constant 0 : i32
    %c0_i32_1 = arith.constant 0 : i32
    return %c0_i32, %c0_i32_0 : i32, i32
  }
  func.func @transform_4(%arg0: i32, %arg1: i32) -> (i32, i32) {
    %c0_i32 = arith.constant 0 : i32
    %c0_i32_0 = arith.constant 0 : i32
    %c0_i32_1 = arith.constant 0 : i32
    return %c0_i32, %c0_i32_0 : i32, i32
  }
  func.func @transform_5(%arg0: i32, %arg1: i32) -> (i32, i32) {
    %c0_i32 = arith.constant 0 : i32
    %c0_i32_0 = arith.constant 0 : i32
    %c0_i32_1 = arith.constant 0 : i32
    return %c0_i32, %c0_i32_0 : i32, i32
  }
  func.func @transform_6(%arg0: i32, %arg1: i32) -> (i32, i32) {
    %c0_i32 = arith.constant 0 : i32
    %c0_i32_0 = arith.constant 0 : i32
    %c0_i32_1 = arith.constant 0 : i32
    return %c0_i32, %c0_i32_0 : i32, i32
  }
  func.func @transform_7(%arg0: i32, %arg1: i32) -> (i32, i32) {
    %c0_i32 = arith.constant 0 : i32
    %c0_i32_0 = arith.constant 0 : i32
    %c0_i32_1 = arith.constant 0 : i32
    return %c0_i32, %c0_i32_0 : i32, i32
  }
  func.func @transform_8(%arg0: i32, %arg1: i32) -> (i32, i32) {
    %c0_i32 = arith.constant 0 : i32
    %c0_i32_0 = arith.constant 0 : i32
    %c0_i32_1 = arith.constant 0 : i32
    return %c0_i32, %c0_i32_0 : i32, i32
  }
  func.func @transform_9(%arg0: i32, %arg1: i32) -> (i32, i32) {
    %c0_i32 = arith.constant 0 : i32
    %c0_i32_0 = arith.constant 0 : i32
    %c0_i32_1 = arith.constant 0 : i32
    return %c0_i32, %c0_i32_0 : i32, i32
  }
  func.func @transform_10(%arg0: i32, %arg1: i32) -> (i32, i32) {
    %c0_i32 = arith.constant 0 : i32
    %c0_i32_0 = arith.constant 0 : i32
    %c0_i32_1 = arith.constant 0 : i32
    return %c0_i32, %c0_i32_0 : i32, i32
  }
  func.func @transform_11(%arg0: i32, %arg1: i32) -> (i32, i32, i32, i32) {
    %c0_i32 = arith.constant 0 : i32
    %c0_i32_0 = arith.constant 0 : i32
    %c0_i32_1 = arith.constant 0 : i32
    return %arg0, %arg1, %c0_i32, %c0_i32_0 : i32, i32, i32, i32
  }
}

</mosaic_0001>

<llo_original>
// kernel: tile.10
$region0: #{tile.10}
  #allocation0 [shape = 's32[1]{0}', space=sflag, size = 0x4, scoped, tag = 'scoped memory for tile.10']
  %s0 = inlined_call_operand.vmem [shape: f32[32], index: 0, kind: input, shape index: {}]
  %s1 = inlined_call_operand.vmem [shape: f32[4,32], index: 1, kind: output, shape index: {}]
  // Predicated region
  $region2: #{tile.10} parent=0 // pred_check
    _
  $region3: #{tile.10} parent=0 // pred_check_branch
    %3 = sbr.rel (0) target = $region5
  $region4: #{tile.10} parent=0 // pred_region
    _
  $region5: #{tile.10} parent=0 // pred_fallthru
    _
  %v4 = vld [vmem:[%s0] ss:$0 sm:$0xff]
  %5 = vst [vmem:[%s1] sm:$0xf] %v4

// kernel: tile.11
$region0: #{tile.11}
  %s0 = inlined_call_operand.vmem [shape: f32[4,32], index: 0, kind: input, shape index: {}]
  %s1 = inlined_call_operand.vmem [shape: f32[1,128], index: 1, kind: output, shape index: {}]
  $region1: #{tile.11} parent=0
    #allocation0 [shape = 'u8[4096]{0}', space=vmem, size = 0x1000, scoped, tag = 'scoped mem for output reshape']
    #allocation1 [shape = 'u8[4096]{0}', space=vmem, size = 0x1000, scoped, tag = 'scoped mem for input reshape']
    %s3 = sshll.u32 1, 4
    %s4 = ssub.s32 %s3, 1
    %v5 = vld [vmem:[%s0] sm:%s4]
    %6 = vst [vmem:[#allocation1] sm:%s4] %v5
    %v7 = vld [vmem:[#allocation1] sm:$0x1]
    %vm8 = vcmask 261120
    %9 = vst.msk [vmem:[#allocation0] sm:$0x1] %vm8, %v7
    %s10 = scalar_lea.vmem [#allocation1], 3
    %v11 = vld [vmem:[%s10] sm:$0x1]
    %12 = vrot.lane.b32.xlu0 %v11, 96
    %v13 = vpop.permute.xlu0 %12
    %vm14 = vcmask 1048320
    %15 = vst.msk [vmem:[#allocation0] sm:$0x1] %vm14, %v13
    %s16 = scalar_lea.vmem [#allocation1], 2
    %v17 = vld [vmem:[%s16] sm:$0x1]
    %18 = vrot.lane.b32.xlu0 %v17, 64
    %v19 = vpop.permute.xlu0 %18
    %vm20 = vcmask 785920
    %21 = vst.msk [vmem:[#allocation0] sm:$0x1] %vm20, %v19
    %s22 = scalar_lea.vmem [#allocation1], 1
    %v23 = vld [vmem:[%s22] sm:$0x1]
    %24 = vrot.lane.b32.xlu0 %v23, 32
    %v25 = vpop.permute.xlu0 %24
    %vm26 = vcmask 523520
    %27 = vst.msk [vmem:[#allocation0] sm:$0x1] %vm26, %v25
    %s29 = sshll.u32 1, 1
    %s30 = ssub.s32 %s29, 1
    %v32 = vld [vmem:[#allocation0] sm:%s30]
    %s33 = sshll.u32 1, 1
    %s34 = ssub.s32 %s33, 1
    %35 = vst [vmem:[%s1] sm:%s34] %v32

// kernel: _lambda_.1
$region0: #{_lambda_.1}
  #allocation0 [shape = 'u32[]', space=smem, size = 0x4, offset = 0x4, fixed_abs, tag = 'smem constant byte address 0x4 - core index']
  #allocation1 [shape = 'u32[144,128]{1,0:T(1,128)}', space=vmem, size = 0x12000, scoped, tag = 'internal scratch']
  #allocation2 [shape = 'f32[18,18,128]{2,1,0:T(8,128)}', space=vmem, size = 0x36000, scoped, tag = 'scratch operand']
  %s0 = inlined_call_operand.vmem [shape: bf16[2,16,16,64], index: 0, kind: input, shape index: {}, may-alias: {0,1,2}]
  %s1 = inlined_call_operand.vmem [shape: bf16[2,16,16,64], index: 1, kind: input, shape index: {}, may-alias: {0,1,2}]
  %s2 = inlined_call_operand.vmem [shape: bf16[2,16,16,64], index: 2, kind: input, shape index: {}, may-alias: {0,1,2}]
  %s3 = inlined_call_operand.vmem [shape: bf16[64,128], index: 3, kind: input, shape index: {}]
  %s4 = inlined_call_operand.vmem [shape: f32[1,128], index: 4, kind: input, shape index: {}]
  %s5 = inlined_call_operand.vmem [shape: f32[9,128], index: 5, kind: input, shape index: {}]
  %s6 = inlined_call_operand.vmem [shape: f32[1,128], index: 6, kind: input, shape index: {}]
  %s7 = inlined_call_operand.vmem [shape: bf16[128,8], index: 7, kind: input, shape index: {}]
  %s8 = inlined_call_operand.vmem [shape: bf16[8,128], index: 8, kind: input, shape index: {}]
  %s9 = inlined_call_operand.vmem [shape: f32[1,128], index: 9, kind: input, shape index: {}]
  %s10 = inlined_call_operand.vmem [shape: f32[1,128], index: 10, kind: input, shape index: {}]
  %s11 = inlined_call_operand.vmem [shape: f32[2,16,16,128], index: 11, kind: output, shape index: {}]
  %s12 = sld [smem:[#allocation0]]
  $region93: #{_lambda_.1} parent=0
    _
  %s14 = ssub.s32 1, %s12
  %s15 = scalar_select 0, %s14, %s12
  loop: start=0, step=1, limit=4
  $region2: #{_lambda_.1} parent=0 // loop_pre_header
    _
  $region3: #{_lambda_.1} parent=0 // loop_header
    %s17 = sphi 0, %s21
    %p18 = scmp.ge.s32.totalorder %s17, 4
    %s24 = sphi 0, %s36
    %s25 = sphi 0, %s32
    %s26 = sphi 0, %s24
    %s27 = sphi 0, %s25
    %s28 = sphi 0, %s26
    %s29 = sphi 0, %s27
    %s49 = sphi 0, %s51
    %s52 = sphi 0, %s49
    %s53 = sphi 0, %s52
    %s69 = sphi 0, %s53
    %s77 = sphi 0, %s79
    %s80 = sphi 0, %s77
    %s81 = sphi 0, %s80
    %s97 = sphi 0, %s81
    %s113 = sphi 0, %s115
    %s116 = sphi 0, %s113
    %s117 = sphi 0, %s116
    %s133 = sphi 0, %s117
    %s137 = sphi 0, %s137
    %s139 = sphi 0, %s137
    %s140 = sphi 0, %s139
    %s154 = sphi 0, %s140
    %s158 = sphi 0, %s158
    %s160 = sphi 0, %s158
    %s161 = sphi 0, %s160
    %s175 = sphi 0, %s161
    %s179 = sphi 0, %s179
    %s181 = sphi 0, %s179
    %s182 = sphi 0, %s181
    %s196 = sphi 0, %s182
    %s200 = sphi 0, %s200
    %s202 = sphi 0, %s200
    %s203 = sphi 0, %s202
    %s217 = sphi 0, %s203
    %s221 = sphi 0, %s221
    %s223 = sphi 0, %s221
    %s224 = sphi 0, %s223
    %s238 = sphi 0, %s224
    %s242 = sphi 0, %s242
    %s244 = sphi 0, %s242
    %s245 = sphi 0, %s244
    %s259 = sphi 0, %s245
    %s263 = sphi 0, %s263
    %s265 = sphi 0, %s263
    %s266 = sphi 0, %s265
    %s280 = sphi 0, %s266
    %s284 = sphi 0, %s284
    %s286 = sphi 0, %s284
    %s287 = sphi 0, %s286
    %s301 = sphi 0, %s287
    %s309 = sphi 0, %s311
    %s312 = sphi 0, %s309
    %s313 = sphi 0, %s312
    %s329 = sphi 0, %s313
  $region4: #{_lambda_.1} parent=0 // loop_header_branch
    %20 = sbr.rel (%p18) target = $region8
  $region5: #{_lambda_.1} parent=0 // loop_body
    %s22 = ssub.s32 %s17, 1
    %s23 = ssub.s32 %s17, 2
    %s30 = sadd.s32 1, %s25
    %p31 = scmp.ge.s32.totalorder %s30, 1
    %s32 = scalar_select %p31, 0, %s30
    %s33 = sadd.s32 1, %s24
    %s34 = scalar_select %p31, %s33, %s24
    %p35 = scmp.ge.s32.totalorder %s34, 2
    %s36 = scalar_select %p35, 0, %s34
    %s37 = smul.u32 %s25, 16
    %s38 = ssub.s32 %s37, 1
    %p39 = scmp.gt.s32.totalorder %s38, 0
    %s40 = scalar_select %p39, %s38, 0
    %s41 = smul.u32 %s32, 16
    %s42 = ssub.s32 %s41, 1
    %p43 = scmp.gt.s32.totalorder %s42, 0
    %s44 = scalar_select %p43, %s42, 0
    %s45 = ssub.s32 %s24, %s36
    %s46 = ssub.s32 %s40, %s44
    %s47 = sor.u32 %s45, %s46
    %p48 = scmp.eq.s32.totalorder %s47, 0
    %s50 = sadd.s32 %s49, 1
    %s51 = scalar_select %p48, %s49, %s50
    %p54 = pneg %p48
    %p55 = scmp.eq.s32.totalorder %s17, 1
    %p56 = por %p54, %p55
    %p57 = scmp.ne.s32.totalorder %s49, %s52
    %p58 = scmp.eq.s32.totalorder %s17, 0
    %p59 = por %p57, %p58
    %p60 = scmp.ne.s32.totalorder %s49, %s52
    %p61 = scmp.eq.s32.totalorder %s22, 1
    %p62 = por %p60, %p61
    %p63 = scmp.ne.s32.totalorder %s52, %s53
    %p64 = scmp.eq.s32.totalorder %s22, 0
    %p65 = por %p63, %p64
    %p66 = scmp.ne.s32.totalorder %s52, %s53
    %p67 = scmp.eq.s32.totalorder %s23, 1
    %p68 = por %p66, %p67
    %p70 = scmp.ne.s32.totalorder %s53, %s69
    %p71 = scmp.eq.s32.totalorder %s23, 0
    %p72 = por %p70, %p71
    %s73 = ssub.s32 %s24, %s36
    %s74 = ssub.s32 %s25, %s32
    %s75 = sor.u32 %s73, %s74
    %p76 = scmp.eq.s32.totalorder %s75, 0
    %s78 = sadd.s32 %s77, 1
    %s79 = scalar_select %p76, %s77, %s78
    %p82 = pneg %p76
    %p83 = scmp.eq.s32.totalorder %s17, 1
    %p84 = por %p82, %p83
    %p85 = scmp.ne.s32.totalorder %s77, %s80
    %p86 = scmp.eq.s32.totalorder %s17, 0
    %p87 = por %p85, %p86
    %p88 = scmp.ne.s32.totalorder %s77, %s80
    %p89 = scmp.eq.s32.totalorder %s22, 1
    %p90 = por %p88, %p89
    %p91 = scmp.ne.s32.totalorder %s80, %s81
    %p92 = scmp.eq.s32.totalorder %s22, 0
    %p93 = por %p91, %p92
    %p94 = scmp.ne.s32.totalorder %s80, %s81
    %p95 = scmp.eq.s32.totalorder %s23, 1
    %p96 = por %p94, %p95
    %p98 = scmp.ne.s32.totalorder %s81, %s97
    %p99 = scmp.eq.s32.totalorder %s23, 0
    %p100 = por %p98, %p99
    %s101 = sadd.s32 %s25, 1
    %s102 = smul.u32 %s101, 16
    %p103 = scmp.lt.s32.totalorder %s102, 15
    %s104 = scalar_select %p103, %s102, 15
    %s105 = sadd.s32 %s32, 1
    %s106 = smul.u32 %s105, 16
    %p107 = scmp.lt.s32.totalorder %s106, 15
    %s108 = scalar_select %p107, %s106, 15
    %s109 = ssub.s32 %s24, %s36
    %s110 = ssub.s32 %s104, %s108
    %s111 = sor.u32 %s109, %s110
    %p112 = scmp.eq.s32.totalorder %s111, 0
    %s114 = sadd.s32 %s113, 1
    %s115 = scalar_select %p112, %s113, %s114
    %p118 = pneg %p112
    %p119 = scmp.eq.s32.totalorder %s17, 1
    %p120 = por %p118, %p119
    %p121 = scmp.ne.s32.totalorder %s113, %s116
    %p122 = scmp.eq.s32.totalorder %s17, 0
    %p123 = por %p121, %p122
    %p124 = scmp.ne.s32.totalorder %s113, %s116
    %p125 = scmp.eq.s32.totalorder %s22, 1
    %p126 = por %p124, %p125
    %p127 = scmp.ne.s32.totalorder %s116, %s117
    %p128 = scmp.eq.s32.totalorder %s22, 0
    %p129 = por %p127, %p128
    %p130 = scmp.ne.s32.totalorder %s116, %s117
    %p131 = scmp.eq.s32.totalorder %s23, 1
    %p132 = por %p130, %p131
    %p134 = scmp.ne.s32.totalorder %s117, %s133
    %p135 = scmp.eq.s32.totalorder %s23, 0
    %p136 = por %p134, %p135
    %s138 = sadd.s32 %s137, 1
    %p141 = scmp.eq.s32.totalorder %s17, 1
    %p142 = scmp.ne.s32.totalorder %s137, %s139
    %p143 = scmp.eq.s32.totalorder %s17, 0
    %p144 = por %p142, %p143
    %p145 = scmp.ne.s32.totalorder %s137, %s139
    %p146 = scmp.eq.s32.totalorder %s22, 1
    %p147 = por %p145, %p146
    %p148 = scmp.ne.s32.totalorder %s139, %s140
    %p149 = scmp.eq.s32.totalorder %s22, 0
    %p150 = por %p148, %p149
    %p151 = scmp.ne.s32.totalorder %s139, %s140
    %p152 = scmp.eq.s32.totalorder %s23, 1
    %p153 = por %p151, %p152
    %p155 = scmp.ne.s32.totalorder %s140, %s154
    %p156 = scmp.eq.s32.totalorder %s23, 0
    %p157 = por %p155, %p156
    %s159 = sadd.s32 %s158, 1
    %p162 = scmp.eq.s32.totalorder %s17, 1
    %p163 = scmp.ne.s32.totalorder %s158, %s160
    %p164 = scmp.eq.s32.totalorder %s17, 0
    %p165 = por %p163, %p164
    %p166 = scmp.ne.s32.totalorder %s158, %s160
    %p167 = scmp.eq.s32.totalorder %s22, 1
    %p168 = por %p166, %p167
    %p169 = scmp.ne.s32.totalorder %s160, %s161
    %p170 = scmp.eq.s32.totalorder %s22, 0
    %p171 = por %p169, %p170
    %p172 = scmp.ne.s32.totalorder %s160, %s161
    %p173 = scmp.eq.s32.totalorder %s23, 1
    %p174 = por %p172, %p173
    %p176 = scmp.ne.s32.totalorder %s161, %s175
    %p177 = scmp.eq.s32.totalorder %s23, 0
    %p178 = por %p176, %p177
    %s180 = sadd.s32 %s179, 1
    %p183 = scmp.eq.s32.totalorder %s17, 1
    %p184 = scmp.ne.s32.totalorder %s179, %s181
    %p185 = scmp.eq.s32.totalorder %s17, 0
    %p186 = por %p184, %p185
    %p187 = scmp.ne.s32.totalorder %s179, %s181
    %p188 = scmp.eq.s32.totalorder %s22, 1
    %p189 = por %p187, %p188
    %p190 = scmp.ne.s32.totalorder %s181, %s182
    %p191 = scmp.eq.s32.totalorder %s22, 0
    %p192 = por %p190, %p191
    %p193 = scmp.ne.s32.totalorder %s181, %s182
    %p194 = scmp.eq.s32.totalorder %s23, 1
    %p195 = por %p193, %p194
    %p197 = scmp.ne.s32.totalorder %s182, %s196
    %p198 = scmp.eq.s32.totalorder %s23, 0
    %p199 = por %p197, %p198
    %s201 = sadd.s32 %s200, 1
    %p204 = scmp.eq.s32.totalorder %s17, 1
    %p205 = scmp.ne.s32.totalorder %s200, %s202
    %p206 = scmp.eq.s32.totalorder %s17, 0
    %p207 = por %p205, %p206
    %p208 = scmp.ne.s32.totalorder %s200, %s202
    %p209 = scmp.eq.s32.totalorder %s22, 1
    %p210 = por %p208, %p209
    %p211 = scmp.ne.s32.totalorder %s202, %s203
    %p212 = scmp.eq.s32.totalorder %s22, 0
    %p213 = por %p211, %p212
    %p214 = scmp.ne.s32.totalorder %s202, %s203
    %p215 = scmp.eq.s32.totalorder %s23, 1
    %p216 = por %p214, %p215
    %p218 = scmp.ne.s32.totalorder %s203, %s217
    %p219 = scmp.eq.s32.totalorder %s23, 0
    %p220 = por %p218, %p219
    %s222 = sadd.s32 %s221, 1
    %p225 = scmp.eq.s32.totalorder %s17, 1
    %p226 = scmp.ne.s32.totalorder %s221, %s223
    %p227 = scmp.eq.s32.totalorder %s17, 0
    %p228 = por %p226, %p227
    %p229 = scmp.ne.s32.totalorder %s221, %s223
    %p230 = scmp.eq.s32.totalorder %s22, 1
    %p231 = por %p229, %p230
    %p232 = scmp.ne.s32.totalorder %s223, %s224
    %p233 = scmp.eq.s32.totalorder %s22, 0
    %p234 = por %p232, %p233
    %p235 = scmp.ne.s32.totalorder %s223, %s224
    %p236 = scmp.eq.s32.totalorder %s23, 1
    %p237 = por %p235, %p236
    %p239 = scmp.ne.s32.totalorder %s224, %s238
    %p240 = scmp.eq.s32.totalorder %s23, 0
    %p241 = por %p239, %p240
    %s243 = sadd.s32 %s242, 1
    %p246 = scmp.eq.s32.totalorder %s17, 1
    %p247 = scmp.ne.s32.totalorder %s242, %s244
    %p248 = scmp.eq.s32.totalorder %s17, 0
    %p249 = por %p247, %p248
    %p250 = scmp.ne.s32.totalorder %s242, %s244
    %p251 = scmp.eq.s32.totalorder %s22, 1
    %p252 = por %p250, %p251
    %p253 = scmp.ne.s32.totalorder %s244, %s245
    %p254 = scmp.eq.s32.totalorder %s22, 0
    %p255 = por %p253, %p254
    %p256 = scmp.ne.s32.totalorder %s244, %s245
    %p257 = scmp.eq.s32.totalorder %s23, 1
    %p258 = por %p256, %p257
    %p260 = scmp.ne.s32.totalorder %s245, %s259
    %p261 = scmp.eq.s32.totalorder %s23, 0
    %p262 = por %p260, %p261
    %s264 = sadd.s32 %s263, 1
    %p267 = scmp.eq.s32.totalorder %s17, 1
    %p268 = scmp.ne.s32.totalorder %s263, %s265
    %p269 = scmp.eq.s32.totalorder %s17, 0
    %p270 = por %p268, %p269
    %p271 = scmp.ne.s32.totalorder %s263, %s265
    %p272 = scmp.eq.s32.totalorder %s22, 1
    %p273 = por %p271, %p272
    %p274 = scmp.ne.s32.totalorder %s265, %s266
    %p275 = scmp.eq.s32.totalorder %s22, 0
    %p276 = por %p274, %p275
    %p277 = scmp.ne.s32.totalorder %s265, %s266
    %p278 = scmp.eq.s32.totalorder %s23, 1
    %p279 = por %p277, %p278
    %p281 = scmp.ne.s32.totalorder %s266, %s280
    %p282 = scmp.eq.s32.totalorder %s23, 0
    %p283 = por %p281, %p282
    %s285 = sadd.s32 %s284, 1
    %p288 = scmp.eq.s32.totalorder %s17, 1
    %p289 = scmp.ne.s32.totalorder %s284, %s286
    %p290 = scmp.eq.s32.totalorder %s17, 0
    %p291 = por %p289, %p290
    %p292 = scmp.ne.s32.totalorder %s284, %s286
    %p293 = scmp.eq.s32.totalorder %s22, 1
    %p294 = por %p292, %p293
    %p295 = scmp.ne.s32.totalorder %s286, %s287
    %p296 = scmp.eq.s32.totalorder %s22, 0
    %p297 = por %p295, %p296
    %p298 = scmp.ne.s32.totalorder %s286, %s287
    %p299 = scmp.eq.s32.totalorder %s23, 1
    %p300 = por %p298, %p299
    %p302 = scmp.ne.s32.totalorder %s287, %s301
    %p303 = scmp.eq.s32.totalorder %s23, 0
    %p304 = por %p302, %p303
    %s305 = ssub.s32 %s24, %s36
    %s306 = ssub.s32 %s25, %s32
    %s307 = sor.u32 %s305, %s306
    %p308 = scmp.eq.s32.totalorder %s307, 0
    %s310 = sadd.s32 %s309, 1
    %s311 = scalar_select %p308, %s309, %s310
    %p314 = pneg %p308
    %p315 = scmp.eq.s32.totalorder %s17, 1
    %p316 = por %p314, %p315
    %p317 = scmp.ne.s32.totalorder %s309, %s312
    %p318 = scmp.eq.s32.totalorder %s17, 0
    %p319 = por %p317, %p318
    %p320 = scmp.ne.s32.totalorder %s309, %s312
    %p321 = scmp.eq.s32.totalorder %s22, 1
    %p322 = por %p320, %p321
    %p323 = scmp.ne.s32.totalorder %s312, %s313
    %p324 = scmp.eq.s32.totalorder %s22, 0
    %p325 = por %p323, %p324
    %p326 = scmp.ne.s32.totalorder %s312, %s313
    %p327 = scmp.eq.s32.totalorder %s23, 1
    %p328 = por %p326, %p327
    %p330 = scmp.ne.s32.totalorder %s313, %s329
    %p331 = scmp.eq.s32.totalorder %s23, 0
    %p332 = por %p330, %p331
    %p333 = scmp.le.s32.totalorder 1, %s17
    %p334 = scmp.lt.s32.totalorder %s17, 3
    %p335 = pnand %p333, %p334
    %p336 = pneg %p335
    // Predicated region
    $region9: #{_lambda_.1} parent=5 // pred_check
      _
    $region10: #{_lambda_.1} parent=5 // pred_check_branch
      %338 = sbr.rel (%p335) target = $region12
    $region11: #{_lambda_.1} parent=5 // pred_region
      %s339 = ssub.s32 %s17, 1
      // Predicated region
      $region13: #{_lambda_.1} parent=11 // pred_check
        %p340 = pneg %p150
      $region14: #{_lambda_.1} parent=11 // pred_check_branch
        %342 = sbr.rel (%p340) target = $region16
      $region15: #{_lambda_.1} parent=11 // pred_region
        _
      $region16: #{_lambda_.1} parent=11 // pred_fallthru
        _
      // Predicated region
      $region17: #{_lambda_.1} parent=11 // pred_check
        %p343 = pneg %p171
      $region18: #{_lambda_.1} parent=11 // pred_check_branch
        %345 = sbr.rel (%p343) target = $region20
      $region19: #{_lambda_.1} parent=11 // pred_region
        _
      $region20: #{_lambda_.1} parent=11 // pred_fallthru
        _
      // Predicated region
      $region21: #{_lambda_.1} parent=11 // pred_check
        %p346 = pneg %p192
      $region22: #{_lambda_.1} parent=11 // pred_check_branch
        %348 = sbr.rel (%p346) target = $region24
      $region23: #{_lambda_.1} parent=11 // pred_region
        _
      $region24: #{_lambda_.1} parent=11 // pred_fallthru
        _
      // Predicated region
      $region25: #{_lambda_.1} parent=11 // pred_check
        %p349 = pneg %p213
      $region26: #{_lambda_.1} parent=11 // pred_check_branch
        %351 = sbr.rel (%p349) target = $region28
      $region27: #{_lambda_.1} parent=11 // pred_region
        _
      $region28: #{_lambda_.1} parent=11 // pred_fallthru
        _
      // Predicated region
      $region29: #{_lambda_.1} parent=11 // pred_check
        %p352 = pneg %p234
      $region30: #{_lambda_.1} parent=11 // pred_check_branch
        %354 = sbr.rel (%p352) target = $region32
      $region31: #{_lambda_.1} parent=11 // pred_region
        _
      $region32: #{_lambda_.1} parent=11 // pred_fallthru
        _
      // Predicated region
      $region33: #{_lambda_.1} parent=11 // pred_check
        %p355 = pneg %p255
      $region34: #{_lambda_.1} parent=11 // pred_check_branch
        %357 = sbr.rel (%p355) target = $region36
      $region35: #{_lambda_.1} parent=11 // pred_region
        _
      $region36: #{_lambda_.1} parent=11 // pred_fallthru
        _
      // Predicated region
      $region37: #{_lambda_.1} parent=11 // pred_check
        %p358 = pneg %p276
      $region38: #{_lambda_.1} parent=11 // pred_check_branch
        %360 = sbr.rel (%p358) target = $region40
      $region39: #{_lambda_.1} parent=11 // pred_region
        _
      $region40: #{_lambda_.1} parent=11 // pred_fallthru
        _
      // Predicated region
      $region41: #{_lambda_.1} parent=11 // pred_check
        %p361 = pneg %p297
      $region42: #{_lambda_.1} parent=11 // pred_check_branch
        %363 = sbr.rel (%p361) target = $region44
      $region43: #{_lambda_.1} parent=11 // pred_region
        _
      $region44: #{_lambda_.1} parent=11 // pred_fallthru
        _
    $region12: #{_lambda_.1} parent=5 // pred_fallthru
      _
    %p364 = scmp.lt.s32.totalorder %s17, 2
    // Predicated region
    $region45: #{_lambda_.1} parent=5 // pred_check
      %p365 = pneg %p364
    $region46: #{_lambda_.1} parent=5 // pred_check_branch
      %367 = sbr.rel (%p365) target = $region48
    $region47: #{_lambda_.1} parent=5 // pred_region
      // Predicated region
      $region49: #{_lambda_.1} parent=47 // pred_check
        %p368 = pneg %p59
      $region50: #{_lambda_.1} parent=47 // pred_check_branch
        %370 = sbr.rel (%p368) target = $region52
      $region51: #{_lambda_.1} parent=47 // pred_region
        %s371 = smul.u32 %s25, 16
        %s372 = ssub.s32 %s371, 1
        %p373 = scmp.gt.s32.totalorder %s372, 0
        %s374 = scalar_select %p373, %s372, 0
        %p375 = scmp.lt.s32.totalorder %s24, 1
        %s376 = scalar_select %p375, %s24, 1
        %p377 = scmp.lt.s32.totalorder %s374, 15
        %s378 = scalar_select %p377, %s374, 15
        %s379 = smul.addr %s378, 2
        %s380 = smul.addr %s376, 32
        %s381 = sadd.s32 %s379, %s380
        %s382 = smul.addr %s381, 4
        %s383 = scalar_lea.vmem %s0, %s382
        %s384 = smul.u32 %s25, 16
        %s385 = ssub.s32 %s384, 1
        %p386 = scmp.gt.s32.totalorder %s385, 0
        %s387 = scalar_select %p386, %s385, 0
      $region52: #{_lambda_.1} parent=47 // pred_fallthru
        _
      // Predicated region
      $region53: #{_lambda_.1} parent=47 // pred_check
        %p388 = pneg %p87
      $region54: #{_lambda_.1} parent=47 // pred_check_branch
        %390 = sbr.rel (%p388) target = $region56
      $region55: #{_lambda_.1} parent=47 // pred_region
        %s391 = smul.u32 16, %s25
        %p392 = scmp.lt.s32.totalorder %s24, 1
        %s393 = scalar_select %p392, %s24, 1
        %p394 = scmp.lt.s32.totalorder %s391, 15
        %s395 = scalar_select %p394, %s391, 15
        %s396 = smul.addr %s395, 2
        %s397 = smul.addr %s393, 32
        %s398 = sadd.s32 %s396, %s397
        %s399 = smul.addr %s398, 4
        %s400 = scalar_lea.vmem %s1, %s399
        %s401 = smul.u32 16, %s25
      $region56: #{_lambda_.1} parent=47 // pred_fallthru
        _
      // Predicated region
      $region57: #{_lambda_.1} parent=47 // pred_check
        %p402 = pneg %p123
      $region58: #{_lambda_.1} parent=47 // pred_check_branch
        %404 = sbr.rel (%p402) target = $region60
      $region59: #{_lambda_.1} parent=47 // pred_region
        %s405 = sadd.s32 %s25, 1
        %s406 = smul.u32 %s405, 16
        %p407 = scmp.lt.s32.totalorder %s406, 15
        %s408 = scalar_select %p407, %s406, 15
        %p409 = scmp.lt.s32.totalorder %s24, 1
        %s410 = scalar_select %p409, %s24, 1
        %p411 = scmp.lt.s32.totalorder %s408, 15
        %s412 = scalar_select %p411, %s408, 15
        %s413 = smul.addr %s412, 2
        %s414 = smul.addr %s410, 32
        %s415 = sadd.s32 %s413, %s414
        %s416 = smul.addr %s415, 4
        %s417 = scalar_lea.vmem %s2, %s416
        %s418 = sadd.s32 %s25, 1
        %s419 = smul.u32 %s418, 16
        %p420 = scmp.lt.s32.totalorder %s419, 15
        %s421 = scalar_select %p420, %s419, 15
      $region60: #{_lambda_.1} parent=47 // pred_fallthru
        _
    $region48: #{_lambda_.1} parent=5 // pred_fallthru
      _
    %p422 = scmp.le.s32.totalorder 1, %s17
    %p423 = scmp.lt.s32.totalorder %s17, 3
    %p424 = pnand %p422, %p423
    %p425 = pneg %p424
    // Predicated region
    $region61: #{_lambda_.1} parent=5 // pred_check
      _
    $region62: #{_lambda_.1} parent=5 // pred_check_branch
      %427 = sbr.rel (%p424) target = $region64
    $region63: #{_lambda_.1} parent=5 // pred_region
      %s428 = ssub.s32 %s17, 1
      %s429 = smul.u32 %s27, 16
      %s430 = ssub.s32 %s429, 1
      %p431 = scmp.gt.s32.totalorder %s430, 0
      %s432 = scalar_select %p431, %s430, 0
      %p433 = scmp.lt.s32.totalorder %s26, 1
      %s434 = scalar_select %p433, %s26, 1
      %p435 = scmp.lt.s32.totalorder %s432, 15
      %s436 = scalar_select %p435, %s432, 15
      %s437 = smul.addr %s436, 2
      %s438 = smul.addr %s434, 32
      %s439 = sadd.s32 %s437, %s438
      %s440 = smul.addr %s439, 4
      %s441 = scalar_lea.vmem %s0, %s440
      %p442 = pneg %p65
      %p443 = pneg %p62
      %s444 = smul.u32 16, %s27
      %p445 = scmp.lt.s32.totalorder %s26, 1
      %s446 = scalar_select %p445, %s26, 1
      %p447 = scmp.lt.s32.totalorder %s444, 15
      %s448 = scalar_select %p447, %s444, 15
      %s449 = smul.addr %s448, 2
      %s450 = smul.addr %s446, 32
      %s451 = sadd.s32 %s449, %s450
      %s452 = smul.addr %s451, 4
      %s453 = scalar_lea.vmem %s1, %s452
      %p454 = pneg %p93
      %p455 = pneg %p90
      %s456 = sadd.s32 %s27, 1
      %s457 = smul.u32 %s456, 16
      %p458 = scmp.lt.s32.totalorder %s457, 15
      %s459 = scalar_select %p458, %s457, 15
      %p460 = scmp.lt.s32.totalorder %s26, 1
      %s461 = scalar_select %p460, %s26, 1
      %p462 = scmp.lt.s32.totalorder %s459, 15
      %s463 = scalar_select %p462, %s459, 15
      %s464 = smul.addr %s463, 2
      %s465 = smul.addr %s461, 32
      %s466 = sadd.s32 %s464, %s465
      %s467 = smul.addr %s466, 4
      %s468 = scalar_lea.vmem %s2, %s467
      %p469 = pneg %p129
      %p470 = pneg %p126
      %p471 = pneg %p150
      %p472 = pneg %p147
      %p473 = pneg %p171
      %p474 = pneg %p168
      %p475 = pneg %p192
      %p476 = pneg %p189
      %p477 = pneg %p213
      %p478 = pneg %p210
      %p479 = pneg %p234
      %p480 = pneg %p231
      %p481 = pneg %p255
      %p482 = pneg %p252
      %p483 = pneg %p276
      %p484 = pneg %p273
      %p485 = pneg %p297
      %p486 = pneg %p294
      %p487 = pneg %p325
      %p488 = pneg %p322
      %s489 = smul.u32 16, %s27
      %p490 = scmp.lt.s32.totalorder %s26, 1
      %s491 = scalar_select %p490, %s26, 1
      %p492 = scmp.lt.s32.totalorder %s489, 15
      %s493 = scalar_select %p492, %s489, 15
      %s494 = smul.addr %s493, 2
      %s495 = smul.addr %s491, 32
      %s496 = sadd.s32 %s494, %s495
      %s497 = smul.addr %s496, 8
      %s498 = scalar_lea.vmem %s11, %s497
      %s499 = smul.u32 %s27, 16
      %s500 = ssub.s32 %s499, 1
      %p501 = scmp.gt.s32.totalorder %s500, 0
      %s502 = scalar_select %p501, %s500, 0
      %p503 = scmp.lt.s32.totalorder %s26, 1
      %s504 = scalar_select %p503, %s26, 1
      %p505 = scmp.lt.s32.totalorder %s502, 15
      %s506 = scalar_select %p505, %s502, 15
      %s507 = smul.addr %s506, 2
      %s508 = smul.addr %s504, 32
      %s509 = sadd.s32 %s507, %s508
      %s510 = smul.addr %s509, 4
      %s511 = scalar_lea.vmem %s0, %s510
      %s512 = smul.u32 %s27, 16
      %s513 = ssub.s32 %s512, 1
      %p514 = scmp.gt.s32.totalorder %s513, 0
      %s515 = scalar_select %p514, %s513, 0
      %s516 = smul.u32 16, %s27
      %p517 = scmp.lt.s32.totalorder %s26, 1
      %s518 = scalar_select %p517, %s26, 1
      %p519 = scmp.lt.s32.totalorder %s516, 15
      %s520 = scalar_select %p519, %s516, 15
      %s521 = smul.addr %s520, 2
      %s522 = smul.addr %s518, 32
      %s523 = sadd.s32 %s521, %s522
      %s524 = smul.addr %s523, 4
      %s525 = scalar_lea.vmem %s1, %s524
      %s526 = smul.u32 16, %s27
      %s527 = sadd.s32 %s27, 1
      %s528 = smul.u32 %s527, 16
      %p529 = scmp.lt.s32.totalorder %s528, 15
      %s530 = scalar_select %p529, %s528, 15
      %p531 = scmp.lt.s32.totalorder %s26, 1
      %s532 = scalar_select %p531, %s26, 1
      %p533 = scmp.lt.s32.totalorder %s530, 15
      %s534 = scalar_select %p533, %s530, 15
      %s535 = smul.addr %s534, 2
      %s536 = smul.addr %s532, 32
      %s537 = sadd.s32 %s535, %s536
      %s538 = smul.addr %s537, 4
      %s539 = scalar_lea.vmem %s2, %s538
      %s540 = sadd.s32 %s27, 1
      %s541 = smul.u32 %s540, 16
      %p542 = scmp.lt.s32.totalorder %s541, 15
      %s543 = scalar_select %p542, %s541, 15
      %s544 = smul.u32 16, %s27
      %p545 = scmp.lt.s32.totalorder %s26, 1
      %s546 = scalar_select %p545, %s26, 1
      %p547 = scmp.lt.s32.totalorder %s544, 15
      %s548 = scalar_select %p547, %s544, 15
      %s549 = smul.addr %s548, 2
      %s550 = smul.addr %s546, 32
      %s551 = sadd.s32 %s549, %s550
      %s552 = smul.addr %s551, 8
      %s553 = scalar_lea.vmem %s11, %s552
      %s554 = smul.u32 16, %s27
      %v556 = vld [vmem:[%s3] sm:$0xf]
      %v557 = vld [vmem:[%s3 + $0x4] sm:$0xf]
      %v558 = vld [vmem:[%s3 + $0x8] sm:$0xf]
      %v559 = vld [vmem:[%s3 + $0xc] sm:$0xf]
      %v560 = vld [vmem:[%s3 + $0x10] sm:$0xf]
      %v561 = vld [vmem:[%s3 + $0x14] sm:$0xf]
      %v562 = vld [vmem:[%s3 + $0x18] sm:$0xf]
      %v563 = vld [vmem:[%s3 + $0x1c] sm:$0xf]
      %v564 = vld [vmem:[%s4] sm:$0x1]
      %565 = vst [vmem:[#allocation2] sm:$0x1] 0.0
      %566 = vst [vmem:[#allocation2 + $0x18] sm:$0x1] 0.0
      %567 = vst [vmem:[#allocation2 + $0x30] sm:$0x1] 0.0
      %568 = vst [vmem:[#allocation2 + $0x48] sm:$0x1] 0.0
      %569 = vst [vmem:[#allocation2 + $0x60] sm:$0x1] 0.0
      %570 = vst [vmem:[#allocation2 + $0x78] sm:$0x1] 0.0
      %571 = vst [vmem:[#allocation2 + $0x90] sm:$0x1] 0.0
      %572 = vst [vmem:[#allocation2 + $0xa8] sm:$0x1] 0.0
      %573 = vst [vmem:[#allocation2 + $0xc0] sm:$0x1] 0.0
      %574 = vst [vmem:[#allocation2 + $0xd8] sm:$0x1] 0.0
      %575 = vst [vmem:[#allocation2 + $0xf0] sm:$0x1] 0.0
      %576 = vst [vmem:[#allocation2 + $0x108] sm:$0x1] 0.0
      %577 = vst [vmem:[#allocation2 + $0x120] sm:$0x1] 0.0
      %578 = vst [vmem:[#allocation2 + $0x138] sm:$0x1] 0.0
      %579 = vst [vmem:[#allocation2 + $0x150] sm:$0x1] 0.0
      %580 = vst [vmem:[#allocation2 + $0x168] sm:$0x1] 0.0
      %581 = vst [vmem:[#allocation2 + $0x180] sm:$0x1] 0.0
      %582 = vst [vmem:[#allocation2 + $0x198] sm:$0x1] 0.0
      %583 = vst [vmem:[#allocation2 + $0x11] sm:$0x1] 0.0
      %584 = vst [vmem:[#allocation2 + $0x29] sm:$0x1] 0.0
      %585 = vst [vmem:[#allocation2 + $0x41] sm:$0x1] 0.0
      %586 = vst [vmem:[#allocation2 + $0x59] sm:$0x1] 0.0
      %587 = vst [vmem:[#allocation2 + $0x71] sm:$0x1] 0.0
      %588 = vst [vmem:[#allocation2 + $0x89] sm:$0x1] 0.0
      %589 = vst [vmem:[#allocation2 + $0xa1] sm:$0x1] 0.0
      %590 = vst [vmem:[#allocation2 + $0xb9] sm:$0x1] 0.0
      %591 = vst [vmem:[#allocation2 + $0xd1] sm:$0x1] 0.0
      %592 = vst [vmem:[#allocation2 + $0xe9] sm:$0x1] 0.0
      %593 = vst [vmem:[#allocation2 + $0x101] sm:$0x1] 0.0
      %594 = vst [vmem:[#allocation2 + $0x119] sm:$0x1] 0.0
      %595 = vst [vmem:[#allocation2 + $0x131] sm:$0x1] 0.0
      %596 = vst [vmem:[#allocation2 + $0x149] sm:$0x1] 0.0
      %597 = vst [vmem:[#allocation2 + $0x161] sm:$0x1] 0.0
      %598 = vst [vmem:[#allocation2 + $0x179] sm:$0x1] 0.0
      %599 = vst [vmem:[#allocation2 + $0x191] sm:$0x1] 0.0
      %600 = vst [vmem:[#allocation2 + $0x1a9] sm:$0x1] 0.0
      %v601 = vld [vmem:[%s525] sm:$0xf]
      %v602 = vld [vmem:[%s525 + $0x4] sm:$0xf]
      %v603 = vld [vmem:[%s525 + $0x8] sm:$0xf]
      %v604 = vld [vmem:[%s525 + $0xc] sm:$0xf]
      %v605 = vld [vmem:[%s525 + $0x10] sm:$0xf]
      %v606 = vld [vmem:[%s525 + $0x14] sm:$0xf]
      %v607 = vld [vmem:[%s525 + $0x18] sm:$0xf]
      %v608 = vld [vmem:[%s525 + $0x1c] sm:$0xf]
      %v609 = vld [vmem:[%s525 + $0x20] sm:$0xf]
      %v610 = vld [vmem:[%s525 + $0x24] sm:$0xf]
      %v611 = vld [vmem:[%s525 + $0x28] sm:$0xf]
      %v612 = vld [vmem:[%s525 + $0x2c] sm:$0xf]
      %v613 = vld [vmem:[%s525 + $0x30] sm:$0xf]
      %v614 = vld [vmem:[%s525 + $0x34] sm:$0xf]
      %v615 = vld [vmem:[%s525 + $0x38] sm:$0xf]
      %v616 = vld [vmem:[%s525 + $0x3c] sm:$0xf]
      %v617 = vld [vmem:[%s525 + $0x40] sm:$0xf]
      %v618 = vld [vmem:[%s525 + $0x44] sm:$0xf]
      %v619 = vld [vmem:[%s525 + $0x48] sm:$0xf]
      %v620 = vld [vmem:[%s525 + $0x4c] sm:$0xf]
      %v621 = vld [vmem:[%s525 + $0x50] sm:$0xf]
      %v622 = vld [vmem:[%s525 + $0x54] sm:$0xf]
      %v623 = vld [vmem:[%s525 + $0x58] sm:$0xf]
      %v624 = vld [vmem:[%s525 + $0x5c] sm:$0xf]
      %v625 = vld [vmem:[%s525 + $0x60] sm:$0xf]
      %v626 = vld [vmem:[%s525 + $0x64] sm:$0xf]
      %v627 = vld [vmem:[%s525 + $0x68] sm:$0xf]
      %v628 = vld [vmem:[%s525 + $0x6c] sm:$0xf]
      %v629 = vld [vmem:[%s525 + $0x70] sm:$0xf]
      %v630 = vld [vmem:[%s525 + $0x74] sm:$0xf]
      %v631 = vld [vmem:[%s525 + $0x78] sm:$0xf]
      %v632 = vld [vmem:[%s525 + $0x7c] sm:$0xf]
      %v634 = vlaneseq
      %v635 = vshrl.u32 %v634, 7
      %v636 = vsub.s32 0, %v635
      %v637 = vrot.slane %v564, %v636
      %v671 = vunpack.c.l.b16 %v601
      %v672 = vunpack.c.l.b16 %v602
      %v673 = vunpack.c.l.b16 %v603
      %v674 = vunpack.c.l.b16 %v604
      %v675 = vunpack.c.l.b16 %v605
      %v676 = vunpack.c.l.b16 %v606
      %v677 = vunpack.c.l.b16 %v607
      %v678 = vunpack.c.l.b16 %v608
      %v679 = vunpack.c.l.b16 %v609
      %v680 = vunpack.c.l.b16 %v610
      %v681 = vunpack.c.l.b16 %v611
      %v682 = vunpack.c.l.b16 %v612
      %v683 = vunpack.c.l.b16 %v613
      %v684 = vunpack.c.l.b16 %v614
      %v685 = vunpack.c.l.b16 %v615
      %v686 = vunpack.c.l.b16 %v616
      %v687 = vunpack.c.l.b16 %v617
      %v688 = vunpack.c.l.b16 %v618
      %v689 = vunpack.c.l.b16 %v619
      %v690 = vunpack.c.l.b16 %v620
      %v691 = vunpack.c.l.b16 %v621
      %v692 = vunpack.c.l.b16 %v622
      %v693 = vunpack.c.l.b16 %v623
      %v694 = vunpack.c.l.b16 %v624
      %v695 = vunpack.c.l.b16 %v625
      %v696 = vunpack.c.l.b16 %v626
      %v697 = vunpack.c.l.b16 %v627
      %v698 = vunpack.c.l.b16 %v628
      %v699 = vunpack.c.l.b16 %v629
      %v700 = vunpack.c.l.b16 %v630
      %v701 = vunpack.c.l.b16 %v631
      %v702 = vunpack.c.l.b16 %v632
      %v703 = vpack.c.b16 %v672, %v671
      %v704 = vpack.c.b16 %v674, %v673
      %v705 = vpack.c.b16 %v676, %v675
      %v706 = vpack.c.b16 %v678, %v677
      %v707 = vpack.c.b16 %v680, %v679
      %v708 = vpack.c.b16 %v682, %v681
      %v709 = vpack.c.b16 %v684, %v683
      %v710 = vpack.c.b16 %v686, %v685
      %v711 = vpack.c.b16 %v688, %v687
      %v712 = vpack.c.b16 %v690, %v689
      %v713 = vpack.c.b16 %v692, %v691
      %v714 = vpack.c.b16 %v694, %v693
      %v715 = vpack.c.b16 %v696, %v695
      %v716 = vpack.c.b16 %v698, %v697
      %v717 = vpack.c.b16 %v700, %v699
      %v718 = vpack.c.b16 %v702, %v701
      %v727 = vunpack.c.l.b16 %v556
      %v728 = vunpack.c.l.b16 %v557
      %v729 = vunpack.c.l.b16 %v558
      %v730 = vunpack.c.l.b16 %v559
      %v731 = vunpack.c.l.b16 %v560
      %v732 = vunpack.c.l.b16 %v561
      %v733 = vunpack.c.l.b16 %v562
      %v734 = vunpack.c.l.b16 %v563
      %v735 = vpack.c.b16 %v728, %v727
      %v736 = vpack.c.b16 %v730, %v729
      %v737 = vpack.c.b16 %v732, %v731
      %v738 = vpack.c.b16 %v734, %v733
      %vm743 = vcmask 523264
      %v745 = vsel %vm743, %v703, 0
      %v748 = vsel %vm743, %v704, 0
      %v751 = vsel %vm743, %v705, 0
      %v754 = vsel %vm743, %v706, 0
      %v757 = vsel %vm743, %v707, 0
      %v760 = vsel %vm743, %v708, 0
      %v763 = vsel %vm743, %v709, 0
      %v766 = vsel %vm743, %v710, 0
      %v769 = vsel %vm743, %v711, 0
      %v772 = vsel %vm743, %v712, 0
      %v775 = vsel %vm743, %v713, 0
      %v778 = vsel %vm743, %v714, 0
      %v781 = vsel %vm743, %v715, 0
      %v784 = vsel %vm743, %v716, 0
      %v787 = vsel %vm743, %v717, 0
      %v790 = vsel %vm743, %v718, 0
      %792 = vmatprep.subr.bf16.mxu0 0
      %793 = vmatpush1.bf16.msra.mxu0 0
      %794 = vmatprep.subr.bf16.mxu0 0
      %795 = vmatpush1.bf16.msra.mxu0 0
      %796 = vmatprep.subr.bf16.mxu0 0
      %797 = vmatpush1.bf16.msra.mxu0 0
      %798 = vmatprep.subr.bf16.mxu0 0
      %799 = vmatpush1.bf16.msra.mxu0 0
      %800 = vmatprep.subr.bf16.mxu0 0
      %801 = vmatpush1.bf16.msra.mxu0 %v738
      %802 = vmatprep.subr.bf16.mxu0 0
      %803 = vmatpush1.bf16.msra.mxu0 %v737
      %804 = vmatprep.subr.bf16.mxu0 0
      %805 = vmatpush1.bf16.msra.mxu0 %v736
      %806 = vmatprep.subr.bf16.mxu0 0
      %807 = vmatpush1.bf16.msra.mxu0 %v735
      %808 = vmatprep.subr.bf16.mxu0 0
      %809 = vmatpush2.bf16.msra.mxu0 0
      %810 = vmatprep.subr.bf16.mxu0 0
      %811 = vmatpush2.bf16.msra.mxu0 0
      %812 = vmatprep.subr.bf16.mxu0 0
      %813 = vmatpush2.bf16.msra.mxu0 0
      %814 = vmatprep.subr.bf16.mxu0 0
      %815 = vmatpush2.bf16.msra.mxu0 0
      %816 = vmatprep.subr.bf16.mxu0 0
      %817 = vmatpush2.bf16.msra.mxu0 0
      %818 = vmatprep.subr.bf16.mxu0 0
      %819 = vmatpush2.bf16.msra.mxu0 0
      %820 = vmatprep.subr.bf16.mxu0 0
      %821 = vmatpush2.bf16.msra.mxu0 0
      %822 = vmatprep.subr.bf16.mxu0 0
      %823 = vmatpush2.bf16.msra.mxu0 0
      %824 = vmatprep.mubr.bf16.mxu0 0
      %825 = vmatmul.mubr.bf16.gmra.mxu0 %v745
      %v826 = vpop.f32.mrf.mxu0
      %v827 = vadd.f32 %v637, %v826
      %v828 = vpop.f32.mrf.mxu0
      %v829 = vpop.f32.mrf.mxu0
      %v830 = vadd.f32 %v637, %v829
      %v831 = vpop.f32.mrf.mxu0
      %832 = vmatprep.mubr.bf16.mxu0 0
      %833 = vmatmul.mubr.bf16.gmra.mxu0 %v748
      %v834 = vpop.f32.mrf.mxu0
      %v835 = vadd.f32 %v637, %v834
      %v836 = vpop.f32.mrf.mxu0
      %v837 = vpop.f32.mrf.mxu0
      %v838 = vadd.f32 %v637, %v837
      %v839 = vpop.f32.mrf.mxu0
      %840 = vmatprep.mubr.bf16.mxu0 0
      %841 = vmatmul.mubr.bf16.gmra.mxu0 %v751
      %v842 = vpop.f32.mrf.mxu0
      %v843 = vadd.f32 %v637, %v842
      %v844 = vpop.f32.mrf.mxu0
      %v845 = vpop.f32.mrf.mxu0
      %v846 = vadd.f32 %v637, %v845
      %v847 = vpop.f32.mrf.mxu0
      %848 = vmatprep.mubr.bf16.mxu0 0
      %849 = vmatmul.mubr.bf16.gmra.mxu0 %v754
      %v850 = vpop.f32.mrf.mxu0
      %v851 = vadd.f32 %v637, %v850
      %v852 = vpop.f32.mrf.mxu0
      %v853 = vpop.f32.mrf.mxu0
      %v854 = vadd.f32 %v637, %v853
      %v855 = vpop.f32.mrf.mxu0
      %856 = vmatprep.mubr.bf16.mxu0 0
      %857 = vmatmul.mubr.bf16.gmra.mxu0 %v757
      %v858 = vpop.f32.mrf.mxu0
      %v859 = vadd.f32 %v637, %v858
      %v860 = vpop.f32.mrf.mxu0
      %v861 = vpop.f32.mrf.mxu0
      %v862 = vadd.f32 %v637, %v861
      %v863 = vpop.f32.mrf.mxu0
      %864 = vmatprep.mubr.bf16.mxu0 0
      %865 = vmatmul.mubr.bf16.gmra.mxu0 %v760
      %v866 = vpop.f32.mrf.mxu0
      %v867 = vadd.f32 %v637, %v866
      %v868 = vpop.f32.mrf.mxu0
      %v869 = vpop.f32.mrf.mxu0
      %v870 = vadd.f32 %v637, %v869
      %v871 = vpop.f32.mrf.mxu0
      %872 = vmatprep.mubr.bf16.mxu0 0
      %873 = vmatmul.mubr.bf16.gmra.mxu0 %v763
      %v874 = vpop.f32.mrf.mxu0
      %v875 = vadd.f32 %v637, %v874
      %v876 = vpop.f32.mrf.mxu0
      %v877 = vpop.f32.mrf.mxu0
      %v878 = vadd.f32 %v637, %v877
      %v879 = vpop.f32.mrf.mxu0
      %880 = vmatprep.mubr.bf16.mxu0 0
      %881 = vmatmul.mubr.bf16.gmra.mxu0 %v766
      %v882 = vpop.f32.mrf.mxu0
      %v883 = vadd.f32 %v637, %v882
      %v884 = vpop.f32.mrf.mxu0
      %v885 = vpop.f32.mrf.mxu0
      %v886 = vadd.f32 %v637, %v885
      %v887 = vpop.f32.mrf.mxu0
      %888 = vmatprep.mubr.bf16.mxu0 0
      %889 = vmatmul.mubr.bf16.gmra.mxu0 %v769
      %v890 = vpop.f32.mrf.mxu0
      %v891 = vadd.f32 %v637, %v890
      %v892 = vpop.f32.mrf.mxu0
      %v893 = vpop.f32.mrf.mxu0
      %v894 = vadd.f32 %v637, %v893
      %v895 = vpop.f32.mrf.mxu0
      %896 = vmatprep.mubr.bf16.mxu0 0
      %897 = vmatmul.mubr.bf16.gmra.mxu0 %v772
      %v898 = vpop.f32.mrf.mxu0
      %v899 = vadd.f32 %v637, %v898
      %v900 = vpop.f32.mrf.mxu0
      %v901 = vpop.f32.mrf.mxu0
      %v902 = vadd.f32 %v637, %v901
      %v903 = vpop.f32.mrf.mxu0
      %904 = vmatprep.mubr.bf16.mxu0 0
      %905 = vmatmul.mubr.bf16.gmra.mxu0 %v775
      %v906 = vpop.f32.mrf.mxu0
      %v907 = vadd.f32 %v637, %v906
      %v908 = vpop.f32.mrf.mxu0
      %v909 = vpop.f32.mrf.mxu0
      %v910 = vadd.f32 %v637, %v909
      %v911 = vpop.f32.mrf.mxu0
      %912 = vmatprep.mubr.bf16.mxu0 0
      %913 = vmatmul.mubr.bf16.gmra.mxu0 %v778
      %v914 = vpop.f32.mrf.mxu0
      %v915 = vadd.f32 %v637, %v914
      %v916 = vpop.f32.mrf.mxu0
      %v917 = vpop.f32.mrf.mxu0
      %v918 = vadd.f32 %v637, %v917
      %v919 = vpop.f32.mrf.mxu0
      %920 = vmatprep.mubr.bf16.mxu0 0
      %921 = vmatmul.mubr.bf16.gmra.mxu0 %v781
      %v922 = vpop.f32.mrf.mxu0
      %v923 = vadd.f32 %v637, %v922
      %v924 = vpop.f32.mrf.mxu0
      %v925 = vpop.f32.mrf.mxu0
      %v926 = vadd.f32 %v637, %v925
      %v927 = vpop.f32.mrf.mxu0
      %928 = vmatprep.mubr.bf16.mxu0 0
      %929 = vmatmul.mubr.bf16.gmra.mxu0 %v784
      %v930 = vpop.f32.mrf.mxu0
      %v931 = vadd.f32 %v637, %v930
      %v932 = vpop.f32.mrf.mxu0
      %v933 = vpop.f32.mrf.mxu0
      %v934 = vadd.f32 %v637, %v933
      %v935 = vpop.f32.mrf.mxu0
      %936 = vmatprep.mubr.bf16.mxu0 0
      %937 = vmatmul.mubr.bf16.gmra.mxu0 %v787
      %v938 = vpop.f32.mrf.mxu0
      %v939 = vadd.f32 %v637, %v938
      %v940 = vpop.f32.mrf.mxu0
      %v941 = vpop.f32.mrf.mxu0
      %v942 = vadd.f32 %v637, %v941
      %v943 = vpop.f32.mrf.mxu0
      %944 = vmatprep.mubr.bf16.mxu0 0
      %945 = vmatmul.mubr.bf16.gmra.mxu0 %v790
      %v946 = vpop.f32.mrf.mxu0
      %v947 = vadd.f32 %v637, %v946
      %v948 = vpop.f32.mrf.mxu0
      %v949 = vpop.f32.mrf.mxu0
      %v950 = vadd.f32 %v637, %v949
      %v951 = vpop.f32.mrf.mxu0
      %952 = vdwg.mxu0
      %v953 = vmax.f32 %v827, 0.0
      %v954 = vmax.f32 %v830, 0.0
      %v955 = vmax.f32 %v835, 0.0
      %v956 = vmax.f32 %v838, 0.0
      %v957 = vmax.f32 %v843, 0.0
      %v958 = vmax.f32 %v846, 0.0
      %v959 = vmax.f32 %v851, 0.0
      %v960 = vmax.f32 %v854, 0.0
      %v961 = vmax.f32 %v859, 0.0
      %v962 = vmax.f32 %v862, 0.0
      %v963 = vmax.f32 %v867, 0.0
      %v964 = vmax.f32 %v870, 0.0
      %v965 = vmax.f32 %v875, 0.0
      %v966 = vmax.f32 %v878, 0.0
      %v967 = vmax.f32 %v883, 0.0
      %v968 = vmax.f32 %v886, 0.0
      %v969 = vmax.f32 %v891, 0.0
      %v970 = vmax.f32 %v894, 0.0
      %v971 = vmax.f32 %v899, 0.0
      %v972 = vmax.f32 %v902, 0.0
      %v973 = vmax.f32 %v907, 0.0
      %v974 = vmax.f32 %v910, 0.0
      %v975 = vmax.f32 %v915, 0.0
      %v976 = vmax.f32 %v918, 0.0
      %v977 = vmax.f32 %v923, 0.0
      %v978 = vmax.f32 %v926, 0.0
      %v979 = vmax.f32 %v931, 0.0
      %v980 = vmax.f32 %v934, 0.0
      %v981 = vmax.f32 %v939, 0.0
      %v982 = vmax.f32 %v942, 0.0
      %v983 = vmax.f32 %v947, 0.0
      %v984 = vmax.f32 %v950, 0.0
      %s985 = scalar_lea.vmem [#allocation2], 24
      %986 = vst [vmem:[%s985 + $0x1] sm:$0xff] %v953
      %987 = vst [vmem:[%s985 + $0x9] sm:$0xff] %v954
      %988 = vst [vmem:[%s985 + $0x19] sm:$0xff] %v955
      %989 = vst [vmem:[%s985 + $0x21] sm:$0xff] %v956
      %990 = vst [vmem:[%s985 + $0x31] sm:$0xff] %v957
      %991 = vst [vmem:[%s985 + $0x39] sm:$0xff] %v958
      %992 = vst [vmem:[%s985 + $0x49] sm:$0xff] %v959
      %993 = vst [vmem:[%s985 + $0x51] sm:$0xff] %v960
      %994 = vst [vmem:[%s985 + $0x61] sm:$0xff] %v961
      %995 = vst [vmem:[%s985 + $0x69] sm:$0xff] %v962
      %996 = vst [vmem:[%s985 + $0x79] sm:$0xff] %v963
      %997 = vst [vmem:[%s985 + $0x81] sm:$0xff] %v964
      %998 = vst [vmem:[%s985 + $0x91] sm:$0xff] %v965
      %999 = vst [vmem:[%s985 + $0x99] sm:$0xff] %v966
      %1000 = vst [vmem:[%s985 + $0xa9] sm:$0xff] %v967
      %1001 = vst [vmem:[%s985 + $0xb1] sm:$0xff] %v968
      %1002 = vst [vmem:[%s985 + $0xc1] sm:$0xff] %v969
      %1003 = vst [vmem:[%s985 + $0xc9] sm:$0xff] %v970
      %1004 = vst [vmem:[%s985 + $0xd9] sm:$0xff] %v971
      %1005 = vst [vmem:[%s985 + $0xe1] sm:$0xff] %v972
      %1006 = vst [vmem:[%s985 + $0xf1] sm:$0xff] %v973
      %1007 = vst [vmem:[%s985 + $0xf9] sm:$0xff] %v974
      %1008 = vst [vmem:[%s985 + $0x109] sm:$0xff] %v975
      %1009 = vst [vmem:[%s985 + $0x111] sm:$0xff] %v976
      %1010 = vst [vmem:[%s985 + $0x121] sm:$0xff] %v977
      %1011 = vst [vmem:[%s985 + $0x129] sm:$0xff] %v978
      %1012 = vst [vmem:[%s985 + $0x139] sm:$0xff] %v979
      %1013 = vst [vmem:[%s985 + $0x141] sm:$0xff] %v980
      %1014 = vst [vmem:[%s985 + $0x151] sm:$0xff] %v981
      %1015 = vst [vmem:[%s985 + $0x159] sm:$0xff] %v982
      %1016 = vst [vmem:[%s985 + $0x169] sm:$0xff] %v983
      %1017 = vst [vmem:[%s985 + $0x171] sm:$0xff] %v984
      %p1018 = scmp.eq.s32.totalorder %s27, 0
      // Predicated region
      $region65: #{_lambda_.1} parent=63 // pred_check
        %p1019 = pneg %p1018
      $region66: #{_lambda_.1} parent=63 // pred_check_branch
        %1021 = sbr.rel (%p1019) target = $region68
      $region67: #{_lambda_.1} parent=63 // pred_region
        %1022 = vst [vmem:[#allocation2 + $0x1] sm:$0xff] 0.0
        %1023 = vst [vmem:[#allocation2 + $0x9] sm:$0xff] 0.0
      $region68: #{_lambda_.1} parent=63 // pred_fallthru
        _
      %p1024 = scmp.gt.s32.totalorder %s27, 0
      // Predicated region
      $region69: #{_lambda_.1} parent=63 // pred_check
        %p1025 = pneg %p1024
      $region70: #{_lambda_.1} parent=63 // pred_check_branch
        %1027 = sbr.rel (%p1025) target = $region72
      $region71: #{_lambda_.1} parent=63 // pred_region
        %v1028 = vld [vmem:[%s511] sm:$0xf]
        %v1029 = vld [vmem:[%s511 + $0x4] sm:$0xf]
        %v1032 = vunpack.c.l.b16 %v1028
        %v1033 = vunpack.c.l.b16 %v1029
        %v1034 = vpack.c.b16 %v1033, %v1032
        %v1036 = vsel %vm743, %v1034, 0
        %1038 = vmatprep.subr.bf16.mxu0 0
        %1039 = vmatpush1.bf16.msra.mxu0 0
        %1040 = vmatprep.subr.bf16.mxu0 0
        %1041 = vmatpush1.bf16.msra.mxu0 0
        %1042 = vmatprep.subr.bf16.mxu0 0
        %1043 = vmatpush1.bf16.msra.mxu0 0
        %1044 = vmatprep.subr.bf16.mxu0 0
        %1045 = vmatpush1.bf16.msra.mxu0 0
        %1046 = vmatprep.subr.bf16.mxu0 0
        %1047 = vmatpush1.bf16.msra.mxu0 %v738
        %1048 = vmatprep.subr.bf16.mxu0 0
        %1049 = vmatpush1.bf16.msra.mxu0 %v737
        %1050 = vmatprep.subr.bf16.mxu0 0
        %1051 = vmatpush1.bf16.msra.mxu0 %v736
        %1052 = vmatprep.subr.bf16.mxu0 0
        %1053 = vmatpush1.bf16.msra.mxu0 %v735
        %1054 = vmatprep.subr.bf16.mxu0 0
        %1055 = vmatpush2.bf16.msra.mxu0 0
        %1056 = vmatprep.subr.bf16.mxu0 0
        %1057 = vmatpush2.bf16.msra.mxu0 0
        %1058 = vmatprep.subr.bf16.mxu0 0
        %1059 = vmatpush2.bf16.msra.mxu0 0
        %1060 = vmatprep.subr.bf16.mxu0 0
        %1061 = vmatpush2.bf16.msra.mxu0 0
        %1062 = vmatprep.subr.bf16.mxu0 0
        %1063 = vmatpush2.bf16.msra.mxu0 0
        %1064 = vmatprep.subr.bf16.mxu0 0
        %1065 = vmatpush2.bf16.msra.mxu0 0
        %1066 = vmatprep.subr.bf16.mxu0 0
        %1067 = vmatpush2.bf16.msra.mxu0 0
        %1068 = vmatprep.subr.bf16.mxu0 0
        %1069 = vmatpush2.bf16.msra.mxu0 0
        %1070 = vmatprep.mubr.bf16.mxu0 0
        %1071 = vmatmul.mubr.bf16.gmra.mxu0 %v1036
        %v1072 = vpop.f32.mrf.mxu0
        %v1073 = vadd.f32 %v637, %v1072
        %v1074 = vpop.f32.mrf.mxu0
        %v1075 = vpop.f32.mrf.mxu0
        %v1076 = vadd.f32 %v637, %v1075
        %v1077 = vpop.f32.mrf.mxu0
        %1078 = vdwg.mxu0
        %v1079 = vmax.f32 %v1073, 0.0
        %v1080 = vmax.f32 %v1076, 0.0
        %1081 = vst [vmem:[#allocation2 + $0x1] sm:$0xff] %v1079
        %1082 = vst [vmem:[#allocation2 + $0x9] sm:$0xff] %v1080
      $region72: #{_lambda_.1} parent=63 // pred_fallthru
        _
      // Predicated region
      $region73: #{_lambda_.1} parent=63 // pred_check
        %p1083 = pneg %p1018
      $region74: #{_lambda_.1} parent=63 // pred_check_branch
        %1085 = sbr.rel (%p1083) target = $region76
      $region75: #{_lambda_.1} parent=63 // pred_region
        %s1086 = scalar_lea.vmem [#allocation2], 408
        %1087 = vst [vmem:[%s1086 + $0x1] sm:$0xff] 0.0
        %1088 = vst [vmem:[%s1086 + $0x9] sm:$0xff] 0.0
      $region76: #{_lambda_.1} parent=63 // pred_fallthru
        _
      %p1089 = scmp.lt.s32.totalorder %s27, 0
      // Predicated region
      $region77: #{_lambda_.1} parent=63 // pred_check
        %p1090 = pneg %p1089
      $region78: #{_lambda_.1} parent=63 // pred_check_branch
        %1092 = sbr.rel (%p1090) target = $region80
      $region79: #{_lambda_.1} parent=63 // pred_region
        %v1093 = vld [vmem:[%s539] sm:$0xf]
        %v1094 = vld [vmem:[%s539 + $0x4] sm:$0xf]
        %v1097 = vunpack.c.l.b16 %v1093
        %v1098 = vunpack.c.l.b16 %v1094
        %v1099 = vpack.c.b16 %v1098, %v1097
        %v1101 = vsel %vm743, %v1099, 0
        %1103 = vmatprep.subr.bf16.mxu0 0
        %1104 = vmatpush1.bf16.msra.mxu0 0
        %1105 = vmatprep.subr.bf16.mxu0 0
        %1106 = vmatpush1.bf16.msra.mxu0 0
        %1107 = vmatprep.subr.bf16.mxu0 0
        %1108 = vmatpush1.bf16.msra.mxu0 0
        %1109 = vmatprep.subr.bf16.mxu0 0
        %1110 = vmatpush1.bf16.msra.mxu0 0
        %1111 = vmatprep.subr.bf16.mxu0 0
        %1112 = vmatpush1.bf16.msra.mxu0 %v738
        %1113 = vmatprep.subr.bf16.mxu0 0
        %1114 = vmatpush1.bf16.msra.mxu0 %v737
        %1115 = vmatprep.subr.bf16.mxu0 0
        %1116 = vmatpush1.bf16.msra.mxu0 %v736
        %1117 = vmatprep.subr.bf16.mxu0 0
        %1118 = vmatpush1.bf16.msra.mxu0 %v735
        %1119 = vmatprep.subr.bf16.mxu0 0
        %1120 = vmatpush2.bf16.msra.mxu0 0
        %1121 = vmatprep.subr.bf16.mxu0 0
        %1122 = vmatpush2.bf16.msra.mxu0 0
        %1123 = vmatprep.subr.bf16.mxu0 0
        %1124 = vmatpush2.bf16.msra.mxu0 0
        %1125 = vmatprep.subr.bf16.mxu0 0
        %1126 = vmatpush2.bf16.msra.mxu0 0
        %1127 = vmatprep.subr.bf16.mxu0 0
        %1128 = vmatpush2.bf16.msra.mxu0 0
        %1129 = vmatprep.subr.bf16.mxu0 0
        %1130 = vmatpush2.bf16.msra.mxu0 0
        %1131 = vmatprep.subr.bf16.mxu0 0
        %1132 = vmatpush2.bf16.msra.mxu0 0
        %1133 = vmatprep.subr.bf16.mxu0 0
        %1134 = vmatpush2.bf16.msra.mxu0 0
        %1135 = vmatprep.mubr.bf16.mxu0 0
        %1136 = vmatmul.mubr.bf16.gmra.mxu0 %v1101
        %v1137 = vpop.f32.mrf.mxu0
        %v1138 = vadd.f32 %v637, %v1137
        %v1139 = vpop.f32.mrf.mxu0
        %v1140 = vpop.f32.mrf.mxu0
        %v1141 = vadd.f32 %v637, %v1140
        %v1142 = vpop.f32.mrf.mxu0
        %1143 = vdwg.mxu0
        %v1144 = vmax.f32 %v1138, 0.0
        %v1145 = vmax.f32 %v1141, 0.0
        %s1146 = scalar_lea.vmem [#allocation2], 408
        %1147 = vst [vmem:[%s1146 + $0x1] sm:$0xff] %v1144
        %1148 = vst [vmem:[%s1146 + $0x9] sm:$0xff] %v1145
      $region80: #{_lambda_.1} parent=63 // pred_fallthru
        _
      %v1149 = vld [vmem:[%s5] sm:$0xff]
      %v1150 = vld [vmem:[%s5 + $0x8] sm:$0x1]
      %v1151 = vld [vmem:[#allocation2] sm:$0xff]
      %v1152 = vld [vmem:[#allocation2 + $0x8] sm:$0xff]
      %v1153 = vld [vmem:[#allocation2 + $0x18] sm:$0xff]
      %v1154 = vld [vmem:[#allocation2 + $0x20] sm:$0xff]
      %v1155 = vld [vmem:[#allocation2 + $0x30] sm:$0xff]
      %v1156 = vld [vmem:[#allocation2 + $0x38] sm:$0xff]
      %v1157 = vld [vmem:[#allocation2 + $0x48] sm:$0xff]
      %v1158 = vld [vmem:[#allocation2 + $0x50] sm:$0xff]
      %v1159 = vld [vmem:[#allocation2 + $0x60] sm:$0xff]
      %v1160 = vld [vmem:[#allocation2 + $0x68] sm:$0xff]
      %v1161 = vld [vmem:[#allocation2 + $0x78] sm:$0xff]
      %v1162 = vld [vmem:[#allocation2 + $0x80] sm:$0xff]
      %v1163 = vld [vmem:[#allocation2 + $0x90] sm:$0xff]
      %v1164 = vld [vmem:[#allocation2 + $0x98] sm:$0xff]
      %v1165 = vld [vmem:[#allocation2 + $0xa8] sm:$0xff]
      %v1166 = vld [vmem:[#allocation2 + $0xb0] sm:$0xff]
      %v1167 = vld [vmem:[#allocation2 + $0xc0] sm:$0xff]
      %v1168 = vld [vmem:[#allocation2 + $0xc8] sm:$0xff]
      %v1169 = vld [vmem:[#allocation2 + $0xd8] sm:$0xff]
      %v1170 = vld [vmem:[#allocation2 + $0xe0] sm:$0xff]
      %v1171 = vld [vmem:[#allocation2 + $0xf0] sm:$0xff]
      %v1172 = vld [vmem:[#allocation2 + $0xf8] sm:$0xff]
      %v1173 = vld [vmem:[#allocation2 + $0x108] sm:$0xff]
      %v1174 = vld [vmem:[#allocation2 + $0x110] sm:$0xff]
      %v1175 = vld [vmem:[#allocation2 + $0x120] sm:$0xff]
      %v1176 = vld [vmem:[#allocation2 + $0x128] sm:$0xff]
      %v1177 = vld [vmem:[#allocation2 + $0x138] sm:$0xff]
      %v1178 = vld [vmem:[#allocation2 + $0x140] sm:$0xff]
      %v1179 = vld [vmem:[#allocation2 + $0x150] sm:$0xff]
      %v1180 = vld [vmem:[#allocation2 + $0x158] sm:$0xff]
      %v1181 = vld [vmem:[#allocation2 + $0x168] sm:$0xff]
      %v1182 = vld [vmem:[#allocation2 + $0x170] sm:$0xff]
      %v1183 = vlaneseq
      %v1184 = vshrl.u32 %v1183, 7
      %v1185 = vsub.s32 0, %v1184
      %v1186 = vrot.slane %v1149, %v1185
      %v1187 = vmul.f32 %v1151, %v1186
      %v1188 = vmul.f32 %v1152, %v1186
      %v1189 = vmul.f32 %v1153, %v1186
      %v1190 = vmul.f32 %v1154, %v1186
      %v1191 = vmul.f32 %v1155, %v1186
      %v1192 = vmul.f32 %v1156, %v1186
      %v1193 = vmul.f32 %v1157, %v1186
      %v1194 = vmul.f32 %v1158, %v1186
      %v1195 = vmul.f32 %v1159, %v1186
      %v1196 = vmul.f32 %v1160, %v1186
      %v1197 = vmul.f32 %v1161, %v1186
      %v1198 = vmul.f32 %v1162, %v1186
      %v1199 = vmul.f32 %v1163, %v1186
      %v1200 = vmul.f32 %v1164, %v1186
      %v1201 = vmul.f32 %v1165, %v1186
      %v1202 = vmul.f32 %v1166, %v1186
      %v1203 = vmul.f32 %v1167, %v1186
      %v1204 = vmul.f32 %v1168, %v1186
      %v1205 = vmul.f32 %v1169, %v1186
      %v1206 = vmul.f32 %v1170, %v1186
      %v1207 = vmul.f32 %v1171, %v1186
      %v1208 = vmul.f32 %v1172, %v1186
      %v1209 = vmul.f32 %v1173, %v1186
      %v1210 = vmul.f32 %v1174, %v1186
      %v1211 = vmul.f32 %v1175, %v1186
      %v1212 = vmul.f32 %v1176, %v1186
      %v1213 = vmul.f32 %v1177, %v1186
      %v1214 = vmul.f32 %v1178, %v1186
      %v1215 = vmul.f32 %v1179, %v1186
      %v1216 = vmul.f32 %v1180, %v1186
      %v1217 = vmul.f32 %v1181, %v1186
      %v1218 = vmul.f32 %v1182, %v1186
      %v1219 = vadd.f32 %v1187, 0.0
      %v1220 = vadd.f32 %v1188, 0.0
      %v1221 = vadd.f32 %v1189, 0.0
      %v1222 = vadd.f32 %v1190, 0.0
      %v1223 = vadd.f32 %v1191, 0.0
      %v1224 = vadd.f32 %v1192, 0.0
      %v1225 = vadd.f32 %v1193, 0.0
      %v1226 = vadd.f32 %v1194, 0.0
      %v1227 = vadd.f32 %v1195, 0.0
      %v1228 = vadd.f32 %v1196, 0.0
      %v1229 = vadd.f32 %v1197, 0.0
      %v1230 = vadd.f32 %v1198, 0.0
      %v1231 = vadd.f32 %v1199, 0.0
      %v1232 = vadd.f32 %v1200, 0.0
      %v1233 = vadd.f32 %v1201, 0.0
      %v1234 = vadd.f32 %v1202, 0.0
      %v1235 = vadd.f32 %v1203, 0.0
      %v1236 = vadd.f32 %v1204, 0.0
      %v1237 = vadd.f32 %v1205, 0.0
      %v1238 = vadd.f32 %v1206, 0.0
      %v1239 = vadd.f32 %v1207, 0.0
      %v1240 = vadd.f32 %v1208, 0.0
      %v1241 = vadd.f32 %v1209, 0.0
      %v1242 = vadd.f32 %v1210, 0.0
      %v1243 = vadd.f32 %v1211, 0.0
      %v1244 = vadd.f32 %v1212, 0.0
      %v1245 = vadd.f32 %v1213, 0.0
      %v1246 = vadd.f32 %v1214, 0.0
      %v1247 = vadd.f32 %v1215, 0.0
      %v1248 = vadd.f32 %v1216, 0.0
      %v1249 = vadd.f32 %v1217, 0.0
      %v1250 = vadd.f32 %v1218, 0.0
      %v1251 = vld [vmem:[#allocation2 + $0x1] sm:$0xff]
      %v1252 = vld [vmem:[#allocation2 + $0x9] sm:$0xff]
      %v1253 = vld [vmem:[#allocation2 + $0x19] sm:$0xff]
      %v1254 = vld [vmem:[#allocation2 + $0x21] sm:$0xff]
      %v1255 = vld [vmem:[#allocation2 + $0x31] sm:$0xff]
      %v1256 = vld [vmem:[#allocation2 + $0x39] sm:$0xff]
      %v1257 = vld [vmem:[#allocation2 + $0x49] sm:$0xff]
      %v1258 = vld [vmem:[#allocation2 + $0x51] sm:$0xff]
      %v1259 = vld [vmem:[#allocation2 + $0x61] sm:$0xff]
      %v1260 = vld [vmem:[#allocation2 + $0x69] sm:$0xff]
      %v1261 = vld [vmem:[#allocation2 + $0x79] sm:$0xff]
      %v1262 = vld [vmem:[#allocation2 + $0x81] sm:$0xff]
      %v1263 = vld [vmem:[#allocation2 + $0x91] sm:$0xff]
      %v1264 = vld [vmem:[#allocation2 + $0x99] sm:$0xff]
      %v1265 = vld [vmem:[#allocation2 + $0xa9] sm:$0xff]
      %v1266 = vld [vmem:[#allocation2 + $0xb1] sm:$0xff]
      %v1267 = vld [vmem:[#allocation2 + $0xc1] sm:$0xff]
      %v1268 = vld [vmem:[#allocation2 + $0xc9] sm:$0xff]
      %v1269 = vld [vmem:[#allocation2 + $0xd9] sm:$0xff]
      %v1270 = vld [vmem:[#allocation2 + $0xe1] sm:$0xff]
      %v1271 = vld [vmem:[#allocation2 + $0xf1] sm:$0xff]
      %v1272 = vld [vmem:[#allocation2 + $0xf9] sm:$0xff]
      %v1273 = vld [vmem:[#allocation2 + $0x109] sm:$0xff]
      %v1274 = vld [vmem:[#allocation2 + $0x111] sm:$0xff]
      %v1275 = vld [vmem:[#allocation2 + $0x121] sm:$0xff]
      %v1276 = vld [vmem:[#allocation2 + $0x129] sm:$0xff]
      %v1277 = vld [vmem:[#allocation2 + $0x139] sm:$0xff]
      %v1278 = vld [vmem:[#allocation2 + $0x141] sm:$0xff]
      %v1279 = vld [vmem:[#allocation2 + $0x151] sm:$0xff]
      %v1280 = vld [vmem:[#allocation2 + $0x159] sm:$0xff]
      %v1281 = vld [vmem:[#allocation2 + $0x169] sm:$0xff]
      %v1282 = vld [vmem:[#allocation2 + $0x171] sm:$0xff]
      %v1283 = vlaneseq
      %v1284 = vshrl.u32 %v1283, 7
      %v1285 = vsub.s32 1, %v1284
      %v1286 = vrot.slane %v1149, %v1285
      %v1287 = vmul.f32 %v1251, %v1286
      %v1288 = vmul.f32 %v1252, %v1286
      %v1289 = vmul.f32 %v1253, %v1286
      %v1290 = vmul.f32 %v1254, %v1286
      %v1291 = vmul.f32 %v1255, %v1286
      %v1292 = vmul.f32 %v1256, %v1286
      %v1293 = vmul.f32 %v1257, %v1286
      %v1294 = vmul.f32 %v1258, %v1286
      %v1295 = vmul.f32 %v1259, %v1286
      %v1296 = vmul.f32 %v1260, %v1286
      %v1297 = vmul.f32 %v1261, %v1286
      %v1298 = vmul.f32 %v1262, %v1286
      %v1299 = vmul.f32 %v1263, %v1286
      %v1300 = vmul.f32 %v1264, %v1286
      %v1301 = vmul.f32 %v1265, %v1286
      %v1302 = vmul.f32 %v1266, %v1286
      %v1303 = vmul.f32 %v1267, %v1286
      %v1304 = vmul.f32 %v1268, %v1286
      %v1305 = vmul.f32 %v1269, %v1286
      %v1306 = vmul.f32 %v1270, %v1286
      %v1307 = vmul.f32 %v1271, %v1286
      %v1308 = vmul.f32 %v1272, %v1286
      %v1309 = vmul.f32 %v1273, %v1286
      %v1310 = vmul.f32 %v1274, %v1286
      %v1311 = vmul.f32 %v1275, %v1286
      %v1312 = vmul.f32 %v1276, %v1286
      %v1313 = vmul.f32 %v1277, %v1286
      %v1314 = vmul.f32 %v1278, %v1286
      %v1315 = vmul.f32 %v1279, %v1286
      %v1316 = vmul.f32 %v1280, %v1286
      %v1317 = vmul.f32 %v1281, %v1286
      %v1318 = vmul.f32 %v1282, %v1286
      %v1319 = vadd.f32 %v1219, %v1287
      %v1320 = vadd.f32 %v1220, %v1288
      %v1321 = vadd.f32 %v1221, %v1289
      %v1322 = vadd.f32 %v1222, %v1290
      %v1323 = vadd.f32 %v1223, %v1291
      %v1324 = vadd.f32 %v1224, %v1292
      %v1325 = vadd.f32 %v1225, %v1293
      %v1326 = vadd.f32 %v1226, %v1294
      %v1327 = vadd.f32 %v1227, %v1295
      %v1328 = vadd.f32 %v1228, %v1296
      %v1329 = vadd.f32 %v1229, %v1297
      %v1330 = vadd.f32 %v1230, %v1298
      %v1331 = vadd.f32 %v1231, %v1299
      %v1332 = vadd.f32 %v1232, %v1300
      %v1333 = vadd.f32 %v1233, %v1301
      %v1334 = vadd.f32 %v1234, %v1302
      %v1335 = vadd.f32 %v1235, %v1303
      %v1336 = vadd.f32 %v1236, %v1304
      %v1337 = vadd.f32 %v1237, %v1305
      %v1338 = vadd.f32 %v1238, %v1306
      %v1339 = vadd.f32 %v1239, %v1307
      %v1340 = vadd.f32 %v1240, %v1308
      %v1341 = vadd.f32 %v1241, %v1309
      %v1342 = vadd.f32 %v1242, %v1310
      %v1343 = vadd.f32 %v1243, %v1311
      %v1344 = vadd.f32 %v1244, %v1312
      %v1345 = vadd.f32 %v1245, %v1313
      %v1346 = vadd.f32 %v1246, %v1314
      %v1347 = vadd.f32 %v1247, %v1315
      %v1348 = vadd.f32 %v1248, %v1316
      %v1349 = vadd.f32 %v1249, %v1317
      %v1350 = vadd.f32 %v1250, %v1318
      %v1351 = vld [vmem:[#allocation2 + $0x2] sm:$0xff]
      %v1352 = vld [vmem:[#allocation2 + $0xa] sm:$0xff]
      %v1353 = vld [vmem:[#allocation2 + $0x1a] sm:$0xff]
      %v1354 = vld [vmem:[#allocation2 + $0x22] sm:$0xff]
      %v1355 = vld [vmem:[#allocation2 + $0x32] sm:$0xff]
      %v1356 = vld [vmem:[#allocation2 + $0x3a] sm:$0xff]
      %v1357 = vld [vmem:[#allocation2 + $0x4a] sm:$0xff]
      %v1358 = vld [vmem:[#allocation2 + $0x52] sm:$0xff]
      %v1359 = vld [vmem:[#allocation2 + $0x62] sm:$0xff]
      %v1360 = vld [vmem:[#allocation2 + $0x6a] sm:$0xff]
      %v1361 = vld [vmem:[#allocation2 + $0x7a] sm:$0xff]
      %v1362 = vld [vmem:[#allocation2 + $0x82] sm:$0xff]
      %v1363 = vld [vmem:[#allocation2 + $0x92] sm:$0xff]
      %v1364 = vld [vmem:[#allocation2 + $0x9a] sm:$0xff]
      %v1365 = vld [vmem:[#allocation2 + $0xaa] sm:$0xff]
      %v1366 = vld [vmem:[#allocation2 + $0xb2] sm:$0xff]
      %v1367 = vld [vmem:[#allocation2 + $0xc2] sm:$0xff]
      %v1368 = vld [vmem:[#allocation2 + $0xca] sm:$0xff]
      %v1369 = vld [vmem:[#allocation2 + $0xda] sm:$0xff]
      %v1370 = vld [vmem:[#allocation2 + $0xe2] sm:$0xff]
      %v1371 = vld [vmem:[#allocation2 + $0xf2] sm:$0xff]
      %v1372 = vld [vmem:[#allocation2 + $0xfa] sm:$0xff]
      %v1373 = vld [vmem:[#allocation2 + $0x10a] sm:$0xff]
      %v1374 = vld [vmem:[#allocation2 + $0x112] sm:$0xff]
      %v1375 = vld [vmem:[#allocation2 + $0x122] sm:$0xff]
      %v1376 = vld [vmem:[#allocation2 + $0x12a] sm:$0xff]
      %v1377 = vld [vmem:[#allocation2 + $0x13a] sm:$0xff]
      %v1378 = vld [vmem:[#allocation2 + $0x142] sm:$0xff]
      %v1379 = vld [vmem:[#allocation2 + $0x152] sm:$0xff]
      %v1380 = vld [vmem:[#allocation2 + $0x15a] sm:$0xff]
      %v1381 = vld [vmem:[#allocation2 + $0x16a] sm:$0xff]
      %v1382 = vld [vmem:[#allocation2 + $0x172] sm:$0xff]
      %v1383 = vlaneseq
      %v1384 = vshrl.u32 %v1383, 7
      %v1385 = vsub.s32 2, %v1384
      %v1386 = vrot.slane %v1149, %v1385
      %v1387 = vmul.f32 %v1351, %v1386
      %v1388 = vmul.f32 %v1352, %v1386
      %v1389 = vmul.f32 %v1353, %v1386
      %v1390 = vmul.f32 %v1354, %v1386
      %v1391 = vmul.f32 %v1355, %v1386
      %v1392 = vmul.f32 %v1356, %v1386
      %v1393 = vmul.f32 %v1357, %v1386
      %v1394 = vmul.f32 %v1358, %v1386
      %v1395 = vmul.f32 %v1359, %v1386
      %v1396 = vmul.f32 %v1360, %v1386
      %v1397 = vmul.f32 %v1361, %v1386
      %v1398 = vmul.f32 %v1362, %v1386
      %v1399 = vmul.f32 %v1363, %v1386
      %v1400 = vmul.f32 %v1364, %v1386
      %v1401 = vmul.f32 %v1365, %v1386
      %v1402 = vmul.f32 %v1366, %v1386
      %v1403 = vmul.f32 %v1367, %v1386
      %v1404 = vmul.f32 %v1368, %v1386
      %v1405 = vmul.f32 %v1369, %v1386
      %v1406 = vmul.f32 %v1370, %v1386
      %v1407 = vmul.f32 %v1371, %v1386
      %v1408 = vmul.f32 %v1372, %v1386
      %v1409 = vmul.f32 %v1373, %v1386
      %v1410 = vmul.f32 %v1374, %v1386
      %v1411 = vmul.f32 %v1375, %v1386
      %v1412 = vmul.f32 %v1376, %v1386
      %v1413 = vmul.f32 %v1377, %v1386
      %v1414 = vmul.f32 %v1378, %v1386
      %v1415 = vmul.f32 %v1379, %v1386
      %v1416 = vmul.f32 %v1380, %v1386
      %v1417 = vmul.f32 %v1381, %v1386
      %v1418 = vmul.f32 %v1382, %v1386
      %v1419 = vadd.f32 %v1319, %v1387
      %v1420 = vadd.f32 %v1320, %v1388
      %v1421 = vadd.f32 %v1321, %v1389
      %v1422 = vadd.f32 %v1322, %v1390
      %v1423 = vadd.f32 %v1323, %v1391
      %v1424 = vadd.f32 %v1324, %v1392
      %v1425 = vadd.f32 %v1325, %v1393
      %v1426 = vadd.f32 %v1326, %v1394
      %v1427 = vadd.f32 %v1327, %v1395
      %v1428 = vadd.f32 %v1328, %v1396
      %v1429 = vadd.f32 %v1329, %v1397
      %v1430 = vadd.f32 %v1330, %v1398
      %v1431 = vadd.f32 %v1331, %v1399
      %v1432 = vadd.f32 %v1332, %v1400
      %v1433 = vadd.f32 %v1333, %v1401
      %v1434 = vadd.f32 %v1334, %v1402
      %v1435 = vadd.f32 %v1335, %v1403
      %v1436 = vadd.f32 %v1336, %v1404
      %v1437 = vadd.f32 %v1337, %v1405
      %v1438 = vadd.f32 %v1338, %v1406
      %v1439 = vadd.f32 %v1339, %v1407
      %v1440 = vadd.f32 %v1340, %v1408
      %v1441 = vadd.f32 %v1341, %v1409
      %v1442 = vadd.f32 %v1342, %v1410
      %v1443 = vadd.f32 %v1343, %v1411
      %v1444 = vadd.f32 %v1344, %v1412
      %v1445 = vadd.f32 %v1345, %v1413
      %v1446 = vadd.f32 %v1346, %v1414
      %v1447 = vadd.f32 %v1347, %v1415
      %v1448 = vadd.f32 %v1348, %v1416
      %v1449 = vadd.f32 %v1349, %v1417
      %v1450 = vadd.f32 %v1350, %v1418
      %v1451 = vld [vmem:[%s985] sm:$0xff]
      %v1452 = vld [vmem:[%s985 + $0x8] sm:$0xff]
      %v1453 = vld [vmem:[%s985 + $0x18] sm:$0xff]
      %v1454 = vld [vmem:[%s985 + $0x20] sm:$0xff]
      %v1455 = vld [vmem:[%s985 + $0x30] sm:$0xff]
      %v1456 = vld [vmem:[%s985 + $0x38] sm:$0xff]
      %v1457 = vld [vmem:[%s985 + $0x48] sm:$0xff]
      %v1458 = vld [vmem:[%s985 + $0x50] sm:$0xff]
      %v1459 = vld [vmem:[%s985 + $0x60] sm:$0xff]
      %v1460 = vld [vmem:[%s985 + $0x68] sm:$0xff]
      %v1461 = vld [vmem:[%s985 + $0x78] sm:$0xff]
      %v1462 = vld [vmem:[%s985 + $0x80] sm:$0xff]
      %v1463 = vld [vmem:[%s985 + $0x90] sm:$0xff]
      %v1464 = vld [vmem:[%s985 + $0x98] sm:$0xff]
      %v1465 = vld [vmem:[%s985 + $0xa8] sm:$0xff]
      %v1466 = vld [vmem:[%s985 + $0xb0] sm:$0xff]
      %v1467 = vld [vmem:[%s985 + $0xc0] sm:$0xff]
      %v1468 = vld [vmem:[%s985 + $0xc8] sm:$0xff]
      %v1469 = vld [vmem:[%s985 + $0xd8] sm:$0xff]
      %v1470 = vld [vmem:[%s985 + $0xe0] sm:$0xff]
      %v1471 = vld [vmem:[%s985 + $0xf0] sm:$0xff]
      %v1472 = vld [vmem:[%s985 + $0xf8] sm:$0xff]
      %v1473 = vld [vmem:[%s985 + $0x108] sm:$0xff]
      %v1474 = vld [vmem:[%s985 + $0x110] sm:$0xff]
      %v1475 = vld [vmem:[%s985 + $0x120] sm:$0xff]
      %v1476 = vld [vmem:[%s985 + $0x128] sm:$0xff]
      %v1477 = vld [vmem:[%s985 + $0x138] sm:$0xff]
      %v1478 = vld [vmem:[%s985 + $0x140] sm:$0xff]
      %v1479 = vld [vmem:[%s985 + $0x150] sm:$0xff]
      %v1480 = vld [vmem:[%s985 + $0x158] sm:$0xff]
      %v1481 = vld [vmem:[%s985 + $0x168] sm:$0xff]
      %v1482 = vld [vmem:[%s985 + $0x170] sm:$0xff]
      %v1483 = vlaneseq
      %v1484 = vshrl.u32 %v1483, 7
      %v1485 = vsub.s32 3, %v1484
      %v1486 = vrot.slane %v1149, %v1485
      %v1487 = vmul.f32 %v1451, %v1486
      %v1488 = vmul.f32 %v1452, %v1486
      %v1489 = vmul.f32 %v1453, %v1486
      %v1490 = vmul.f32 %v1454, %v1486
      %v1491 = vmul.f32 %v1455, %v1486
      %v1492 = vmul.f32 %v1456, %v1486
      %v1493 = vmul.f32 %v1457, %v1486
      %v1494 = vmul.f32 %v1458, %v1486
      %v1495 = vmul.f32 %v1459, %v1486
      %v1496 = vmul.f32 %v1460, %v1486
      %v1497 = vmul.f32 %v1461, %v1486
      %v1498 = vmul.f32 %v1462, %v1486
      %v1499 = vmul.f32 %v1463, %v1486
      %v1500 = vmul.f32 %v1464, %v1486
      %v1501 = vmul.f32 %v1465, %v1486
      %v1502 = vmul.f32 %v1466, %v1486
      %v1503 = vmul.f32 %v1467, %v1486
      %v1504 = vmul.f32 %v1468, %v1486
      %v1505 = vmul.f32 %v1469, %v1486
      %v1506 = vmul.f32 %v1470, %v1486
      %v1507 = vmul.f32 %v1471, %v1486
      %v1508 = vmul.f32 %v1472, %v1486
      %v1509 = vmul.f32 %v1473, %v1486
      %v1510 = vmul.f32 %v1474, %v1486
      %v1511 = vmul.f32 %v1475, %v1486
      %v1512 = vmul.f32 %v1476, %v1486
      %v1513 = vmul.f32 %v1477, %v1486
      %v1514 = vmul.f32 %v1478, %v1486
      %v1515 = vmul.f32 %v1479, %v1486
      %v1516 = vmul.f32 %v1480, %v1486
      %v1517 = vmul.f32 %v1481, %v1486
      %v1518 = vmul.f32 %v1482, %v1486
      %v1519 = vadd.f32 %v1419, %v1487
      %v1520 = vadd.f32 %v1420, %v1488
      %v1521 = vadd.f32 %v1421, %v1489
      %v1522 = vadd.f32 %v1422, %v1490
      %v1523 = vadd.f32 %v1423, %v1491
      %v1524 = vadd.f32 %v1424, %v1492
      %v1525 = vadd.f32 %v1425, %v1493
      %v1526 = vadd.f32 %v1426, %v1494
      %v1527 = vadd.f32 %v1427, %v1495
      %v1528 = vadd.f32 %v1428, %v1496
      %v1529 = vadd.f32 %v1429, %v1497
      %v1530 = vadd.f32 %v1430, %v1498
      %v1531 = vadd.f32 %v1431, %v1499
      %v1532 = vadd.f32 %v1432, %v1500
      %v1533 = vadd.f32 %v1433, %v1501
      %v1534 = vadd.f32 %v1434, %v1502
      %v1535 = vadd.f32 %v1435, %v1503
      %v1536 = vadd.f32 %v1436, %v1504
      %v1537 = vadd.f32 %v1437, %v1505
      %v1538 = vadd.f32 %v1438, %v1506
      %v1539 = vadd.f32 %v1439, %v1507
      %v1540 = vadd.f32 %v1440, %v1508
      %v1541 = vadd.f32 %v1441, %v1509
      %v1542 = vadd.f32 %v1442, %v1510
      %v1543 = vadd.f32 %v1443, %v1511
      %v1544 = vadd.f32 %v1444, %v1512
      %v1545 = vadd.f32 %v1445, %v1513
      %v1546 = vadd.f32 %v1446, %v1514
      %v1547 = vadd.f32 %v1447, %v1515
      %v1548 = vadd.f32 %v1448, %v1516
      %v1549 = vadd.f32 %v1449, %v1517
      %v1550 = vadd.f32 %v1450, %v1518
      %v1551 = vld [vmem:[%s985 + $0x1] sm:$0xff]
      %v1552 = vld [vmem:[%s985 + $0x9] sm:$0xff]
      %v1553 = vld [vmem:[%s985 + $0x19] sm:$0xff]
      %v1554 = vld [vmem:[%s985 + $0x21] sm:$0xff]
      %v1555 = vld [vmem:[%s985 + $0x31] sm:$0xff]
      %v1556 = vld [vmem:[%s985 + $0x39] sm:$0xff]
      %v1557 = vld [vmem:[%s985 + $0x49] sm:$0xff]
      %v1558 = vld [vmem:[%s985 + $0x51] sm:$0xff]
      %v1559 = vld [vmem:[%s985 + $0x61] sm:$0xff]
      %v1560 = vld [vmem:[%s985 + $0x69] sm:$0xff]
      %v1561 = vld [vmem:[%s985 + $0x79] sm:$0xff]
      %v1562 = vld [vmem:[%s985 + $0x81] sm:$0xff]
      %v1563 = vld [vmem:[%s985 + $0x91] sm:$0xff]
      %v1564 = vld [vmem:[%s985 + $0x99] sm:$0xff]
      %v1565 = vld [vmem:[%s985 + $0xa9] sm:$0xff]
      %v1566 = vld [vmem:[%s985 + $0xb1] sm:$0xff]
      %v1567 = vld [vmem:[%s985 + $0xc1] sm:$0xff]
      %v1568 = vld [vmem:[%s985 + $0xc9] sm:$0xff]
      %v1569 = vld [vmem:[%s985 + $0xd9] sm:$0xff]
      %v1570 = vld [vmem:[%s985 + $0xe1] sm:$0xff]
      %v1571 = vld [vmem:[%s985 + $0xf1] sm:$0xff]
      %v1572 = vld [vmem:[%s985 + $0xf9] sm:$0xff]
      %v1573 = vld [vmem:[%s985 + $0x109] sm:$0xff]
      %v1574 = vld [vmem:[%s985 + $0x111] sm:$0xff]
      %v1575 = vld [vmem:[%s985 + $0x121] sm:$0xff]
      %v1576 = vld [vmem:[%s985 + $0x129] sm:$0xff]
      %v1577 = vld [vmem:[%s985 + $0x139] sm:$0xff]
      %v1578 = vld [vmem:[%s985 + $0x141] sm:$0xff]
      %v1579 = vld [vmem:[%s985 + $0x151] sm:$0xff]
      %v1580 = vld [vmem:[%s985 + $0x159] sm:$0xff]
      %v1581 = vld [vmem:[%s985 + $0x169] sm:$0xff]
      %v1582 = vld [vmem:[%s985 + $0x171] sm:$0xff]
      %v1583 = vlaneseq
      %v1584 = vshrl.u32 %v1583, 7
      %v1585 = vsub.s32 4, %v1584
      %v1586 = vrot.slane %v1149, %v1585
      %v1587 = vmul.f32 %v1551, %v1586
      %v1588 = vmul.f32 %v1552, %v1586
      %v1589 = vmul.f32 %v1553, %v1586
      %v1590 = vmul.f32 %v1554, %v1586
      %v1591 = vmul.f32 %v1555, %v1586
      %v1592 = vmul.f32 %v1556, %v1586
      %v1593 = vmul.f32 %v1557, %v1586
      %v1594 = vmul.f32 %v1558, %v1586
      %v1595 = vmul.f32 %v1559, %v1586
      %v1596 = vmul.f32 %v1560, %v1586
      %v1597 = vmul.f32 %v1561, %v1586
      %v1598 = vmul.f32 %v1562, %v1586
      %v1599 = vmul.f32 %v1563, %v1586
      %v1600 = vmul.f32 %v1564, %v1586
      %v1601 = vmul.f32 %v1565, %v1586
      %v1602 = vmul.f32 %v1566, %v1586
      %v1603 = vmul.f32 %v1567, %v1586
      %v1604 = vmul.f32 %v1568, %v1586
      %v1605 = vmul.f32 %v1569, %v1586
      %v1606 = vmul.f32 %v1570, %v1586
      %v1607 = vmul.f32 %v1571, %v1586
      %v1608 = vmul.f32 %v1572, %v1586
      %v1609 = vmul.f32 %v1573, %v1586
      %v1610 = vmul.f32 %v1574, %v1586
      %v1611 = vmul.f32 %v1575, %v1586
      %v1612 = vmul.f32 %v1576, %v1586
      %v1613 = vmul.f32 %v1577, %v1586
      %v1614 = vmul.f32 %v1578, %v1586
      %v1615 = vmul.f32 %v1579, %v1586
      %v1616 = vmul.f32 %v1580, %v1586
      %v1617 = vmul.f32 %v1581, %v1586
      %v1618 = vmul.f32 %v1582, %v1586
      %v1619 = vadd.f32 %v1519, %v1587
      %v1620 = vadd.f32 %v1520, %v1588
      %v1621 = vadd.f32 %v1521, %v1589
      %v1622 = vadd.f32 %v1522, %v1590
      %v1623 = vadd.f32 %v1523, %v1591
      %v1624 = vadd.f32 %v1524, %v1592
      %v1625 = vadd.f32 %v1525, %v1593
      %v1626 = vadd.f32 %v1526, %v1594
      %v1627 = vadd.f32 %v1527, %v1595
      %v1628 = vadd.f32 %v1528, %v1596
      %v1629 = vadd.f32 %v1529, %v1597
      %v1630 = vadd.f32 %v1530, %v1598
      %v1631 = vadd.f32 %v1531, %v1599
      %v1632 = vadd.f32 %v1532, %v1600
      %v1633 = vadd.f32 %v1533, %v1601
      %v1634 = vadd.f32 %v1534, %v1602
      %v1635 = vadd.f32 %v1535, %v1603
      %v1636 = vadd.f32 %v1536, %v1604
      %v1637 = vadd.f32 %v1537, %v1605
      %v1638 = vadd.f32 %v1538, %v1606
      %v1639 = vadd.f32 %v1539, %v1607
      %v1640 = vadd.f32 %v1540, %v1608
      %v1641 = vadd.f32 %v1541, %v1609
      %v1642 = vadd.f32 %v1542, %v1610
      %v1643 = vadd.f32 %v1543, %v1611
      %v1644 = vadd.f32 %v1544, %v1612
      %v1645 = vadd.f32 %v1545, %v1613
      %v1646 = vadd.f32 %v1546, %v1614
      %v1647 = vadd.f32 %v1547, %v1615
      %v1648 = vadd.f32 %v1548, %v1616
      %v1649 = vadd.f32 %v1549, %v1617
      %v1650 = vadd.f32 %v1550, %v1618
      %v1651 = vld [vmem:[%s985 + $0x2] sm:$0xff]
      %v1652 = vld [vmem:[%s985 + $0xa] sm:$0xff]
      %v1653 = vld [vmem:[%s985 + $0x1a] sm:$0xff]
      %v1654 = vld [vmem:[%s985 + $0x22] sm:$0xff]
      %v1655 = vld [vmem:[%s985 + $0x32] sm:$0xff]
      %v1656 = vld [vmem:[%s985 + $0x3a] sm:$0xff]
      %v1657 = vld [vmem:[%s985 + $0x4a] sm:$0xff]
      %v1658 = vld [vmem:[%s985 + $0x52] sm:$0xff]
      %v1659 = vld [vmem:[%s985 + $0x62] sm:$0xff]
      %v1660 = vld [vmem:[%s985 + $0x6a] sm:$0xff]
      %v1661 = vld [vmem:[%s985 + $0x7a] sm:$0xff]
      %v1662 = vld [vmem:[%s985 + $0x82] sm:$0xff]
      %v1663 = vld [vmem:[%s985 + $0x92] sm:$0xff]
      %v1664 = vld [vmem:[%s985 + $0x9a] sm:$0xff]
      %v1665 = vld [vmem:[%s985 + $0xaa] sm:$0xff]
      %v1666 = vld [vmem:[%s985 + $0xb2] sm:$0xff]
      %v1667 = vld [vmem:[%s985 + $0xc2] sm:$0xff]
      %v1668 = vld [vmem:[%s985 + $0xca] sm:$0xff]
      %v1669 = vld [vmem:[%s985 + $0xda] sm:$0xff]
      %v1670 = vld [vmem:[%s985 + $0xe2] sm:$0xff]
      %v1671 = vld [vmem:[%s985 + $0xf2] sm:$0xff]
      %v1672 = vld [vmem:[%s985 + $0xfa] sm:$0xff]
      %v1673 = vld [vmem:[%s985 + $0x10a] sm:$0xff]
      %v1674 = vld [vmem:[%s985 + $0x112] sm:$0xff]
      %v1675 = vld [vmem:[%s985 + $0x122] sm:$0xff]
      %v1676 = vld [vmem:[%s985 + $0x12a] sm:$0xff]
      %v1677 = vld [vmem:[%s985 + $0x13a] sm:$0xff]
      %v1678 = vld [vmem:[%s985 + $0x142] sm:$0xff]
      %v1679 = vld [vmem:[%s985 + $0x152] sm:$0xff]
      %v1680 = vld [vmem:[%s985 + $0x15a] sm:$0xff]
      %v1681 = vld [vmem:[%s985 + $0x16a] sm:$0xff]
      %v1682 = vld [vmem:[%s985 + $0x172] sm:$0xff]
      %v1683 = vlaneseq
      %v1684 = vshrl.u32 %v1683, 7
      %v1685 = vsub.s32 5, %v1684
      %v1686 = vrot.slane %v1149, %v1685
      %v1687 = vmul.f32 %v1651, %v1686
      %v1688 = vmul.f32 %v1652, %v1686
      %v1689 = vmul.f32 %v1653, %v1686
      %v1690 = vmul.f32 %v1654, %v1686
      %v1691 = vmul.f32 %v1655, %v1686
      %v1692 = vmul.f32 %v1656, %v1686
      %v1693 = vmul.f32 %v1657, %v1686
      %v1694 = vmul.f32 %v1658, %v1686
      %v1695 = vmul.f32 %v1659, %v1686
      %v1696 = vmul.f32 %v1660, %v1686
      %v1697 = vmul.f32 %v1661, %v1686
      %v1698 = vmul.f32 %v1662, %v1686
      %v1699 = vmul.f32 %v1663, %v1686
      %v1700 = vmul.f32 %v1664, %v1686
      %v1701 = vmul.f32 %v1665, %v1686
      %v1702 = vmul.f32 %v1666, %v1686
      %v1703 = vmul.f32 %v1667, %v1686
      %v1704 = vmul.f32 %v1668, %v1686
      %v1705 = vmul.f32 %v1669, %v1686
      %v1706 = vmul.f32 %v1670, %v1686
      %v1707 = vmul.f32 %v1671, %v1686
      %v1708 = vmul.f32 %v1672, %v1686
      %v1709 = vmul.f32 %v1673, %v1686
      %v1710 = vmul.f32 %v1674, %v1686
      %v1711 = vmul.f32 %v1675, %v1686
      %v1712 = vmul.f32 %v1676, %v1686
      %v1713 = vmul.f32 %v1677, %v1686
      %v1714 = vmul.f32 %v1678, %v1686
      %v1715 = vmul.f32 %v1679, %v1686
      %v1716 = vmul.f32 %v1680, %v1686
      %v1717 = vmul.f32 %v1681, %v1686
      %v1718 = vmul.f32 %v1682, %v1686
      %v1719 = vadd.f32 %v1619, %v1687
      %v1720 = vadd.f32 %v1620, %v1688
      %v1721 = vadd.f32 %v1621, %v1689
      %v1722 = vadd.f32 %v1622, %v1690
      %v1723 = vadd.f32 %v1623, %v1691
      %v1724 = vadd.f32 %v1624, %v1692
      %v1725 = vadd.f32 %v1625, %v1693
      %v1726 = vadd.f32 %v1626, %v1694
      %v1727 = vadd.f32 %v1627, %v1695
      %v1728 = vadd.f32 %v1628, %v1696
      %v1729 = vadd.f32 %v1629, %v1697
      %v1730 = vadd.f32 %v1630, %v1698
      %v1731 = vadd.f32 %v1631, %v1699
      %v1732 = vadd.f32 %v1632, %v1700
      %v1733 = vadd.f32 %v1633, %v1701
      %v1734 = vadd.f32 %v1634, %v1702
      %v1735 = vadd.f32 %v1635, %v1703
      %v1736 = vadd.f32 %v1636, %v1704
      %v1737 = vadd.f32 %v1637, %v1705
      %v1738 = vadd.f32 %v1638, %v1706
      %v1739 = vadd.f32 %v1639, %v1707
      %v1740 = vadd.f32 %v1640, %v1708
      %v1741 = vadd.f32 %v1641, %v1709
      %v1742 = vadd.f32 %v1642, %v1710
      %v1743 = vadd.f32 %v1643, %v1711
      %v1744 = vadd.f32 %v1644, %v1712
      %v1745 = vadd.f32 %v1645, %v1713
      %v1746 = vadd.f32 %v1646, %v1714
      %v1747 = vadd.f32 %v1647, %v1715
      %v1748 = vadd.f32 %v1648, %v1716
      %v1749 = vadd.f32 %v1649, %v1717
      %v1750 = vadd.f32 %v1650, %v1718
      %s1751 = scalar_lea.vmem [#allocation2], 48
      %v1752 = vld [vmem:[%s1751] sm:$0xff]
      %v1753 = vld [vmem:[%s1751 + $0x8] sm:$0xff]
      %v1754 = vld [vmem:[%s1751 + $0x18] sm:$0xff]
      %v1755 = vld [vmem:[%s1751 + $0x20] sm:$0xff]
      %v1756 = vld [vmem:[%s1751 + $0x30] sm:$0xff]
      %v1757 = vld [vmem:[%s1751 + $0x38] sm:$0xff]
      %v1758 = vld [vmem:[%s1751 + $0x48] sm:$0xff]
      %v1759 = vld [vmem:[%s1751 + $0x50] sm:$0xff]
      %v1760 = vld [vmem:[%s1751 + $0x60] sm:$0xff]
      %v1761 = vld [vmem:[%s1751 + $0x68] sm:$0xff]
      %v1762 = vld [vmem:[%s1751 + $0x78] sm:$0xff]
      %v1763 = vld [vmem:[%s1751 + $0x80] sm:$0xff]
      %v1764 = vld [vmem:[%s1751 + $0x90] sm:$0xff]
      %v1765 = vld [vmem:[%s1751 + $0x98] sm:$0xff]
      %v1766 = vld [vmem:[%s1751 + $0xa8] sm:$0xff]
      %v1767 = vld [vmem:[%s1751 + $0xb0] sm:$0xff]
      %v1768 = vld [vmem:[%s1751 + $0xc0] sm:$0xff]
      %v1769 = vld [vmem:[%s1751 + $0xc8] sm:$0xff]
      %v1770 = vld [vmem:[%s1751 + $0xd8] sm:$0xff]
      %v1771 = vld [vmem:[%s1751 + $0xe0] sm:$0xff]
      %v1772 = vld [vmem:[%s1751 + $0xf0] sm:$0xff]
      %v1773 = vld [vmem:[%s1751 + $0xf8] sm:$0xff]
      %v1774 = vld [vmem:[%s1751 + $0x108] sm:$0xff]
      %v1775 = vld [vmem:[%s1751 + $0x110] sm:$0xff]
      %v1776 = vld [vmem:[%s1751 + $0x120] sm:$0xff]
      %v1777 = vld [vmem:[%s1751 + $0x128] sm:$0xff]
      %v1778 = vld [vmem:[%s1751 + $0x138] sm:$0xff]
      %v1779 = vld [vmem:[%s1751 + $0x140] sm:$0xff]
      %v1780 = vld [vmem:[%s1751 + $0x150] sm:$0xff]
      %v1781 = vld [vmem:[%s1751 + $0x158] sm:$0xff]
      %v1782 = vld [vmem:[%s1751 + $0x168] sm:$0xff]
      %v1783 = vld [vmem:[%s1751 + $0x170] sm:$0xff]
      %v1784 = vlaneseq
      %v1785 = vshrl.u32 %v1784, 7
      %v1786 = vsub.s32 6, %v1785
      %v1787 = vrot.slane %v1149, %v1786
      %v1788 = vmul.f32 %v1752, %v1787
      %v1789 = vmul.f32 %v1753, %v1787
      %v1790 = vmul.f32 %v1754, %v1787
      %v1791 = vmul.f32 %v1755, %v1787
      %v1792 = vmul.f32 %v1756, %v1787
      %v1793 = vmul.f32 %v1757, %v1787
      %v1794 = vmul.f32 %v1758, %v1787
      %v1795 = vmul.f32 %v1759, %v1787
      %v1796 = vmul.f32 %v1760, %v1787
      %v1797 = vmul.f32 %v1761, %v1787
      %v1798 = vmul.f32 %v1762, %v1787
      %v1799 = vmul.f32 %v1763, %v1787
      %v1800 = vmul.f32 %v1764, %v1787
      %v1801 = vmul.f32 %v1765, %v1787
      %v1802 = vmul.f32 %v1766, %v1787
      %v1803 = vmul.f32 %v1767, %v1787
      %v1804 = vmul.f32 %v1768, %v1787
      %v1805 = vmul.f32 %v1769, %v1787
      %v1806 = vmul.f32 %v1770, %v1787
      %v1807 = vmul.f32 %v1771, %v1787
      %v1808 = vmul.f32 %v1772, %v1787
      %v1809 = vmul.f32 %v1773, %v1787
      %v1810 = vmul.f32 %v1774, %v1787
      %v1811 = vmul.f32 %v1775, %v1787
      %v1812 = vmul.f32 %v1776, %v1787
      %v1813 = vmul.f32 %v1777, %v1787
      %v1814 = vmul.f32 %v1778, %v1787
      %v1815 = vmul.f32 %v1779, %v1787
      %v1816 = vmul.f32 %v1780, %v1787
      %v1817 = vmul.f32 %v1781, %v1787
      %v1818 = vmul.f32 %v1782, %v1787
      %v1819 = vmul.f32 %v1783, %v1787
      %v1820 = vadd.f32 %v1719, %v1788
      %v1821 = vadd.f32 %v1720, %v1789
      %v1822 = vadd.f32 %v1721, %v1790
      %v1823 = vadd.f32 %v1722, %v1791
      %v1824 = vadd.f32 %v1723, %v1792
      %v1825 = vadd.f32 %v1724, %v1793
      %v1826 = vadd.f32 %v1725, %v1794
      %v1827 = vadd.f32 %v1726, %v1795
      %v1828 = vadd.f32 %v1727, %v1796
      %v1829 = vadd.f32 %v1728, %v1797
      %v1830 = vadd.f32 %v1729, %v1798
      %v1831 = vadd.f32 %v1730, %v1799
      %v1832 = vadd.f32 %v1731, %v1800
      %v1833 = vadd.f32 %v1732, %v1801
      %v1834 = vadd.f32 %v1733, %v1802
      %v1835 = vadd.f32 %v1734, %v1803
      %v1836 = vadd.f32 %v1735, %v1804
      %v1837 = vadd.f32 %v1736, %v1805
      %v1838 = vadd.f32 %v1737, %v1806
      %v1839 = vadd.f32 %v1738, %v1807
      %v1840 = vadd.f32 %v1739, %v1808
      %v1841 = vadd.f32 %v1740, %v1809
      %v1842 = vadd.f32 %v1741, %v1810
      %v1843 = vadd.f32 %v1742, %v1811
      %v1844 = vadd.f32 %v1743, %v1812
      %v1845 = vadd.f32 %v1744, %v1813
      %v1846 = vadd.f32 %v1745, %v1814
      %v1847 = vadd.f32 %v1746, %v1815
      %v1848 = vadd.f32 %v1747, %v1816
      %v1849 = vadd.f32 %v1748, %v1817
      %v1850 = vadd.f32 %v1749, %v1818
      %v1851 = vadd.f32 %v1750, %v1819
      %v1852 = vld [vmem:[%s1751 + $0x1] sm:$0xff]
      %v1853 = vld [vmem:[%s1751 + $0x9] sm:$0xff]
      %v1854 = vld [vmem:[%s1751 + $0x19] sm:$0xff]
      %v1855 = vld [vmem:[%s1751 + $0x21] sm:$0xff]
      %v1856 = vld [vmem:[%s1751 + $0x31] sm:$0xff]
      %v1857 = vld [vmem:[%s1751 + $0x39] sm:$0xff]
      %v1858 = vld [vmem:[%s1751 + $0x49] sm:$0xff]
      %v1859 = vld [vmem:[%s1751 + $0x51] sm:$0xff]
      %v1860 = vld [vmem:[%s1751 + $0x61] sm:$0xff]
      %v1861 = vld [vmem:[%s1751 + $0x69] sm:$0xff]
      %v1862 = vld [vmem:[%s1751 + $0x79] sm:$0xff]
      %v1863 = vld [vmem:[%s1751 + $0x81] sm:$0xff]
      %v1864 = vld [vmem:[%s1751 + $0x91] sm:$0xff]
      %v1865 = vld [vmem:[%s1751 + $0x99] sm:$0xff]
      %v1866 = vld [vmem:[%s1751 + $0xa9] sm:$0xff]
      %v1867 = vld [vmem:[%s1751 + $0xb1] sm:$0xff]
      %v1868 = vld [vmem:[%s1751 + $0xc1] sm:$0xff]
      %v1869 = vld [vmem:[%s1751 + $0xc9] sm:$0xff]
      %v1870 = vld [vmem:[%s1751 + $0xd9] sm:$0xff]
      %v1871 = vld [vmem:[%s1751 + $0xe1] sm:$0xff]
      %v1872 = vld [vmem:[%s1751 + $0xf1] sm:$0xff]
      %v1873 = vld [vmem:[%s1751 + $0xf9] sm:$0xff]
      %v1874 = vld [vmem:[%s1751 + $0x109] sm:$0xff]
      %v1875 = vld [vmem:[%s1751 + $0x111] sm:$0xff]
      %v1876 = vld [vmem:[%s1751 + $0x121] sm:$0xff]
      %v1877 = vld [vmem:[%s1751 + $0x129] sm:$0xff]
      %v1878 = vld [vmem:[%s1751 + $0x139] sm:$0xff]
      %v1879 = vld [vmem:[%s1751 + $0x141] sm:$0xff]
      %v1880 = vld [vmem:[%s1751 + $0x151] sm:$0xff]
      %v1881 = vld [vmem:[%s1751 + $0x159] sm:$0xff]
      %v1882 = vld [vmem:[%s1751 + $0x169] sm:$0xff]
      %v1883 = vld [vmem:[%s1751 + $0x171] sm:$0xff]
      %v1884 = vlaneseq
      %v1885 = vshrl.u32 %v1884, 7
      %v1886 = vsub.s32 7, %v1885
      %v1887 = vrot.slane %v1149, %v1886
      %v1888 = vmul.f32 %v1852, %v1887
      %v1889 = vmul.f32 %v1853, %v1887
      %v1890 = vmul.f32 %v1854, %v1887
      %v1891 = vmul.f32 %v1855, %v1887
      %v1892 = vmul.f32 %v1856, %v1887
      %v1893 = vmul.f32 %v1857, %v1887
      %v1894 = vmul.f32 %v1858, %v1887
      %v1895 = vmul.f32 %v1859, %v1887
      %v1896 = vmul.f32 %v1860, %v1887
      %v1897 = vmul.f32 %v1861, %v1887
      %v1898 = vmul.f32 %v1862, %v1887
      %v1899 = vmul.f32 %v1863, %v1887
      %v1900 = vmul.f32 %v1864, %v1887
      %v1901 = vmul.f32 %v1865, %v1887
      %v1902 = vmul.f32 %v1866, %v1887
      %v1903 = vmul.f32 %v1867, %v1887
      %v1904 = vmul.f32 %v1868, %v1887
      %v1905 = vmul.f32 %v1869, %v1887
      %v1906 = vmul.f32 %v1870, %v1887
      %v1907 = vmul.f32 %v1871, %v1887
      %v1908 = vmul.f32 %v1872, %v1887
      %v1909 = vmul.f32 %v1873, %v1887
      %v1910 = vmul.f32 %v1874, %v1887
      %v1911 = vmul.f32 %v1875, %v1887
      %v1912 = vmul.f32 %v1876, %v1887
      %v1913 = vmul.f32 %v1877, %v1887
      %v1914 = vmul.f32 %v1878, %v1887
      %v1915 = vmul.f32 %v1879, %v1887
      %v1916 = vmul.f32 %v1880, %v1887
      %v1917 = vmul.f32 %v1881, %v1887
      %v1918 = vmul.f32 %v1882, %v1887
      %v1919 = vmul.f32 %v1883, %v1887
      %v1920 = vadd.f32 %v1820, %v1888
      %v1921 = vadd.f32 %v1821, %v1889
      %v1922 = vadd.f32 %v1822, %v1890
      %v1923 = vadd.f32 %v1823, %v1891
      %v1924 = vadd.f32 %v1824, %v1892
      %v1925 = vadd.f32 %v1825, %v1893
      %v1926 = vadd.f32 %v1826, %v1894
      %v1927 = vadd.f32 %v1827, %v1895
      %v1928 = vadd.f32 %v1828, %v1896
      %v1929 = vadd.f32 %v1829, %v1897
      %v1930 = vadd.f32 %v1830, %v1898
      %v1931 = vadd.f32 %v1831, %v1899
      %v1932 = vadd.f32 %v1832, %v1900
      %v1933 = vadd.f32 %v1833, %v1901
      %v1934 = vadd.f32 %v1834, %v1902
      %v1935 = vadd.f32 %v1835, %v1903
      %v1936 = vadd.f32 %v1836, %v1904
      %v1937 = vadd.f32 %v1837, %v1905
      %v1938 = vadd.f32 %v1838, %v1906
      %v1939 = vadd.f32 %v1839, %v1907
      %v1940 = vadd.f32 %v1840, %v1908
      %v1941 = vadd.f32 %v1841, %v1909
      %v1942 = vadd.f32 %v1842, %v1910
      %v1943 = vadd.f32 %v1843, %v1911
      %v1944 = vadd.f32 %v1844, %v1912
      %v1945 = vadd.f32 %v1845, %v1913
      %v1946 = vadd.f32 %v1846, %v1914
      %v1947 = vadd.f32 %v1847, %v1915
      %v1948 = vadd.f32 %v1848, %v1916
      %v1949 = vadd.f32 %v1849, %v1917
      %v1950 = vadd.f32 %v1850, %v1918
      %v1951 = vadd.f32 %v1851, %v1919
      %v1952 = vld [vmem:[%s1751 + $0x2] sm:$0xff]
      %v1953 = vld [vmem:[%s1751 + $0xa] sm:$0xff]
      %v1954 = vld [vmem:[%s1751 + $0x1a] sm:$0xff]
      %v1955 = vld [vmem:[%s1751 + $0x22] sm:$0xff]
      %v1956 = vld [vmem:[%s1751 + $0x32] sm:$0xff]
      %v1957 = vld [vmem:[%s1751 + $0x3a] sm:$0xff]
      %v1958 = vld [vmem:[%s1751 + $0x4a] sm:$0xff]
      %v1959 = vld [vmem:[%s1751 + $0x52] sm:$0xff]
      %v1960 = vld [vmem:[%s1751 + $0x62] sm:$0xff]
      %v1961 = vld [vmem:[%s1751 + $0x6a] sm:$0xff]
      %v1962 = vld [vmem:[%s1751 + $0x7a] sm:$0xff]
      %v1963 = vld [vmem:[%s1751 + $0x82] sm:$0xff]
      %v1964 = vld [vmem:[%s1751 + $0x92] sm:$0xff]
      %v1965 = vld [vmem:[%s1751 + $0x9a] sm:$0xff]
      %v1966 = vld [vmem:[%s1751 + $0xaa] sm:$0xff]
      %v1967 = vld [vmem:[%s1751 + $0xb2] sm:$0xff]
      %v1968 = vld [vmem:[%s1751 + $0xc2] sm:$0xff]
      %v1969 = vld [vmem:[%s1751 + $0xca] sm:$0xff]
      %v1970 = vld [vmem:[%s1751 + $0xda] sm:$0xff]
      %v1971 = vld [vmem:[%s1751 + $0xe2] sm:$0xff]
      %v1972 = vld [vmem:[%s1751 + $0xf2] sm:$0xff]
      %v1973 = vld [vmem:[%s1751 + $0xfa] sm:$0xff]
      %v1974 = vld [vmem:[%s1751 + $0x10a] sm:$0xff]
      %v1975 = vld [vmem:[%s1751 + $0x112] sm:$0xff]
      %v1976 = vld [vmem:[%s1751 + $0x122] sm:$0xff]
      %v1977 = vld [vmem:[%s1751 + $0x12a] sm:$0xff]
      %v1978 = vld [vmem:[%s1751 + $0x13a] sm:$0xff]
      %v1979 = vld [vmem:[%s1751 + $0x142] sm:$0xff]
      %v1980 = vld [vmem:[%s1751 + $0x152] sm:$0xff]
      %v1981 = vld [vmem:[%s1751 + $0x15a] sm:$0xff]
      %v1982 = vld [vmem:[%s1751 + $0x16a] sm:$0xff]
      %v1983 = vld [vmem:[%s1751 + $0x172] sm:$0xff]
      %v1984 = vlaneseq
      %v1985 = vshrl.u32 %v1984, 7
      %v1986 = vsub.s32 0, %v1985
      %v1987 = vrot.slane %v1150, %v1986
      %v1988 = vmul.f32 %v1952, %v1987
      %v1989 = vmul.f32 %v1953, %v1987
      %v1990 = vmul.f32 %v1954, %v1987
      %v1991 = vmul.f32 %v1955, %v1987
      %v1992 = vmul.f32 %v1956, %v1987
      %v1993 = vmul.f32 %v1957, %v1987
      %v1994 = vmul.f32 %v1958, %v1987
      %v1995 = vmul.f32 %v1959, %v1987
      %v1996 = vmul.f32 %v1960, %v1987
      %v1997 = vmul.f32 %v1961, %v1987
      %v1998 = vmul.f32 %v1962, %v1987
      %v1999 = vmul.f32 %v1963, %v1987
      %v2000 = vmul.f32 %v1964, %v1987
      %v2001 = vmul.f32 %v1965, %v1987
      %v2002 = vmul.f32 %v1966, %v1987
      %v2003 = vmul.f32 %v1967, %v1987
      %v2004 = vmul.f32 %v1968, %v1987
      %v2005 = vmul.f32 %v1969, %v1987
      %v2006 = vmul.f32 %v1970, %v1987
      %v2007 = vmul.f32 %v1971, %v1987
      %v2008 = vmul.f32 %v1972, %v1987
      %v2009 = vmul.f32 %v1973, %v1987
      %v2010 = vmul.f32 %v1974, %v1987
      %v2011 = vmul.f32 %v1975, %v1987
      %v2012 = vmul.f32 %v1976, %v1987
      %v2013 = vmul.f32 %v1977, %v1987
      %v2014 = vmul.f32 %v1978, %v1987
      %v2015 = vmul.f32 %v1979, %v1987
      %v2016 = vmul.f32 %v1980, %v1987
      %v2017 = vmul.f32 %v1981, %v1987
      %v2018 = vmul.f32 %v1982, %v1987
      %v2019 = vmul.f32 %v1983, %v1987
      %v2020 = vadd.f32 %v1920, %v1988
      %v2021 = vadd.f32 %v1921, %v1989
      %v2022 = vadd.f32 %v1922, %v1990
      %v2023 = vadd.f32 %v1923, %v1991
      %v2024 = vadd.f32 %v1924, %v1992
      %v2025 = vadd.f32 %v1925, %v1993
      %v2026 = vadd.f32 %v1926, %v1994
      %v2027 = vadd.f32 %v1927, %v1995
      %v2028 = vadd.f32 %v1928, %v1996
      %v2029 = vadd.f32 %v1929, %v1997
      %v2030 = vadd.f32 %v1930, %v1998
      %v2031 = vadd.f32 %v1931, %v1999
      %v2032 = vadd.f32 %v1932, %v2000
      %v2033 = vadd.f32 %v1933, %v2001
      %v2034 = vadd.f32 %v1934, %v2002
      %v2035 = vadd.f32 %v1935, %v2003
      %v2036 = vadd.f32 %v1936, %v2004
      %v2037 = vadd.f32 %v1937, %v2005
      %v2038 = vadd.f32 %v1938, %v2006
      %v2039 = vadd.f32 %v1939, %v2007
      %v2040 = vadd.f32 %v1940, %v2008
      %v2041 = vadd.f32 %v1941, %v2009
      %v2042 = vadd.f32 %v1942, %v2010
      %v2043 = vadd.f32 %v1943, %v2011
      %v2044 = vadd.f32 %v1944, %v2012
      %v2045 = vadd.f32 %v1945, %v2013
      %v2046 = vadd.f32 %v1946, %v2014
      %v2047 = vadd.f32 %v1947, %v2015
      %v2048 = vadd.f32 %v1948, %v2016
      %v2049 = vadd.f32 %v1949, %v2017
      %v2050 = vadd.f32 %v1950, %v2018
      %v2051 = vadd.f32 %v1951, %v2019
      %v2052 = vld [vmem:[%s6] sm:$0x1]
      %v2054 = vlaneseq
      %v2055 = vshrl.u32 %v2054, 7
      %v2056 = vsub.s32 0, %v2055
      %v2057 = vrot.slane %v2052, %v2056
      %v2059 = vadd.f32 %v2020, %v2057
      %v2060 = vadd.f32 %v2021, %v2057
      %v2061 = vadd.f32 %v2022, %v2057
      %v2062 = vadd.f32 %v2023, %v2057
      %v2063 = vadd.f32 %v2024, %v2057
      %v2064 = vadd.f32 %v2025, %v2057
      %v2065 = vadd.f32 %v2026, %v2057
      %v2066 = vadd.f32 %v2027, %v2057
      %v2067 = vadd.f32 %v2028, %v2057
      %v2068 = vadd.f32 %v2029, %v2057
      %v2069 = vadd.f32 %v2030, %v2057
      %v2070 = vadd.f32 %v2031, %v2057
      %v2071 = vadd.f32 %v2032, %v2057
      %v2072 = vadd.f32 %v2033, %v2057
      %v2073 = vadd.f32 %v2034, %v2057
      %v2074 = vadd.f32 %v2035, %v2057
      %v2075 = vadd.f32 %v2036, %v2057
      %v2076 = vadd.f32 %v2037, %v2057
      %v2077 = vadd.f32 %v2038, %v2057
      %v2078 = vadd.f32 %v2039, %v2057
      %v2079 = vadd.f32 %v2040, %v2057
      %v2080 = vadd.f32 %v2041, %v2057
      %v2081 = vadd.f32 %v2042, %v2057
      %v2082 = vadd.f32 %v2043, %v2057
      %v2083 = vadd.f32 %v2044, %v2057
      %v2084 = vadd.f32 %v2045, %v2057
      %v2085 = vadd.f32 %v2046, %v2057
      %v2086 = vadd.f32 %v2047, %v2057
      %v2087 = vadd.f32 %v2048, %v2057
      %v2088 = vadd.f32 %v2049, %v2057
      %v2089 = vadd.f32 %v2050, %v2057
      %v2090 = vadd.f32 %v2051, %v2057
      %v2091 = vld [vmem:[%s7] sm:$0xf]
      %v2092 = vld [vmem:[%s7 + $0x4] sm:$0xf]
      %v2093 = vld [vmem:[%s7 + $0x8] sm:$0xf]
      %v2094 = vld [vmem:[%s7 + $0xc] sm:$0xf]
      %v2095 = vld [vmem:[%s7 + $0x10] sm:$0xf]
      %v2096 = vld [vmem:[%s7 + $0x14] sm:$0xf]
      %v2097 = vld [vmem:[%s7 + $0x18] sm:$0xf]
      %v2098 = vld [vmem:[%s7 + $0x1c] sm:$0xf]
      %v2099 = vld [vmem:[%s7 + $0x20] sm:$0xf]
      %v2100 = vld [vmem:[%s7 + $0x24] sm:$0xf]
      %v2101 = vld [vmem:[%s7 + $0x28] sm:$0xf]
      %v2102 = vld [vmem:[%s7 + $0x2c] sm:$0xf]
      %v2103 = vld [vmem:[%s7 + $0x30] sm:$0xf]
      %v2104 = vld [vmem:[%s7 + $0x34] sm:$0xf]
      %v2105 = vld [vmem:[%s7 + $0x38] sm:$0xf]
      %v2106 = vld [vmem:[%s7 + $0x3c] sm:$0xf]
      %v2107 = vld [vmem:[%s8] sm:$0xf]
      %v2108 = vpack.c.bf16 %v2060, %v2059
      %v2109 = vpack.c.bf16 %v2062, %v2061
      %v2110 = vpack.c.bf16 %v2064, %v2063
      %v2111 = vpack.c.bf16 %v2066, %v2065
      %v2112 = vpack.c.bf16 %v2068, %v2067
      %v2113 = vpack.c.bf16 %v2070, %v2069
      %v2114 = vpack.c.bf16 %v2072, %v2071
      %v2115 = vpack.c.bf16 %v2074, %v2073
      %v2116 = vpack.c.bf16 %v2076, %v2075
      %v2117 = vpack.c.bf16 %v2078, %v2077
      %v2118 = vpack.c.bf16 %v2080, %v2079
      %v2119 = vpack.c.bf16 %v2082, %v2081
      %v2120 = vpack.c.bf16 %v2084, %v2083
      %v2121 = vpack.c.bf16 %v2086, %v2085
      %v2122 = vpack.c.bf16 %v2088, %v2087
      %v2123 = vpack.c.bf16 %v2090, %v2089
      %v2140 = vunpack.c.l.b16 %v2091
      %v2141 = vunpack.c.l.b16 %v2092
      %v2142 = vunpack.c.l.b16 %v2093
      %v2143 = vunpack.c.l.b16 %v2094
      %v2144 = vunpack.c.l.b16 %v2095
      %v2145 = vunpack.c.l.b16 %v2096
      %v2146 = vunpack.c.l.b16 %v2097
      %v2147 = vunpack.c.l.b16 %v2098
      %v2148 = vunpack.c.l.b16 %v2099
      %v2149 = vunpack.c.l.b16 %v2100
      %v2150 = vunpack.c.l.b16 %v2101
      %v2151 = vunpack.c.l.b16 %v2102
      %v2152 = vunpack.c.l.b16 %v2103
      %v2153 = vunpack.c.l.b16 %v2104
      %v2154 = vunpack.c.l.b16 %v2105
      %v2155 = vunpack.c.l.b16 %v2106
      %v2156 = vpack.c.b16 %v2141, %v2140
      %v2157 = vpack.c.b16 %v2143, %v2142
      %v2158 = vpack.c.b16 %v2145, %v2144
      %v2159 = vpack.c.b16 %v2147, %v2146
      %v2160 = vpack.c.b16 %v2149, %v2148
      %v2161 = vpack.c.b16 %v2151, %v2150
      %v2162 = vpack.c.b16 %v2153, %v2152
      %v2163 = vpack.c.b16 %v2155, %v2154
      %2172 = vmatprep.subr.bf16.mxu0 0
      %2173 = vmatpush1.bf16.msra.mxu0 %v2163
      %2174 = vmatprep.subr.bf16.mxu0 0
      %2175 = vmatpush1.bf16.msra.mxu0 %v2162
      %2176 = vmatprep.subr.bf16.mxu0 0
      %2177 = vmatpush1.bf16.msra.mxu0 %v2161
      %2178 = vmatprep.subr.bf16.mxu0 0
      %2179 = vmatpush1.bf16.msra.mxu0 %v2160
      %2180 = vmatprep.subr.bf16.mxu0 0
      %2181 = vmatpush1.bf16.msra.mxu0 %v2159
      %2182 = vmatprep.subr.bf16.mxu0 0
      %2183 = vmatpush1.bf16.msra.mxu0 %v2158
      %2184 = vmatprep.subr.bf16.mxu0 0
      %2185 = vmatpush1.bf16.msra.mxu0 %v2157
      %2186 = vmatprep.subr.bf16.mxu0 0
      %2187 = vmatpush1.bf16.msra.mxu0 %v2156
      %2188 = vmatprep.subr.bf16.mxu0 0
      %2189 = vmatpush2.bf16.msra.mxu0 0
      %2190 = vmatprep.subr.bf16.mxu0 0
      %2191 = vmatpush2.bf16.msra.mxu0 0
      %2192 = vmatprep.subr.bf16.mxu0 0
      %2193 = vmatpush2.bf16.msra.mxu0 0
      %2194 = vmatprep.subr.bf16.mxu0 0
      %2195 = vmatpush2.bf16.msra.mxu0 0
      %2196 = vmatprep.subr.bf16.mxu0 0
      %2197 = vmatpush2.bf16.msra.mxu0 0
      %2198 = vmatprep.subr.bf16.mxu0 0
      %2199 = vmatpush2.bf16.msra.mxu0 0
      %2200 = vmatprep.subr.bf16.mxu0 0
      %2201 = vmatpush2.bf16.msra.mxu0 0
      %2202 = vmatprep.subr.bf16.mxu0 0
      %2203 = vmatpush2.bf16.msra.mxu0 0
      %2204 = vmatprep.mubr.bf16.mxu0 0
      %2205 = vmatmul.mubr.bf16.gmra.mxu0 %v2108
      %v2206 = vpop.f32.mrf.mxu0
      %v2207 = vadd.f32 0.0, %v2206
      %v2208 = vpop.f32.mrf.mxu0
      %v2209 = vpop.f32.mrf.mxu0
      %v2210 = vadd.f32 0.0, %v2209
      %v2211 = vpop.f32.mrf.mxu0
      %2212 = vmatprep.mubr.bf16.mxu0 0
      %2213 = vmatmul.mubr.bf16.gmra.mxu0 %v2109
      %v2214 = vpop.f32.mrf.mxu0
      %v2215 = vadd.f32 0.0, %v2214
      %v2216 = vpop.f32.mrf.mxu0
      %v2217 = vpop.f32.mrf.mxu0
      %v2218 = vadd.f32 0.0, %v2217
      %v2219 = vpop.f32.mrf.mxu0
      %2220 = vmatprep.mubr.bf16.mxu0 0
      %2221 = vmatmul.mubr.bf16.gmra.mxu0 %v2110
      %v2222 = vpop.f32.mrf.mxu0
      %v2223 = vadd.f32 0.0, %v2222
      %v2224 = vpop.f32.mrf.mxu0
      %v2225 = vpop.f32.mrf.mxu0
      %v2226 = vadd.f32 0.0, %v2225
      %v2227 = vpop.f32.mrf.mxu0
      %2228 = vmatprep.mubr.bf16.mxu0 0
      %2229 = vmatmul.mubr.bf16.gmra.mxu0 %v2111
      %v2230 = vpop.f32.mrf.mxu0
      %v2231 = vadd.f32 0.0, %v2230
      %v2232 = vpop.f32.mrf.mxu0
      %v2233 = vpop.f32.mrf.mxu0
      %v2234 = vadd.f32 0.0, %v2233
      %v2235 = vpop.f32.mrf.mxu0
      %2236 = vmatprep.mubr.bf16.mxu0 0
      %2237 = vmatmul.mubr.bf16.gmra.mxu0 %v2112
      %v2238 = vpop.f32.mrf.mxu0
      %v2239 = vadd.f32 0.0, %v2238
      %v2240 = vpop.f32.mrf.mxu0
      %v2241 = vpop.f32.mrf.mxu0
      %v2242 = vadd.f32 0.0, %v2241
      %v2243 = vpop.f32.mrf.mxu0
      %2244 = vmatprep.mubr.bf16.mxu0 0
      %2245 = vmatmul.mubr.bf16.gmra.mxu0 %v2113
      %v2246 = vpop.f32.mrf.mxu0
      %v2247 = vadd.f32 0.0, %v2246
      %v2248 = vpop.f32.mrf.mxu0
      %v2249 = vpop.f32.mrf.mxu0
      %v2250 = vadd.f32 0.0, %v2249
      %v2251 = vpop.f32.mrf.mxu0
      %2252 = vmatprep.mubr.bf16.mxu0 0
      %2253 = vmatmul.mubr.bf16.gmra.mxu0 %v2114
      %v2254 = vpop.f32.mrf.mxu0
      %v2255 = vadd.f32 0.0, %v2254
      %v2256 = vpop.f32.mrf.mxu0
      %v2257 = vpop.f32.mrf.mxu0
      %v2258 = vadd.f32 0.0, %v2257
      %v2259 = vpop.f32.mrf.mxu0
      %2260 = vmatprep.mubr.bf16.mxu0 0
      %2261 = vmatmul.mubr.bf16.gmra.mxu0 %v2115
      %v2262 = vpop.f32.mrf.mxu0
      %v2263 = vadd.f32 0.0, %v2262
      %v2264 = vpop.f32.mrf.mxu0
      %v2265 = vpop.f32.mrf.mxu0
      %v2266 = vadd.f32 0.0, %v2265
      %v2267 = vpop.f32.mrf.mxu0
      %2268 = vmatprep.mubr.bf16.mxu0 0
      %2269 = vmatmul.mubr.bf16.gmra.mxu0 %v2116
      %v2270 = vpop.f32.mrf.mxu0
      %v2271 = vadd.f32 0.0, %v2270
      %v2272 = vpop.f32.mrf.mxu0
      %v2273 = vpop.f32.mrf.mxu0
      %v2274 = vadd.f32 0.0, %v2273
      %v2275 = vpop.f32.mrf.mxu0
      %2276 = vmatprep.mubr.bf16.mxu0 0
      %2277 = vmatmul.mubr.bf16.gmra.mxu0 %v2117
      %v2278 = vpop.f32.mrf.mxu0
      %v2279 = vadd.f32 0.0, %v2278
      %v2280 = vpop.f32.mrf.mxu0
      %v2281 = vpop.f32.mrf.mxu0
      %v2282 = vadd.f32 0.0, %v2281
      %v2283 = vpop.f32.mrf.mxu0
      %2284 = vmatprep.mubr.bf16.mxu0 0
      %2285 = vmatmul.mubr.bf16.gmra.mxu0 %v2118
      %v2286 = vpop.f32.mrf.mxu0
      %v2287 = vadd.f32 0.0, %v2286
      %v2288 = vpop.f32.mrf.mxu0
      %v2289 = vpop.f32.mrf.mxu0
      %v2290 = vadd.f32 0.0, %v2289
      %v2291 = vpop.f32.mrf.mxu0
      %2292 = vmatprep.mubr.bf16.mxu0 0
      %2293 = vmatmul.mubr.bf16.gmra.mxu0 %v2119
      %v2294 = vpop.f32.mrf.mxu0
      %v2295 = vadd.f32 0.0, %v2294
      %v2296 = vpop.f32.mrf.mxu0
      %v2297 = vpop.f32.mrf.mxu0
      %v2298 = vadd.f32 0.0, %v2297
      %v2299 = vpop.f32.mrf.mxu0
      %2300 = vmatprep.mubr.bf16.mxu0 0
      %2301 = vmatmul.mubr.bf16.gmra.mxu0 %v2120
      %v2302 = vpop.f32.mrf.mxu0
      %v2303 = vadd.f32 0.0, %v2302
      %v2304 = vpop.f32.mrf.mxu0
      %v2305 = vpop.f32.mrf.mxu0
      %v2306 = vadd.f32 0.0, %v2305
      %v2307 = vpop.f32.mrf.mxu0
      %2308 = vmatprep.mubr.bf16.mxu0 0
      %2309 = vmatmul.mubr.bf16.gmra.mxu0 %v2121
      %v2310 = vpop.f32.mrf.mxu0
      %v2311 = vadd.f32 0.0, %v2310
      %v2312 = vpop.f32.mrf.mxu0
      %v2313 = vpop.f32.mrf.mxu0
      %v2314 = vadd.f32 0.0, %v2313
      %v2315 = vpop.f32.mrf.mxu0
      %2316 = vmatprep.mubr.bf16.mxu0 0
      %2317 = vmatmul.mubr.bf16.gmra.mxu0 %v2122
      %v2318 = vpop.f32.mrf.mxu0
      %v2319 = vadd.f32 0.0, %v2318
      %v2320 = vpop.f32.mrf.mxu0
      %v2321 = vpop.f32.mrf.mxu0
      %v2322 = vadd.f32 0.0, %v2321
      %v2323 = vpop.f32.mrf.mxu0
      %2324 = vmatprep.mubr.bf16.mxu0 0
      %2325 = vmatmul.mubr.bf16.gmra.mxu0 %v2123
      %v2326 = vpop.f32.mrf.mxu0
      %v2327 = vadd.f32 0.0, %v2326
      %v2328 = vpop.f32.mrf.mxu0
      %v2329 = vpop.f32.mrf.mxu0
      %v2330 = vadd.f32 0.0, %v2329
      %v2331 = vpop.f32.mrf.mxu0
      %2332 = vdwg.mxu0
      %v2333 = vmul.f32 %v2207, 0.03125
      %v2334 = vmul.f32 %v2210, 0.03125
      %v2335 = vmul.f32 %v2215, 0.03125
      %v2336 = vmul.f32 %v2218, 0.03125
      %v2337 = vmul.f32 %v2223, 0.03125
      %v2338 = vmul.f32 %v2226, 0.03125
      %v2339 = vmul.f32 %v2231, 0.03125
      %v2340 = vmul.f32 %v2234, 0.03125
      %v2341 = vmul.f32 %v2239, 0.03125
      %v2342 = vmul.f32 %v2242, 0.03125
      %v2343 = vmul.f32 %v2247, 0.03125
      %v2344 = vmul.f32 %v2250, 0.03125
      %v2345 = vmul.f32 %v2255, 0.03125
      %v2346 = vmul.f32 %v2258, 0.03125
      %v2347 = vmul.f32 %v2263, 0.03125
      %v2348 = vmul.f32 %v2266, 0.03125
      %v2349 = vmul.f32 %v2271, 0.03125
      %v2350 = vmul.f32 %v2274, 0.03125
      %v2351 = vmul.f32 %v2279, 0.03125
      %v2352 = vmul.f32 %v2282, 0.03125
      %v2353 = vmul.f32 %v2287, 0.03125
      %v2354 = vmul.f32 %v2290, 0.03125
      %v2355 = vmul.f32 %v2295, 0.03125
      %v2356 = vmul.f32 %v2298, 0.03125
      %v2357 = vmul.f32 %v2303, 0.03125
      %v2358 = vmul.f32 %v2306, 0.03125
      %v2359 = vmul.f32 %v2311, 0.03125
      %v2360 = vmul.f32 %v2314, 0.03125
      %v2361 = vmul.f32 %v2319, 0.03125
      %v2362 = vmul.f32 %v2322, 0.03125
      %v2363 = vmul.f32 %v2327, 0.03125
      %v2364 = vmul.f32 %v2330, 0.03125
      %v2365 = vpack.c.bf16 %v2334, %v2333
      %v2366 = vpack.c.bf16 %v2336, %v2335
      %v2367 = vpack.c.bf16 %v2338, %v2337
      %v2368 = vpack.c.bf16 %v2340, %v2339
      %v2369 = vpack.c.bf16 %v2342, %v2341
      %v2370 = vpack.c.bf16 %v2344, %v2343
      %v2371 = vpack.c.bf16 %v2346, %v2345
      %v2372 = vpack.c.bf16 %v2348, %v2347
      %v2373 = vpack.c.bf16 %v2350, %v2349
      %v2374 = vpack.c.bf16 %v2352, %v2351
      %v2375 = vpack.c.bf16 %v2354, %v2353
      %v2376 = vpack.c.bf16 %v2356, %v2355
      %v2377 = vpack.c.bf16 %v2358, %v2357
      %v2378 = vpack.c.bf16 %v2360, %v2359
      %v2379 = vpack.c.bf16 %v2362, %v2361
      %v2380 = vpack.c.bf16 %v2364, %v2363
      %vm2381 = vcmask 64512
      %v2383 = vsel %vm2381, %v2365, 0
      %v2386 = vsel %vm2381, %v2366, 0
      %v2389 = vsel %vm2381, %v2367, 0
      %v2392 = vsel %vm2381, %v2368, 0
      %v2395 = vsel %vm2381, %v2369, 0
      %v2398 = vsel %vm2381, %v2370, 0
      %v2401 = vsel %vm2381, %v2371, 0
      %v2404 = vsel %vm2381, %v2372, 0
      %v2407 = vsel %vm2381, %v2373, 0
      %v2410 = vsel %vm2381, %v2374, 0
      %v2413 = vsel %vm2381, %v2375, 0
      %v2416 = vsel %vm2381, %v2376, 0
      %v2419 = vsel %vm2381, %v2377, 0
      %v2422 = vsel %vm2381, %v2378, 0
      %v2425 = vsel %vm2381, %v2379, 0
      %v2428 = vsel %vm2381, %v2380, 0
      %vm2430 = vcmask 1043456
      %v2432 = vsel %vm2430, %v2107, 0
      %2434 = vmatprep.subr.bf16.mxu0 0
      %2435 = vmatpush1.bf16.msra.mxu0 0
      %2436 = vmatprep.subr.bf16.mxu0 0
      %2437 = vmatpush1.bf16.msra.mxu0 0
      %2438 = vmatprep.subr.bf16.mxu0 0
      %2439 = vmatpush1.bf16.msra.mxu0 0
      %2440 = vmatprep.subr.bf16.mxu0 0
      %2441 = vmatpush1.bf16.msra.mxu0 0
      %2442 = vmatprep.subr.bf16.mxu0 0
      %2443 = vmatpush1.bf16.msra.mxu0 0
      %2444 = vmatprep.subr.bf16.mxu0 0
      %2445 = vmatpush1.bf16.msra.mxu0 0
      %2446 = vmatprep.subr.bf16.mxu0 0
      %2447 = vmatpush1.bf16.msra.mxu0 0
      %2448 = vmatprep.subr.bf16.mxu0 0
      %2449 = vmatpush1.bf16.msra.mxu0 %v2432
      %2450 = vmatprep.subr.bf16.mxu0 0
      %2451 = vmatpush2.bf16.msra.mxu0 0
      %2452 = vmatprep.subr.bf16.mxu0 0
      %2453 = vmatpush2.bf16.msra.mxu0 0
      %2454 = vmatprep.subr.bf16.mxu0 0
      %2455 = vmatpush2.bf16.msra.mxu0 0
      %2456 = vmatprep.subr.bf16.mxu0 0
      %2457 = vmatpush2.bf16.msra.mxu0 0
      %2458 = vmatprep.subr.bf16.mxu0 0
      %2459 = vmatpush2.bf16.msra.mxu0 0
      %2460 = vmatprep.subr.bf16.mxu0 0
      %2461 = vmatpush2.bf16.msra.mxu0 0
      %2462 = vmatprep.subr.bf16.mxu0 0
      %2463 = vmatpush2.bf16.msra.mxu0 0
      %2464 = vmatprep.subr.bf16.mxu0 0
      %2465 = vmatpush2.bf16.msra.mxu0 0
      %2466 = vmatprep.mubr.bf16.mxu0 0
      %2467 = vmatmul.mubr.bf16.gmra.mxu0 %v2383
      %v2468 = vpop.f32.mrf.mxu0
      %v2469 = vadd.f32 0.0, %v2468
      %v2470 = vpop.f32.mrf.mxu0
      %v2471 = vpop.f32.mrf.mxu0
      %v2472 = vadd.f32 0.0, %v2471
      %v2473 = vpop.f32.mrf.mxu0
      %2474 = vmatprep.mubr.bf16.mxu0 0
      %2475 = vmatmul.mubr.bf16.gmra.mxu0 %v2386
      %v2476 = vpop.f32.mrf.mxu0
      %v2477 = vadd.f32 0.0, %v2476
      %v2478 = vpop.f32.mrf.mxu0
      %v2479 = vpop.f32.mrf.mxu0
      %v2480 = vadd.f32 0.0, %v2479
      %v2481 = vpop.f32.mrf.mxu0
      %2482 = vmatprep.mubr.bf16.mxu0 0
      %2483 = vmatmul.mubr.bf16.gmra.mxu0 %v2389
      %v2484 = vpop.f32.mrf.mxu0
      %v2485 = vadd.f32 0.0, %v2484
      %v2486 = vpop.f32.mrf.mxu0
      %v2487 = vpop.f32.mrf.mxu0
      %v2488 = vadd.f32 0.0, %v2487
      %v2489 = vpop.f32.mrf.mxu0
      %2490 = vmatprep.mubr.bf16.mxu0 0
      %2491 = vmatmul.mubr.bf16.gmra.mxu0 %v2392
      %v2492 = vpop.f32.mrf.mxu0
      %v2493 = vadd.f32 0.0, %v2492
      %v2494 = vpop.f32.mrf.mxu0
      %v2495 = vpop.f32.mrf.mxu0
      %v2496 = vadd.f32 0.0, %v2495
      %v2497 = vpop.f32.mrf.mxu0
      %2498 = vmatprep.mubr.bf16.mxu0 0
      %2499 = vmatmul.mubr.bf16.gmra.mxu0 %v2395
      %v2500 = vpop.f32.mrf.mxu0
      %v2501 = vadd.f32 0.0, %v2500
      %v2502 = vpop.f32.mrf.mxu0
      %v2503 = vpop.f32.mrf.mxu0
      %v2504 = vadd.f32 0.0, %v2503
      %v2505 = vpop.f32.mrf.mxu0
      %2506 = vmatprep.mubr.bf16.mxu0 0
      %2507 = vmatmul.mubr.bf16.gmra.mxu0 %v2398
      %v2508 = vpop.f32.mrf.mxu0
      %v2509 = vadd.f32 0.0, %v2508
      %v2510 = vpop.f32.mrf.mxu0
      %v2511 = vpop.f32.mrf.mxu0
      %v2512 = vadd.f32 0.0, %v2511
      %v2513 = vpop.f32.mrf.mxu0
      %2514 = vmatprep.mubr.bf16.mxu0 0
      %2515 = vmatmul.mubr.bf16.gmra.mxu0 %v2401
      %v2516 = vpop.f32.mrf.mxu0
      %v2517 = vadd.f32 0.0, %v2516
      %v2518 = vpop.f32.mrf.mxu0
      %v2519 = vpop.f32.mrf.mxu0
      %v2520 = vadd.f32 0.0, %v2519
      %v2521 = vpop.f32.mrf.mxu0
      %2522 = vmatprep.mubr.bf16.mxu0 0
      %2523 = vmatmul.mubr.bf16.gmra.mxu0 %v2404
      %v2524 = vpop.f32.mrf.mxu0
      %v2525 = vadd.f32 0.0, %v2524
      %v2526 = vpop.f32.mrf.mxu0
      %v2527 = vpop.f32.mrf.mxu0
      %v2528 = vadd.f32 0.0, %v2527
      %v2529 = vpop.f32.mrf.mxu0
      %2530 = vmatprep.mubr.bf16.mxu0 0
      %2531 = vmatmul.mubr.bf16.gmra.mxu0 %v2407
      %v2532 = vpop.f32.mrf.mxu0
      %v2533 = vadd.f32 0.0, %v2532
      %v2534 = vpop.f32.mrf.mxu0
      %v2535 = vpop.f32.mrf.mxu0
      %v2536 = vadd.f32 0.0, %v2535
      %v2537 = vpop.f32.mrf.mxu0
      %2538 = vmatprep.mubr.bf16.mxu0 0
      %2539 = vmatmul.mubr.bf16.gmra.mxu0 %v2410
      %v2540 = vpop.f32.mrf.mxu0
      %v2541 = vadd.f32 0.0, %v2540
      %v2542 = vpop.f32.mrf.mxu0
      %v2543 = vpop.f32.mrf.mxu0
      %v2544 = vadd.f32 0.0, %v2543
      %v2545 = vpop.f32.mrf.mxu0
      %2546 = vmatprep.mubr.bf16.mxu0 0
      %2547 = vmatmul.mubr.bf16.gmra.mxu0 %v2413
      %v2548 = vpop.f32.mrf.mxu0
      %v2549 = vadd.f32 0.0, %v2548
      %v2550 = vpop.f32.mrf.mxu0
      %v2551 = vpop.f32.mrf.mxu0
      %v2552 = vadd.f32 0.0, %v2551
      %v2553 = vpop.f32.mrf.mxu0
      %2554 = vmatprep.mubr.bf16.mxu0 0
      %2555 = vmatmul.mubr.bf16.gmra.mxu0 %v2416
      %v2556 = vpop.f32.mrf.mxu0
      %v2557 = vadd.f32 0.0, %v2556
      %v2558 = vpop.f32.mrf.mxu0
      %v2559 = vpop.f32.mrf.mxu0
      %v2560 = vadd.f32 0.0, %v2559
      %v2561 = vpop.f32.mrf.mxu0
      %2562 = vmatprep.mubr.bf16.mxu0 0
      %2563 = vmatmul.mubr.bf16.gmra.mxu0 %v2419
      %v2564 = vpop.f32.mrf.mxu0
      %v2565 = vadd.f32 0.0, %v2564
      %v2566 = vpop.f32.mrf.mxu0
      %v2567 = vpop.f32.mrf.mxu0
      %v2568 = vadd.f32 0.0, %v2567
      %v2569 = vpop.f32.mrf.mxu0
      %2570 = vmatprep.mubr.bf16.mxu0 0
      %2571 = vmatmul.mubr.bf16.gmra.mxu0 %v2422
      %v2572 = vpop.f32.mrf.mxu0
      %v2573 = vadd.f32 0.0, %v2572
      %v2574 = vpop.f32.mrf.mxu0
      %v2575 = vpop.f32.mrf.mxu0
      %v2576 = vadd.f32 0.0, %v2575
      %v2577 = vpop.f32.mrf.mxu0
      %2578 = vmatprep.mubr.bf16.mxu0 0
      %2579 = vmatmul.mubr.bf16.gmra.mxu0 %v2425
      %v2580 = vpop.f32.mrf.mxu0
      %v2581 = vadd.f32 0.0, %v2580
      %v2582 = vpop.f32.mrf.mxu0
      %v2583 = vpop.f32.mrf.mxu0
      %v2584 = vadd.f32 0.0, %v2583
      %v2585 = vpop.f32.mrf.mxu0
      %2586 = vmatprep.mubr.bf16.mxu0 0
      %2587 = vmatmul.mubr.bf16.gmra.mxu0 %v2428
      %v2588 = vpop.f32.mrf.mxu0
      %v2589 = vadd.f32 0.0, %v2588
      %v2590 = vpop.f32.mrf.mxu0
      %v2591 = vpop.f32.mrf.mxu0
      %v2592 = vadd.f32 0.0, %v2591
      %v2593 = vpop.f32.mrf.mxu0
      %2594 = vdwg.mxu0
      %v2595 = vsub.f32 %v2059, %v2469
      %v2596 = vsub.f32 %v2060, %v2472
      %v2597 = vsub.f32 %v2061, %v2477
      %v2598 = vsub.f32 %v2062, %v2480
      %v2599 = vsub.f32 %v2063, %v2485
      %v2600 = vsub.f32 %v2064, %v2488
      %v2601 = vsub.f32 %v2065, %v2493
      %v2602 = vsub.f32 %v2066, %v2496
      %v2603 = vsub.f32 %v2067, %v2501
      %v2604 = vsub.f32 %v2068, %v2504
      %v2605 = vsub.f32 %v2069, %v2509
      %v2606 = vsub.f32 %v2070, %v2512
      %v2607 = vsub.f32 %v2071, %v2517
      %v2608 = vsub.f32 %v2072, %v2520
      %v2609 = vsub.f32 %v2073, %v2525
      %v2610 = vsub.f32 %v2074, %v2528
      %v2611 = vsub.f32 %v2075, %v2533
      %v2612 = vsub.f32 %v2076, %v2536
      %v2613 = vsub.f32 %v2077, %v2541
      %v2614 = vsub.f32 %v2078, %v2544
      %v2615 = vsub.f32 %v2079, %v2549
      %v2616 = vsub.f32 %v2080, %v2552
      %v2617 = vsub.f32 %v2081, %v2557
      %v2618 = vsub.f32 %v2082, %v2560
      %v2619 = vsub.f32 %v2083, %v2565
      %v2620 = vsub.f32 %v2084, %v2568
      %v2621 = vsub.f32 %v2085, %v2573
      %v2622 = vsub.f32 %v2086, %v2576
      %v2623 = vsub.f32 %v2087, %v2581
      %v2624 = vsub.f32 %v2088, %v2584
      %v2625 = vsub.f32 %v2089, %v2589
      %v2626 = vsub.f32 %v2090, %v2592
      %v2627 = vmul.f32 %v2595, %v2595
      %v2628 = vmul.f32 %v2596, %v2596
      %v2629 = vmul.f32 %v2597, %v2597
      %v2630 = vmul.f32 %v2598, %v2598
      %v2631 = vmul.f32 %v2599, %v2599
      %v2632 = vmul.f32 %v2600, %v2600
      %v2633 = vmul.f32 %v2601, %v2601
      %v2634 = vmul.f32 %v2602, %v2602
      %v2635 = vmul.f32 %v2603, %v2603
      %v2636 = vmul.f32 %v2604, %v2604
      %v2637 = vmul.f32 %v2605, %v2605
      %v2638 = vmul.f32 %v2606, %v2606
      %v2639 = vmul.f32 %v2607, %v2607
      %v2640 = vmul.f32 %v2608, %v2608
      %v2641 = vmul.f32 %v2609, %v2609
      %v2642 = vmul.f32 %v2610, %v2610
      %v2643 = vmul.f32 %v2611, %v2611
      %v2644 = vmul.f32 %v2612, %v2612
      %v2645 = vmul.f32 %v2613, %v2613
      %v2646 = vmul.f32 %v2614, %v2614
      %v2647 = vmul.f32 %v2615, %v2615
      %v2648 = vmul.f32 %v2616, %v2616
      %v2649 = vmul.f32 %v2617, %v2617
      %v2650 = vmul.f32 %v2618, %v2618
      %v2651 = vmul.f32 %v2619, %v2619
      %v2652 = vmul.f32 %v2620, %v2620
      %v2653 = vmul.f32 %v2621, %v2621
      %v2654 = vmul.f32 %v2622, %v2622
      %v2655 = vmul.f32 %v2623, %v2623
      %v2656 = vmul.f32 %v2624, %v2624
      %v2657 = vmul.f32 %v2625, %v2625
      %v2658 = vmul.f32 %v2626, %v2626
      %v2659 = vpack.c.bf16 %v2628, %v2627
      %v2660 = vpack.c.bf16 %v2630, %v2629
      %v2661 = vpack.c.bf16 %v2632, %v2631
      %v2662 = vpack.c.bf16 %v2634, %v2633
      %v2663 = vpack.c.bf16 %v2636, %v2635
      %v2664 = vpack.c.bf16 %v2638, %v2637
      %v2665 = vpack.c.bf16 %v2640, %v2639
      %v2666 = vpack.c.bf16 %v2642, %v2641
      %v2667 = vpack.c.bf16 %v2644, %v2643
      %v2668 = vpack.c.bf16 %v2646, %v2645
      %v2669 = vpack.c.bf16 %v2648, %v2647
      %v2670 = vpack.c.bf16 %v2650, %v2649
      %v2671 = vpack.c.bf16 %v2652, %v2651
      %v2672 = vpack.c.bf16 %v2654, %v2653
      %v2673 = vpack.c.bf16 %v2656, %v2655
      %v2674 = vpack.c.bf16 %v2658, %v2657
      %2675 = vmatprep.subr.bf16.mxu0 0
      %2676 = vmatpush1.bf16.msra.mxu0 %v2163
      %2677 = vmatprep.subr.bf16.mxu0 0
      %2678 = vmatpush1.bf16.msra.mxu0 %v2162
      %2679 = vmatprep.subr.bf16.mxu0 0
      %2680 = vmatpush1.bf16.msra.mxu0 %v2161
      %2681 = vmatprep.subr.bf16.mxu0 0
      %2682 = vmatpush1.bf16.msra.mxu0 %v2160
      %2683 = vmatprep.subr.bf16.mxu0 0
      %2684 = vmatpush1.bf16.msra.mxu0 %v2159
      %2685 = vmatprep.subr.bf16.mxu0 0
      %2686 = vmatpush1.bf16.msra.mxu0 %v2158
      %2687 = vmatprep.subr.bf16.mxu0 0
      %2688 = vmatpush1.bf16.msra.mxu0 %v2157
      %2689 = vmatprep.subr.bf16.mxu0 0
      %2690 = vmatpush1.bf16.msra.mxu0 %v2156
      %2691 = vmatprep.subr.bf16.mxu0 0
      %2692 = vmatpush2.bf16.msra.mxu0 0
      %2693 = vmatprep.subr.bf16.mxu0 0
      %2694 = vmatpush2.bf16.msra.mxu0 0
      %2695 = vmatprep.subr.bf16.mxu0 0
      %2696 = vmatpush2.bf16.msra.mxu0 0
      %2697 = vmatprep.subr.bf16.mxu0 0
      %2698 = vmatpush2.bf16.msra.mxu0 0
      %2699 = vmatprep.subr.bf16.mxu0 0
      %2700 = vmatpush2.bf16.msra.mxu0 0
      %2701 = vmatprep.subr.bf16.mxu0 0
      %2702 = vmatpush2.bf16.msra.mxu0 0
      %2703 = vmatprep.subr.bf16.mxu0 0
      %2704 = vmatpush2.bf16.msra.mxu0 0
      %2705 = vmatprep.subr.bf16.mxu0 0
      %2706 = vmatpush2.bf16.msra.mxu0 0
      %2707 = vmatprep.mubr.bf16.mxu0 0
      %2708 = vmatmul.mubr.bf16.gmra.mxu0 %v2659
      %v2709 = vpop.f32.mrf.mxu0
      %v2710 = vadd.f32 0.0, %v2709
      %v2711 = vpop.f32.mrf.mxu0
      %v2712 = vpop.f32.mrf.mxu0
      %v2713 = vadd.f32 0.0, %v2712
      %v2714 = vpop.f32.mrf.mxu0
      %2715 = vmatprep.mubr.bf16.mxu0 0
      %2716 = vmatmul.mubr.bf16.gmra.mxu0 %v2660
      %v2717 = vpop.f32.mrf.mxu0
      %v2718 = vadd.f32 0.0, %v2717
      %v2719 = vpop.f32.mrf.mxu0
      %v2720 = vpop.f32.mrf.mxu0
      %v2721 = vadd.f32 0.0, %v2720
      %v2722 = vpop.f32.mrf.mxu0
      %2723 = vmatprep.mubr.bf16.mxu0 0
      %2724 = vmatmul.mubr.bf16.gmra.mxu0 %v2661
      %v2725 = vpop.f32.mrf.mxu0
      %v2726 = vadd.f32 0.0, %v2725
      %v2727 = vpop.f32.mrf.mxu0
      %v2728 = vpop.f32.mrf.mxu0
      %v2729 = vadd.f32 0.0, %v2728
      %v2730 = vpop.f32.mrf.mxu0
      %2731 = vmatprep.mubr.bf16.mxu0 0
      %2732 = vmatmul.mubr.bf16.gmra.mxu0 %v2662
      %v2733 = vpop.f32.mrf.mxu0
      %v2734 = vadd.f32 0.0, %v2733
      %v2735 = vpop.f32.mrf.mxu0
      %v2736 = vpop.f32.mrf.mxu0
      %v2737 = vadd.f32 0.0, %v2736
      %v2738 = vpop.f32.mrf.mxu0
      %2739 = vmatprep.mubr.bf16.mxu0 0
      %2740 = vmatmul.mubr.bf16.gmra.mxu0 %v2663
      %v2741 = vpop.f32.mrf.mxu0
      %v2742 = vadd.f32 0.0, %v2741
      %v2743 = vpop.f32.mrf.mxu0
      %v2744 = vpop.f32.mrf.mxu0
      %v2745 = vadd.f32 0.0, %v2744
      %v2746 = vpop.f32.mrf.mxu0
      %2747 = vmatprep.mubr.bf16.mxu0 0
      %2748 = vmatmul.mubr.bf16.gmra.mxu0 %v2664
      %v2749 = vpop.f32.mrf.mxu0
      %v2750 = vadd.f32 0.0, %v2749
      %v2751 = vpop.f32.mrf.mxu0
      %v2752 = vpop.f32.mrf.mxu0
      %v2753 = vadd.f32 0.0, %v2752
      %v2754 = vpop.f32.mrf.mxu0
      %2755 = vmatprep.mubr.bf16.mxu0 0
      %2756 = vmatmul.mubr.bf16.gmra.mxu0 %v2665
      %v2757 = vpop.f32.mrf.mxu0
      %v2758 = vadd.f32 0.0, %v2757
      %v2759 = vpop.f32.mrf.mxu0
      %v2760 = vpop.f32.mrf.mxu0
      %v2761 = vadd.f32 0.0, %v2760
      %v2762 = vpop.f32.mrf.mxu0
      %2763 = vmatprep.mubr.bf16.mxu0 0
      %2764 = vmatmul.mubr.bf16.gmra.mxu0 %v2666
      %v2765 = vpop.f32.mrf.mxu0
      %v2766 = vadd.f32 0.0, %v2765
      %v2767 = vpop.f32.mrf.mxu0
      %v2768 = vpop.f32.mrf.mxu0
      %v2769 = vadd.f32 0.0, %v2768
      %v2770 = vpop.f32.mrf.mxu0
      %2771 = vmatprep.mubr.bf16.mxu0 0
      %2772 = vmatmul.mubr.bf16.gmra.mxu0 %v2667
      %v2773 = vpop.f32.mrf.mxu0
      %v2774 = vadd.f32 0.0, %v2773
      %v2775 = vpop.f32.mrf.mxu0
      %v2776 = vpop.f32.mrf.mxu0
      %v2777 = vadd.f32 0.0, %v2776
      %v2778 = vpop.f32.mrf.mxu0
      %2779 = vmatprep.mubr.bf16.mxu0 0
      %2780 = vmatmul.mubr.bf16.gmra.mxu0 %v2668
      %v2781 = vpop.f32.mrf.mxu0
      %v2782 = vadd.f32 0.0, %v2781
      %v2783 = vpop.f32.mrf.mxu0
      %v2784 = vpop.f32.mrf.mxu0
      %v2785 = vadd.f32 0.0, %v2784
      %v2786 = vpop.f32.mrf.mxu0
      %2787 = vmatprep.mubr.bf16.mxu0 0
      %2788 = vmatmul.mubr.bf16.gmra.mxu0 %v2669
      %v2789 = vpop.f32.mrf.mxu0
      %v2790 = vadd.f32 0.0, %v2789
      %v2791 = vpop.f32.mrf.mxu0
      %v2792 = vpop.f32.mrf.mxu0
      %v2793 = vadd.f32 0.0, %v2792
      %v2794 = vpop.f32.mrf.mxu0
      %2795 = vmatprep.mubr.bf16.mxu0 0
      %2796 = vmatmul.mubr.bf16.gmra.mxu0 %v2670
      %v2797 = vpop.f32.mrf.mxu0
      %v2798 = vadd.f32 0.0, %v2797
      %v2799 = vpop.f32.mrf.mxu0
      %v2800 = vpop.f32.mrf.mxu0
      %v2801 = vadd.f32 0.0, %v2800
      %v2802 = vpop.f32.mrf.mxu0
      %2803 = vmatprep.mubr.bf16.mxu0 0
      %2804 = vmatmul.mubr.bf16.gmra.mxu0 %v2671
      %v2805 = vpop.f32.mrf.mxu0
      %v2806 = vadd.f32 0.0, %v2805
      %v2807 = vpop.f32.mrf.mxu0
      %v2808 = vpop.f32.mrf.mxu0
      %v2809 = vadd.f32 0.0, %v2808
      %v2810 = vpop.f32.mrf.mxu0
      %2811 = vmatprep.mubr.bf16.mxu0 0
      %2812 = vmatmul.mubr.bf16.gmra.mxu0 %v2672
      %v2813 = vpop.f32.mrf.mxu0
      %v2814 = vadd.f32 0.0, %v2813
      %v2815 = vpop.f32.mrf.mxu0
      %v2816 = vpop.f32.mrf.mxu0
      %v2817 = vadd.f32 0.0, %v2816
      %v2818 = vpop.f32.mrf.mxu0
      %2819 = vmatprep.mubr.bf16.mxu0 0
      %2820 = vmatmul.mubr.bf16.gmra.mxu0 %v2673
      %v2821 = vpop.f32.mrf.mxu0
      %v2822 = vadd.f32 0.0, %v2821
      %v2823 = vpop.f32.mrf.mxu0
      %v2824 = vpop.f32.mrf.mxu0
      %v2825 = vadd.f32 0.0, %v2824
      %v2826 = vpop.f32.mrf.mxu0
      %2827 = vmatprep.mubr.bf16.mxu0 0
      %2828 = vmatmul.mubr.bf16.gmra.mxu0 %v2674
      %v2829 = vpop.f32.mrf.mxu0
      %v2830 = vadd.f32 0.0, %v2829
      %v2831 = vpop.f32.mrf.mxu0
      %v2832 = vpop.f32.mrf.mxu0
      %v2833 = vadd.f32 0.0, %v2832
      %v2834 = vpop.f32.mrf.mxu0
      %2835 = vdwg.mxu0
      %v2836 = vmul.f32 %v2710, 0.03125
      %v2837 = vmul.f32 %v2713, 0.03125
      %v2838 = vmul.f32 %v2718, 0.03125
      %v2839 = vmul.f32 %v2721, 0.03125
      %v2840 = vmul.f32 %v2726, 0.03125
      %v2841 = vmul.f32 %v2729, 0.03125
      %v2842 = vmul.f32 %v2734, 0.03125
      %v2843 = vmul.f32 %v2737, 0.03125
      %v2844 = vmul.f32 %v2742, 0.03125
      %v2845 = vmul.f32 %v2745, 0.03125
      %v2846 = vmul.f32 %v2750, 0.03125
      %v2847 = vmul.f32 %v2753, 0.03125
      %v2848 = vmul.f32 %v2758, 0.03125
      %v2849 = vmul.f32 %v2761, 0.03125
      %v2850 = vmul.f32 %v2766, 0.03125
      %v2851 = vmul.f32 %v2769, 0.03125
      %v2852 = vmul.f32 %v2774, 0.03125
      %v2853 = vmul.f32 %v2777, 0.03125
      %v2854 = vmul.f32 %v2782, 0.03125
      %v2855 = vmul.f32 %v2785, 0.03125
      %v2856 = vmul.f32 %v2790, 0.03125
      %v2857 = vmul.f32 %v2793, 0.03125
      %v2858 = vmul.f32 %v2798, 0.03125
      %v2859 = vmul.f32 %v2801, 0.03125
      %v2860 = vmul.f32 %v2806, 0.03125
      %v2861 = vmul.f32 %v2809, 0.03125
      %v2862 = vmul.f32 %v2814, 0.03125
      %v2863 = vmul.f32 %v2817, 0.03125
      %v2864 = vmul.f32 %v2822, 0.03125
      %v2865 = vmul.f32 %v2825, 0.03125
      %v2866 = vmul.f32 %v2830, 0.03125
      %v2867 = vmul.f32 %v2833, 0.03125
      %v2868 = vadd.f32 %v2836, 1e-05
      %v2869 = vadd.f32 %v2837, 1e-05
      %v2870 = vadd.f32 %v2838, 1e-05
      %v2871 = vadd.f32 %v2839, 1e-05
      %v2872 = vadd.f32 %v2840, 1e-05
      %v2873 = vadd.f32 %v2841, 1e-05
      %v2874 = vadd.f32 %v2842, 1e-05
      %v2875 = vadd.f32 %v2843, 1e-05
      %v2876 = vadd.f32 %v2844, 1e-05
      %v2877 = vadd.f32 %v2845, 1e-05
      %v2878 = vadd.f32 %v2846, 1e-05
      %v2879 = vadd.f32 %v2847, 1e-05
      %v2880 = vadd.f32 %v2848, 1e-05
      %v2881 = vadd.f32 %v2849, 1e-05
      %v2882 = vadd.f32 %v2850, 1e-05
      %v2883 = vadd.f32 %v2851, 1e-05
      %v2884 = vadd.f32 %v2852, 1e-05
      %v2885 = vadd.f32 %v2853, 1e-05
      %v2886 = vadd.f32 %v2854, 1e-05
      %v2887 = vadd.f32 %v2855, 1e-05
      %v2888 = vadd.f32 %v2856, 1e-05
      %v2889 = vadd.f32 %v2857, 1e-05
      %v2890 = vadd.f32 %v2858, 1e-05
      %v2891 = vadd.f32 %v2859, 1e-05
      %v2892 = vadd.f32 %v2860, 1e-05
      %v2893 = vadd.f32 %v2861, 1e-05
      %v2894 = vadd.f32 %v2862, 1e-05
      %v2895 = vadd.f32 %v2863, 1e-05
      %v2896 = vadd.f32 %v2864, 1e-05
      %v2897 = vadd.f32 %v2865, 1e-05
      %v2898 = vadd.f32 %v2866, 1e-05
      %v2899 = vadd.f32 %v2867, 1e-05
      %v2900 = vrsqrt.pop %v2868
      %v2901 = vrsqrt.pop %v2869
      %v2902 = vrsqrt.pop %v2870
      %v2903 = vrsqrt.pop %v2871
      %v2904 = vrsqrt.pop %v2872
      %v2905 = vrsqrt.pop %v2873
      %v2906 = vrsqrt.pop %v2874
      %v2907 = vrsqrt.pop %v2875
      %v2908 = vrsqrt.pop %v2876
      %v2909 = vrsqrt.pop %v2877
      %v2910 = vrsqrt.pop %v2878
      %v2911 = vrsqrt.pop %v2879
      %v2912 = vrsqrt.pop %v2880
      %v2913 = vrsqrt.pop %v2881
      %v2914 = vrsqrt.pop %v2882
      %v2915 = vrsqrt.pop %v2883
      %v2916 = vrsqrt.pop %v2884
      %v2917 = vrsqrt.pop %v2885
      %v2918 = vrsqrt.pop %v2886
      %v2919 = vrsqrt.pop %v2887
      %v2920 = vrsqrt.pop %v2888
      %v2921 = vrsqrt.pop %v2889
      %v2922 = vrsqrt.pop %v2890
      %v2923 = vrsqrt.pop %v2891
      %v2924 = vrsqrt.pop %v2892
      %v2925 = vrsqrt.pop %v2893
      %v2926 = vrsqrt.pop %v2894
      %v2927 = vrsqrt.pop %v2895
      %v2928 = vrsqrt.pop %v2896
      %v2929 = vrsqrt.pop %v2897
      %v2930 = vrsqrt.pop %v2898
      %v2931 = vrsqrt.pop %v2899
      %v2932 = vpack.c.bf16 %v2901, %v2900
      %v2933 = vpack.c.bf16 %v2903, %v2902
      %v2934 = vpack.c.bf16 %v2905, %v2904
      %v2935 = vpack.c.bf16 %v2907, %v2906
      %v2936 = vpack.c.bf16 %v2909, %v2908
      %v2937 = vpack.c.bf16 %v2911, %v2910
      %v2938 = vpack.c.bf16 %v2913, %v2912
      %v2939 = vpack.c.bf16 %v2915, %v2914
      %v2940 = vpack.c.bf16 %v2917, %v2916
      %v2941 = vpack.c.bf16 %v2919, %v2918
      %v2942 = vpack.c.bf16 %v2921, %v2920
      %v2943 = vpack.c.bf16 %v2923, %v2922
      %v2944 = vpack.c.bf16 %v2925, %v2924
      %v2945 = vpack.c.bf16 %v2927, %v2926
      %v2946 = vpack.c.bf16 %v2929, %v2928
      %v2947 = vpack.c.bf16 %v2931, %v2930
      %v2949 = vsel %vm2381, %v2932, 0
      %v2952 = vsel %vm2381, %v2933, 0
      %v2955 = vsel %vm2381, %v2934, 0
      %v2958 = vsel %vm2381, %v2935, 0
      %v2961 = vsel %vm2381, %v2936, 0
      %v2964 = vsel %vm2381, %v2937, 0
      %v2967 = vsel %vm2381, %v2938, 0
      %v2970 = vsel %vm2381, %v2939, 0
      %v2973 = vsel %vm2381, %v2940, 0
      %v2976 = vsel %vm2381, %v2941, 0
      %v2979 = vsel %vm2381, %v2942, 0
      %v2982 = vsel %vm2381, %v2943, 0
      %v2985 = vsel %vm2381, %v2944, 0
      %v2988 = vsel %vm2381, %v2945, 0
      %v2991 = vsel %vm2381, %v2946, 0
      %v2994 = vsel %vm2381, %v2947, 0
      %2996 = vmatprep.subr.bf16.mxu0 0
      %2997 = vmatpush1.bf16.msra.mxu0 0
      %2998 = vmatprep.subr.bf16.mxu0 0
      %2999 = vmatpush1.bf16.msra.mxu0 0
      %3000 = vmatprep.subr.bf16.mxu0 0
      %3001 = vmatpush1.bf16.msra.mxu0 0
      %3002 = vmatprep.subr.bf16.mxu0 0
      %3003 = vmatpush1.bf16.msra.mxu0 0
      %3004 = vmatprep.subr.bf16.mxu0 0
      %3005 = vmatpush1.bf16.msra.mxu0 0
      %3006 = vmatprep.subr.bf16.mxu0 0
      %3007 = vmatpush1.bf16.msra.mxu0 0
      %3008 = vmatprep.subr.bf16.mxu0 0
      %3009 = vmatpush1.bf16.msra.mxu0 0
      %3010 = vmatprep.subr.bf16.mxu0 0
      %3011 = vmatpush1.bf16.msra.mxu0 %v2432
      %3012 = vmatprep.subr.bf16.mxu0 0
      %3013 = vmatpush2.bf16.msra.mxu0 0
      %3014 = vmatprep.subr.bf16.mxu0 0
      %3015 = vmatpush2.bf16.msra.mxu0 0
      %3016 = vmatprep.subr.bf16.mxu0 0
      %3017 = vmatpush2.bf16.msra.mxu0 0
      %3018 = vmatprep.subr.bf16.mxu0 0
      %3019 = vmatpush2.bf16.msra.mxu0 0
      %3020 = vmatprep.subr.bf16.mxu0 0
      %3021 = vmatpush2.bf16.msra.mxu0 0
      %3022 = vmatprep.subr.bf16.mxu0 0
      %3023 = vmatpush2.bf16.msra.mxu0 0
      %3024 = vmatprep.subr.bf16.mxu0 0
      %3025 = vmatpush2.bf16.msra.mxu0 0
      %3026 = vmatprep.subr.bf16.mxu0 0
      %3027 = vmatpush2.bf16.msra.mxu0 0
      %3028 = vmatprep.mubr.bf16.mxu0 0
      %3029 = vmatmul.mubr.bf16.gmra.mxu0 %v2949
      %v3030 = vpop.f32.mrf.mxu0
      %v3031 = vadd.f32 0.0, %v3030
      %v3032 = vpop.f32.mrf.mxu0
      %v3033 = vpop.f32.mrf.mxu0
      %v3034 = vadd.f32 0.0, %v3033
      %v3035 = vpop.f32.mrf.mxu0
      %3036 = vmatprep.mubr.bf16.mxu0 0
      %3037 = vmatmul.mubr.bf16.gmra.mxu0 %v2952
      %v3038 = vpop.f32.mrf.mxu0
      %v3039 = vadd.f32 0.0, %v3038
      %v3040 = vpop.f32.mrf.mxu0
      %v3041 = vpop.f32.mrf.mxu0
      %v3042 = vadd.f32 0.0, %v3041
      %v3043 = vpop.f32.mrf.mxu0
      %3044 = vmatprep.mubr.bf16.mxu0 0
      %3045 = vmatmul.mubr.bf16.gmra.mxu0 %v2955
      %v3046 = vpop.f32.mrf.mxu0
      %v3047 = vadd.f32 0.0, %v3046
      %v3048 = vpop.f32.mrf.mxu0
      %v3049 = vpop.f32.mrf.mxu0
      %v3050 = vadd.f32 0.0, %v3049
      %v3051 = vpop.f32.mrf.mxu0
      %3052 = vmatprep.mubr.bf16.mxu0 0
      %3053 = vmatmul.mubr.bf16.gmra.mxu0 %v2958
      %v3054 = vpop.f32.mrf.mxu0
      %v3055 = vadd.f32 0.0, %v3054
      %v3056 = vpop.f32.mrf.mxu0
      %v3057 = vpop.f32.mrf.mxu0
      %v3058 = vadd.f32 0.0, %v3057
      %v3059 = vpop.f32.mrf.mxu0
      %3060 = vmatprep.mubr.bf16.mxu0 0
      %3061 = vmatmul.mubr.bf16.gmra.mxu0 %v2961
      %v3062 = vpop.f32.mrf.mxu0
      %v3063 = vadd.f32 0.0, %v3062
      %v3064 = vpop.f32.mrf.mxu0
      %v3065 = vpop.f32.mrf.mxu0
      %v3066 = vadd.f32 0.0, %v3065
      %v3067 = vpop.f32.mrf.mxu0
      %3068 = vmatprep.mubr.bf16.mxu0 0
      %3069 = vmatmul.mubr.bf16.gmra.mxu0 %v2964
      %v3070 = vpop.f32.mrf.mxu0
      %v3071 = vadd.f32 0.0, %v3070
      %v3072 = vpop.f32.mrf.mxu0
      %v3073 = vpop.f32.mrf.mxu0
      %v3074 = vadd.f32 0.0, %v3073
      %v3075 = vpop.f32.mrf.mxu0
      %3076 = vmatprep.mubr.bf16.mxu0 0
      %3077 = vmatmul.mubr.bf16.gmra.mxu0 %v2967
      %v3078 = vpop.f32.mrf.mxu0
      %v3079 = vadd.f32 0.0, %v3078
      %v3080 = vpop.f32.mrf.mxu0
      %v3081 = vpop.f32.mrf.mxu0
      %v3082 = vadd.f32 0.0, %v3081
      %v3083 = vpop.f32.mrf.mxu0
      %3084 = vmatprep.mubr.bf16.mxu0 0
      %3085 = vmatmul.mubr.bf16.gmra.mxu0 %v2970
      %v3086 = vpop.f32.mrf.mxu0
      %v3087 = vadd.f32 0.0, %v3086
      %v3088 = vpop.f32.mrf.mxu0
      %v3089 = vpop.f32.mrf.mxu0
      %v3090 = vadd.f32 0.0, %v3089
      %v3091 = vpop.f32.mrf.mxu0
      %3092 = vmatprep.mubr.bf16.mxu0 0
      %3093 = vmatmul.mubr.bf16.gmra.mxu0 %v2973
      %v3094 = vpop.f32.mrf.mxu0
      %v3095 = vadd.f32 0.0, %v3094
      %v3096 = vpop.f32.mrf.mxu0
      %v3097 = vpop.f32.mrf.mxu0
      %v3098 = vadd.f32 0.0, %v3097
      %v3099 = vpop.f32.mrf.mxu0
      %3100 = vmatprep.mubr.bf16.mxu0 0
      %3101 = vmatmul.mubr.bf16.gmra.mxu0 %v2976
      %v3102 = vpop.f32.mrf.mxu0
      %v3103 = vadd.f32 0.0, %v3102
      %v3104 = vpop.f32.mrf.mxu0
      %v3105 = vpop.f32.mrf.mxu0
      %v3106 = vadd.f32 0.0, %v3105
      %v3107 = vpop.f32.mrf.mxu0
      %3108 = vmatprep.mubr.bf16.mxu0 0
      %3109 = vmatmul.mubr.bf16.gmra.mxu0 %v2979
      %v3110 = vpop.f32.mrf.mxu0
      %v3111 = vadd.f32 0.0, %v3110
      %v3112 = vpop.f32.mrf.mxu0
      %v3113 = vpop.f32.mrf.mxu0
      %v3114 = vadd.f32 0.0, %v3113
      %v3115 = vpop.f32.mrf.mxu0
      %3116 = vmatprep.mubr.bf16.mxu0 0
      %3117 = vmatmul.mubr.bf16.gmra.mxu0 %v2982
      %v3118 = vpop.f32.mrf.mxu0
      %v3119 = vadd.f32 0.0, %v3118
      %v3120 = vpop.f32.mrf.mxu0
      %v3121 = vpop.f32.mrf.mxu0
      %v3122 = vadd.f32 0.0, %v3121
      %v3123 = vpop.f32.mrf.mxu0
      %3124 = vmatprep.mubr.bf16.mxu0 0
      %3125 = vmatmul.mubr.bf16.gmra.mxu0 %v2985
      %v3126 = vpop.f32.mrf.mxu0
      %v3127 = vadd.f32 0.0, %v3126
      %v3128 = vpop.f32.mrf.mxu0
      %v3129 = vpop.f32.mrf.mxu0
      %v3130 = vadd.f32 0.0, %v3129
      %v3131 = vpop.f32.mrf.mxu0
      %3132 = vmatprep.mubr.bf16.mxu0 0
      %3133 = vmatmul.mubr.bf16.gmra.mxu0 %v2988
      %v3134 = vpop.f32.mrf.mxu0
      %v3135 = vadd.f32 0.0, %v3134
      %v3136 = vpop.f32.mrf.mxu0
      %v3137 = vpop.f32.mrf.mxu0
      %v3138 = vadd.f32 0.0, %v3137
      %v3139 = vpop.f32.mrf.mxu0
      %3140 = vmatprep.mubr.bf16.mxu0 0
      %3141 = vmatmul.mubr.bf16.gmra.mxu0 %v2991
      %v3142 = vpop.f32.mrf.mxu0
      %v3143 = vadd.f32 0.0, %v3142
      %v3144 = vpop.f32.mrf.mxu0
      %v3145 = vpop.f32.mrf.mxu0
      %v3146 = vadd.f32 0.0, %v3145
      %v3147 = vpop.f32.mrf.mxu0
      %3148 = vmatprep.mubr.bf16.mxu0 0
      %3149 = vmatmul.mubr.bf16.gmra.mxu0 %v2994
      %v3150 = vpop.f32.mrf.mxu0
      %v3151 = vadd.f32 0.0, %v3150
      %v3152 = vpop.f32.mrf.mxu0
      %v3153 = vpop.f32.mrf.mxu0
      %v3154 = vadd.f32 0.0, %v3153
      %v3155 = vpop.f32.mrf.mxu0
      %3156 = vdwg.mxu0
      %v3157 = vmul.f32 %v2595, %v3031
      %v3158 = vmul.f32 %v2596, %v3034
      %v3159 = vmul.f32 %v2597, %v3039
      %v3160 = vmul.f32 %v2598, %v3042
      %v3161 = vmul.f32 %v2599, %v3047
      %v3162 = vmul.f32 %v2600, %v3050
      %v3163 = vmul.f32 %v2601, %v3055
      %v3164 = vmul.f32 %v2602, %v3058
      %v3165 = vmul.f32 %v2603, %v3063
      %v3166 = vmul.f32 %v2604, %v3066
      %v3167 = vmul.f32 %v2605, %v3071
      %v3168 = vmul.f32 %v2606, %v3074
      %v3169 = vmul.f32 %v2607, %v3079
      %v3170 = vmul.f32 %v2608, %v3082
      %v3171 = vmul.f32 %v2609, %v3087
      %v3172 = vmul.f32 %v2610, %v3090
      %v3173 = vmul.f32 %v2611, %v3095
      %v3174 = vmul.f32 %v2612, %v3098
      %v3175 = vmul.f32 %v2613, %v3103
      %v3176 = vmul.f32 %v2614, %v3106
      %v3177 = vmul.f32 %v2615, %v3111
      %v3178 = vmul.f32 %v2616, %v3114
      %v3179 = vmul.f32 %v2617, %v3119
      %v3180 = vmul.f32 %v2618, %v3122
      %v3181 = vmul.f32 %v2619, %v3127
      %v3182 = vmul.f32 %v2620, %v3130
      %v3183 = vmul.f32 %v2621, %v3135
      %v3184 = vmul.f32 %v2622, %v3138
      %v3185 = vmul.f32 %v2623, %v3143
      %v3186 = vmul.f32 %v2624, %v3146
      %v3187 = vmul.f32 %v2625, %v3151
      %v3188 = vmul.f32 %v2626, %v3154
      %v3189 = vld [vmem:[%s9] sm:$0x1]
      %v3191 = vlaneseq
      %v3192 = vshrl.u32 %v3191, 7
      %v3193 = vsub.s32 0, %v3192
      %v3194 = vrot.slane %v3189, %v3193
      %v3196 = vmul.f32 %v3157, %v3194
      %v3197 = vmul.f32 %v3158, %v3194
      %v3198 = vmul.f32 %v3159, %v3194
      %v3199 = vmul.f32 %v3160, %v3194
      %v3200 = vmul.f32 %v3161, %v3194
      %v3201 = vmul.f32 %v3162, %v3194
      %v3202 = vmul.f32 %v3163, %v3194
      %v3203 = vmul.f32 %v3164, %v3194
      %v3204 = vmul.f32 %v3165, %v3194
      %v3205 = vmul.f32 %v3166, %v3194
      %v3206 = vmul.f32 %v3167, %v3194
      %v3207 = vmul.f32 %v3168, %v3194
      %v3208 = vmul.f32 %v3169, %v3194
      %v3209 = vmul.f32 %v3170, %v3194
      %v3210 = vmul.f32 %v3171, %v3194
      %v3211 = vmul.f32 %v3172, %v3194
      %v3212 = vmul.f32 %v3173, %v3194
      %v3213 = vmul.f32 %v3174, %v3194
      %v3214 = vmul.f32 %v3175, %v3194
      %v3215 = vmul.f32 %v3176, %v3194
      %v3216 = vmul.f32 %v3177, %v3194
      %v3217 = vmul.f32 %v3178, %v3194
      %v3218 = vmul.f32 %v3179, %v3194
      %v3219 = vmul.f32 %v3180, %v3194
      %v3220 = vmul.f32 %v3181, %v3194
      %v3221 = vmul.f32 %v3182, %v3194
      %v3222 = vmul.f32 %v3183, %v3194
      %v3223 = vmul.f32 %v3184, %v3194
      %v3224 = vmul.f32 %v3185, %v3194
      %v3225 = vmul.f32 %v3186, %v3194
      %v3226 = vmul.f32 %v3187, %v3194
      %v3227 = vmul.f32 %v3188, %v3194
      %v3228 = vld [vmem:[%s10] sm:$0x1]
      %v3230 = vlaneseq
      %v3231 = vshrl.u32 %v3230, 7
      %v3232 = vsub.s32 0, %v3231
      %v3233 = vrot.slane %v3228, %v3232
      %v3235 = vadd.f32 %v3196, %v3233
      %v3236 = vadd.f32 %v3197, %v3233
      %v3237 = vadd.f32 %v3198, %v3233
      %v3238 = vadd.f32 %v3199, %v3233
      %v3239 = vadd.f32 %v3200, %v3233
      %v3240 = vadd.f32 %v3201, %v3233
      %v3241 = vadd.f32 %v3202, %v3233
      %v3242 = vadd.f32 %v3203, %v3233
      %v3243 = vadd.f32 %v3204, %v3233
      %v3244 = vadd.f32 %v3205, %v3233
      %v3245 = vadd.f32 %v3206, %v3233
      %v3246 = vadd.f32 %v3207, %v3233
      %v3247 = vadd.f32 %v3208, %v3233
      %v3248 = vadd.f32 %v3209, %v3233
      %v3249 = vadd.f32 %v3210, %v3233
      %v3250 = vadd.f32 %v3211, %v3233
      %v3251 = vadd.f32 %v3212, %v3233
      %v3252 = vadd.f32 %v3213, %v3233
      %v3253 = vadd.f32 %v3214, %v3233
      %v3254 = vadd.f32 %v3215, %v3233
      %v3255 = vadd.f32 %v3216, %v3233
      %v3256 = vadd.f32 %v3217, %v3233
      %v3257 = vadd.f32 %v3218, %v3233
      %v3258 = vadd.f32 %v3219, %v3233
      %v3259 = vadd.f32 %v3220, %v3233
      %v3260 = vadd.f32 %v3221, %v3233
      %v3261 = vadd.f32 %v3222, %v3233
      %v3262 = vadd.f32 %v3223, %v3233
      %v3263 = vadd.f32 %v3224, %v3233
      %v3264 = vadd.f32 %v3225, %v3233
      %v3265 = vadd.f32 %v3226, %v3233
      %v3266 = vadd.f32 %v3227, %v3233
      %3267 = vst [vmem:[%s553] sm:$0xff] %v3235
      %3268 = vst [vmem:[%s553 + $0x8] sm:$0xff] %v3236
      %3269 = vst [vmem:[%s553 + $0x10] sm:$0xff] %v3237
      %3270 = vst [vmem:[%s553 + $0x18] sm:$0xff] %v3238
      %3271 = vst [vmem:[%s553 + $0x20] sm:$0xff] %v3239
      %3272 = vst [vmem:[%s553 + $0x28] sm:$0xff] %v3240
      %3273 = vst [vmem:[%s553 + $0x30] sm:$0xff] %v3241
      %3274 = vst [vmem:[%s553 + $0x38] sm:$0xff] %v3242
      %3275 = vst [vmem:[%s553 + $0x40] sm:$0xff] %v3243
      %3276 = vst [vmem:[%s553 + $0x48] sm:$0xff] %v3244
      %3277 = vst [vmem:[%s553 + $0x50] sm:$0xff] %v3245
      %3278 = vst [vmem:[%s553 + $0x58] sm:$0xff] %v3246
      %3279 = vst [vmem:[%s553 + $0x60] sm:$0xff] %v3247
      %3280 = vst [vmem:[%s553 + $0x68] sm:$0xff] %v3248
      %3281 = vst [vmem:[%s553 + $0x70] sm:$0xff] %v3249
      %3282 = vst [vmem:[%s553 + $0x78] sm:$0xff] %v3250
      %3283 = vst [vmem:[%s553 + $0x80] sm:$0xff] %v3251
      %3284 = vst [vmem:[%s553 + $0x88] sm:$0xff] %v3252
      %3285 = vst [vmem:[%s553 + $0x90] sm:$0xff] %v3253
      %3286 = vst [vmem:[%s553 + $0x98] sm:$0xff] %v3254
      %3287 = vst [vmem:[%s553 + $0xa0] sm:$0xff] %v3255
      %3288 = vst [vmem:[%s553 + $0xa8] sm:$0xff] %v3256
      %3289 = vst [vmem:[%s553 + $0xb0] sm:$0xff] %v3257
      %3290 = vst [vmem:[%s553 + $0xb8] sm:$0xff] %v3258
      %3291 = vst [vmem:[%s553 + $0xc0] sm:$0xff] %v3259
      %3292 = vst [vmem:[%s553 + $0xc8] sm:$0xff] %v3260
      %3293 = vst [vmem:[%s553 + $0xd0] sm:$0xff] %v3261
      %3294 = vst [vmem:[%s553 + $0xd8] sm:$0xff] %v3262
      %3295 = vst [vmem:[%s553 + $0xe0] sm:$0xff] %v3263
      %3296 = vst [vmem:[%s553 + $0xe8] sm:$0xff] %v3264
      %3297 = vst [vmem:[%s553 + $0xf0] sm:$0xff] %v3265
      %3298 = vst [vmem:[%s553 + $0xf8] sm:$0xff] %v3266
      %s3299 = smul.u32 16, %s27
      %p3300 = scmp.lt.s32.totalorder %s26, 1
      %s3301 = scalar_select %p3300, %s26, 1
      %p3302 = scmp.lt.s32.totalorder %s3299, 15
      %s3303 = scalar_select %p3302, %s3299, 15
      %s3304 = smul.addr %s3303, 2
      %s3305 = smul.addr %s3301, 32
      %s3306 = sadd.s32 %s3304, %s3305
      %s3307 = smul.addr %s3306, 8
      %s3308 = scalar_lea.vmem %s11, %s3307
      // Predicated region
      $region81: #{_lambda_.1} parent=63 // pred_check
        %p3309 = pneg %p322
      $region82: #{_lambda_.1} parent=63 // pred_check_branch
        %3311 = sbr.rel (%p3309) target = $region84
      $region83: #{_lambda_.1} parent=63 // pred_region
        %s3312 = smul.u32 16, %s27
      $region84: #{_lambda_.1} parent=63 // pred_fallthru
        _
    $region64: #{_lambda_.1} parent=5 // pred_fallthru
      _
    %p3313 = scmp.le.s32.totalorder 2, %s17
    // Predicated region
    $region85: #{_lambda_.1} parent=5 // pred_check
      %p3314 = pneg %p3313
    $region86: #{_lambda_.1} parent=5 // pred_check_branch
      %3316 = sbr.rel (%p3314) target = $region88
    $region87: #{_lambda_.1} parent=5 // pred_region
      %s3317 = ssub.s32 %s17, 2
      // Predicated region
      $region89: #{_lambda_.1} parent=87 // pred_check
        %p3318 = pneg %p328
      $region90: #{_lambda_.1} parent=87 // pred_check_branch
        %3320 = sbr.rel (%p3318) target = $region92
      $region91: #{_lambda_.1} parent=87 // pred_region
        %s3321 = smul.u32 16, %s29
        %p3322 = scmp.lt.s32.totalorder %s28, 1
        %s3323 = scalar_select %p3322, %s28, 1
        %p3324 = scmp.lt.s32.totalorder %s3321, 15
        %s3325 = scalar_select %p3324, %s3321, 15
        %s3326 = smul.addr %s3325, 2
        %s3327 = smul.addr %s3323, 32
        %s3328 = sadd.s32 %s3326, %s3327
        %s3329 = smul.addr %s3328, 8
        %s3330 = scalar_lea.vmem %s11, %s3329
      $region92: #{_lambda_.1} parent=87 // pred_fallthru
        _
    $region88: #{_lambda_.1} parent=5 // pred_fallthru
      _
  $region6: #{_lambda_.1} parent=0 // loop_footer
    %s21 = sadd.s32 1, %s17
  $region7: #{_lambda_.1} parent=0 // loop_footer_branch
    %16 = sbr.rel target = $region3
  $region8: #{_lambda_.1} parent=0 // loop_exit
    _

</llo_original>
